<compile_context>
chip_gen: v7x
topology: tpu7x:2x2x1
jax: 0.10.0
libtpu: 0.0.40
codegen_flags: <defaults>
</compile_context>

<pallas_src>
import math

import jax
import jax.numpy as jnp
from jax.experimental import pallas as pl
from jax.experimental.pallas import tpu as pltpu

_GN_EPS = 1e-5  # torch.nn.GroupNorm default


# ---------------------------------------------------------------------------
# In-kernel math helpers
# ---------------------------------------------------------------------------
def _erf(x):
    # Abramowitz & Stegun 7.1.26 polynomial, |err| <= 1.5e-7 (uses only ops
    # guaranteed to lower in Mosaic: abs/exp/mul/add/where).
    a1, a2, a3, a4, a5 = (0.254829592, -0.284496736, 1.421413741,
                          -1.453152027, 1.061405429)
    p = 0.3275911
    ax = jnp.abs(x)
    t = 1.0 / (1.0 + p * ax)
    poly = ((((a5 * t + a4) * t + a3) * t + a2) * t + a1) * t
    y = 1.0 - poly * jnp.exp(-ax * ax)
    return jnp.where(x < 0.0, -y, y)


def _gelu(x):
    # Exact (erf-based) GELU, matching torch.nn.GELU() default.
    return 0.5 * x * (1.0 + _erf(x * 0.7071067811865476))


def _gn_normalize(y, w, b):
    # GroupNorm(num_groups=1): statistics over the whole (C, L) sample.
    mean = jnp.mean(y, keepdims=True)
    var = jnp.mean(jnp.square(y - mean), keepdims=True)
    return (y - mean) * jax.lax.rsqrt(var + _GN_EPS) * w + b


# ---------------------------------------------------------------------------
# Kernels
# ---------------------------------------------------------------------------
def _groupnorm_kernel(x_ref, w_ref, b_ref, o_ref):
    x = x_ref[...].astype(jnp.float32)                       # (C, L)
    o_ref[...] = _gn_normalize(x, w_ref[...], b_ref[...]).astype(o_ref.dtype)


def _patch_conv_kernel(p_ref, w_ref, b_ref, o_ref):
    # p_ref: (Cin*K, P), w_ref: (Cout, Cin*K), b_ref: (Cout, 1) -> (Cout, P)
    acc = jnp.dot(w_ref[...].astype(jnp.float32),
                  p_ref[...].astype(jnp.float32),
                  preferred_element_type=jnp.float32)
    o_ref[...] = (acc + b_ref[...]).astype(o_ref.dtype)


def _bottleneck_kernel(x_ref, xpad_ref, dw_ref, gnw_ref, gnb_ref,
                       w1_ref, b1_ref, w2_ref, b2_ref, gamma_ref, o_ref):
    C, L = x_ref.shape
    K = dw_ref.shape[1]
    xpad = xpad_ref[...].astype(jnp.float32)                  # (C, L + K - 1)
    dw = dw_ref[...].astype(jnp.float32)                      # (C, K)

    # Depthwise conv (padding='same'): K shifted lane-slices on the VPU.
    y = dw[:, 0:1] * xpad[:, 0:L]
    for k in range(1, K):
        y = y + dw[:, k:k + 1] * xpad[:, k:k + L]

    # GroupNorm(num_groups=1)
    y = _gn_normalize(y, gnw_ref[...], gnb_ref[...])

    # Pointwise expand (1x1 conv) + exact GELU
    h = jnp.dot(w1_ref[...].astype(jnp.float32), y,
                preferred_element_type=jnp.float32) + b1_ref[...]
    h = _gelu(h)

    # Pointwise project (1x1 conv) with LayerScaler + residual fused into the
    # store epilogue.  StochasticDepth is identity here (eval / drop_p == 0).
    # TODO(synk): StochasticDepth(drop_p>0, mode='batch') training-time random
    # drop is not implemented (identity, which matches eval mode / drop_p=0).
    z = jnp.dot(w2_ref[...].astype(jnp.float32), h,
                preferred_element_type=jnp.float32) + b2_ref[...]
    out = gamma_ref[...] * z + x_ref[...].astype(jnp.float32)
    o_ref[...] = out.astype(o_ref.dtype)


# ---------------------------------------------------------------------------
# pallas_call wrappers
# ---------------------------------------------------------------------------
def _full2d(shape):
    # Whole-array block, resident across the batch grid (constant index_map).
    return pl.BlockSpec(shape, lambda b: (0, 0))


def _per_batch(c, l):
    return pl.BlockSpec((pl.Squeezed(), c, l), lambda b: (b, 0, 0))


_PARALLEL_B = pltpu.CompilerParams(dimension_semantics=("parallel",))


def group_norm(x, weight, bias):
    B, C, L = x.shape
    return pl.pallas_call(
        _groupnorm_kernel,
        out_shape=jax.ShapeDtypeStruct((B, C, L), x.dtype),
        grid_spec=pltpu.PrefetchScalarGridSpec(
            num_scalar_prefetch=0,
            grid=(B,),
            in_specs=[_per_batch(C, L), _full2d((C, 1)), _full2d((C, 1))],
            out_specs=_per_batch(C, L),
        ),
        compiler_params=_PARALLEL_B,
    )(x, weight.reshape(C, 1).astype(jnp.float32),
      bias.reshape(C, 1).astype(jnp.float32))


def strided_conv(x, w, b):
    """Conv1d with stride == kernel_size as a single matmul per sample."""
    B, Cin, L = x.shape
    Cout, _, K = w.shape
    P = L // K
    # patches[b, ci*K + k, p] = x[b, ci, p*K + k]   (layout glue, done by XLA)
    patches = x[:, :, :P * K].reshape(B, Cin, P, K)
    patches = patches.transpose(0, 1, 3, 2).reshape(B, Cin * K, P)
    w_flat = w.reshape(Cout, Cin * K)
    return pl.pallas_call(
        _patch_conv_kernel,
        out_shape=jax.ShapeDtypeStruct((B, Cout, P), x.dtype),
        grid_spec=pltpu.PrefetchScalarGridSpec(
            num_scalar_prefetch=0,
            grid=(B,),
            in_specs=[_per_batch(Cin * K, P),
                      _full2d((Cout, Cin * K)),
                      _full2d((Cout, 1))],
            out_specs=_per_batch(Cout, P),
        ),
        compiler_params=_PARALLEL_B,
    )(patches, w_flat, b.reshape(Cout, 1))


def bottleneck_block(x, p):
    """Fused BottleNeckBlock: dwconv -> GN -> 1x1 -> GELU -> 1x1 -> scale+res."""
    B, C, L = x.shape
    K = p["dw_w"].shape[-1]
    E = p["w1"].shape[0]
    pad_lo = (K - 1) // 2
    xpad = jnp.pad(x, ((0, 0), (0, 0), (pad_lo, K - 1 - pad_lo)))
    Lp = L + K - 1
    return pl.pallas_call(
        _bottleneck_kernel,
        out_shape=jax.ShapeDtypeStruct((B, C, L), x.dtype),
        grid_spec=pltpu.PrefetchScalarGridSpec(
            num_scalar_prefetch=0,
            grid=(B,),
            in_specs=[
                _per_batch(C, L),            # residual input
                _per_batch(C, Lp),           # padded input for depthwise conv
                _full2d((C, K)),             # depthwise weights
                _full2d((C, 1)),             # GN weight
                _full2d((C, 1)),             # GN bias
                _full2d((E, C)),             # 1x1 expand weight
                _full2d((E, 1)),             # 1x1 expand bias
                _full2d((C, E)),             # 1x1 project weight
                _full2d((C, 1)),             # 1x1 project bias
                _full2d((C, 1)),             # layer-scaler gamma (kept f32)
            ],
            out_specs=_per_batch(C, L),
        ),
        compiler_params=_PARALLEL_B,
    )(x, xpad,
      p["dw_w"], p["gn_w"].reshape(C, 1), p["gn_b"].reshape(C, 1),
      p["w1"], p["b1"].reshape(E, 1), p["w2"], p["b2"].reshape(C, 1),
      p["gamma"].reshape(C, 1))


def convnext_encoder(params, x):
    # Stem: Conv1d(k=4, s=4) -> GroupNorm(1)
    s = params["stem"]
    x = strided_conv(x, s["conv_w"], s["conv_b"])
    x = group_norm(x, s["gn_w"], s["gn_b"])
    # Stages: [GroupNorm(1) -> Conv1d(k=2, s=2)] then depth x BottleNeckBlock
    for stage in params["stages"]:
        x = group_norm(x, stage["ds_gn_w"], stage["ds_gn_b"])
        x = strided_conv(x, stage["ds_conv_w"], stage["ds_conv_b"])
        for blk in stage["blocks"]:
            x = bottleneck_block(x, blk)
    return x


# ---------------------------------------------------------------------------
# Deterministic parameter init (PyTorch-default-style conv init; GN weight=1,
# bias=0; LayerScaler gamma = init_value * ones).
# ---------------------------------------------------------------------------
def init_params(key, in_channels, stem_features, depths, widths,
                stem_kernel_size=4, ds_kernel_size=2, bn_kernel_size=7,
                expansion=2, layer_scaler_init_value=1e-6):
    def conv_init(k, cout, cin, ksz):
        kw, kb = jax.random.split(k)
        bound = 1.0 / math.sqrt(cin * ksz)
        w = jax.random.uniform(kw, (cout, cin, ksz), jnp.float32, -bound, bound)
        b = jax.random.uniform(kb, (cout,), jnp.float32, -bound, bound)
        return w, b

    ki = iter(jax.random.split(key, 64))
    stem_w, stem_b = conv_init(next(ki), stem_features, in_channels, stem_kernel_size)
    params = {
        "stem": {"conv_w": stem_w, "conv_b": stem_b,
                 "gn_w": jnp.ones((stem_features,), jnp.float32),
                 "gn_b": jnp.zeros((stem_features,), jnp.float32)},
        "stages": [],
    }
    cins = [stem_features] + list(widths[:-1])
    for cin, cout, depth in zip(cins, widths, depths):
        ds_w, ds_b = conv_init(next(ki), cout, cin, ds_kernel_size)
        stage = {"ds_gn_w": jnp.ones((cin,), jnp.float32),
                 "ds_gn_b": jnp.zeros((cin,), jnp.float32),
                 "ds_conv_w": ds_w, "ds_conv_b": ds_b, "blocks": []}
        e = cout * expansion
        for _ in range(depth):
            dw_w = conv_init(next(ki), cout, 1, bn_kernel_size)[0].reshape(cout, bn_kernel_size)
            w1, b1 = conv_init(next(ki), e, cout, 1)
            w2, b2 = conv_init(next(ki), cout, e, 1)
            stage["blocks"].append({
                "dw_w": dw_w,
                "gn_w": jnp.ones((cout,), jnp.float32),
                "gn_b": jnp.zeros((cout,), jnp.float32),
                "w1": w1.reshape(e, cout), "b1": b1,
                "w2": w2.reshape(cout, e), "b2": b2,
                "gamma": layer_scaler_init_value * jnp.ones((cout,), jnp.float32),
            })
        params["stages"].append(stage)
    return params


# ---------------------------------------------------------------------------
# Pure-JAX (XLA) reference with the exact PyTorch semantics
# ---------------------------------------------------------------------------
def _ref_gn(x, w, b):
    mean = jnp.mean(x, axis=(1, 2), keepdims=True)
    var = jnp.mean(jnp.square(x - mean), axis=(1, 2), keepdims=True)
    return (x - mean) / jnp.sqrt(var + _GN_EPS) * w[None, :, None] + b[None, :, None]


def _ref_conv1d(x, w, b, stride=1, padding=0, groups=1):
    out = jax.lax.conv_general_dilated(
        x, w, window_strides=(stride,), padding=[(padding, padding)],
        dimension_numbers=("NCH", "OIH", "NCH"), feature_group_count=groups,
        precision=jax.lax.Precision.HIGHEST)
    return out + b[None, :, None] if b is not None else out


def ref_forward(params, x):
    s = params["stem"]
    x = _ref_conv1d(x, s["conv_w"], s["conv_b"], stride=s["conv_w"].shape[-1])
    x = _ref_gn(x, s["gn_w"], s["gn_b"])
    for stage in params["stages"]:
        x = _ref_gn(x, stage["ds_gn_w"], stage["ds_gn_b"])
        x = _ref_conv1d(x, stage["ds_conv_w"], stage["ds_conv_b"],
                        stride=stage["ds_conv_w"].shape[-1])
        for blk in stage["blocks"]:
            res = x
            C = x.shape[1]
            K = blk["dw_w"].shape[-1]
            y = _ref_conv1d(x, blk["dw_w"].reshape(C, 1, K), None,
                            padding=(K - 1) // 2, groups=C)
            y = _ref_gn(y, blk["gn_w"], blk["gn_b"])
            y = _ref_conv1d(y, blk["w1"][:, :, None], blk["b1"])
            y = jax.nn.gelu(y, approximate=False)
            y = _ref_conv1d(y, blk["w2"][:, :, None], blk["b2"])
            x = blk["gamma"][None, :, None] * y + res
    return x


if __name__ == "__main__":
    # Small, lane-dense shapes: L=2048 -> 512 after stem, 256 / 128 after the
    # two stages (all multiples of 128); channels are multiples of 8.
    B, in_channels, L = 2, 4, 2048
    stem_features = 16
    depths = [1, 1]
    widths = [16, 32]

    key = jax.random.PRNGKey(0)
    k_params, k_x = jax.random.split(key)
    # layer_scaler_init_value raised from the 1e-6 default so the bottleneck
    # path contributes measurably to the output and is exercised by the check.
    params = init_params(k_params, in_channels, stem_features, depths, widths,
                         layer_scaler_init_value=0.1)
    x = jax.random.normal(k_x, (B, in_channels, L), dtype=jnp.float32)

    out = jax.block_until_ready(jax.jit(convnext_encoder)(params, x))
    ref = jax.block_until_ready(jax.jit(ref_forward)(params, x))

    assert out.shape == ref.shape == (B, widths[-1], L // (4 * 2 * 2)), out.shape
    max_err = float(jnp.max(jnp.abs(out - ref)))
    assert max_err < 1e-4, f"max abs error vs reference: {max_err}"
    print("KERNEL_OK")
</pallas_src>

<mosaic_0001>
module attributes {stable_mosaic.version = 11 : i64} {
  func.func @_patch_conv_kernel(%arg0: i32, %arg1: memref<1x16x512xf32, #tpu.memory_space<vmem>>, %arg2: memref<16x16xf32, #tpu.memory_space<vmem>>, %arg3: memref<16x1xf32, #tpu.memory_space<vmem>>, %arg4: memref<1x16x512xf32, #tpu.memory_space<vmem>>) attributes {dimension_semantics = [#tpu.dimension_semantics<parallel>], iteration_bounds = array<i64: 2>, scalar_prefetch = 0 : i64, scratch_operands = 0 : i64, tpu.core_type = #tpu.core_type<tc>, window_params = [{transform_indices = @transform_0, window_bounds = array<i64: 1, 16, 512>}, {pipeline_mode = #tpu.pipeline_mode<synchronous>, transform_indices = @transform_1, window_bounds = array<i64: 16, 16>}, {pipeline_mode = #tpu.pipeline_mode<synchronous>, transform_indices = @transform_2, window_bounds = array<i64: 16, 1>}, {transform_indices = @transform_3, window_bounds = array<i64: 1, 16, 512>}]} {
    %c0 = arith.constant 0 : index
    %c0_0 = arith.constant 0 : index
    %0 = vector.load %arg2[%c0, %c0_0] : memref<16x16xf32, #tpu.memory_space<vmem>>, vector<16x16xf32>
    %c0_1 = arith.constant 0 : index
    %c0_2 = arith.constant 0 : index
    %c0_3 = arith.constant 0 : index
    %1 = vector.load %arg1[%c0_1, %c0_2, %c0_3] : memref<1x16x512xf32, #tpu.memory_space<vmem>>, vector<1x16x512xf32>
    %2 = vector.shape_cast %1 : vector<1x16x512xf32> to vector<16x512xf32>
    %cst = arith.constant dense<0.000000e+00> : vector<16x512xf32>
    %3 = tpu.matmul %0, %2, %cst {dimension_numbers = #tpu.dot_dimension_numbers<[1], [0], [0], [1], [0, 0, 1, 1], [], []>} : vector<16x16xf32>, vector<16x512xf32>, vector<16x512xf32> -> vector<16x512xf32>
    %c0_4 = arith.constant 0 : index
    %c0_5 = arith.constant 0 : index
    %4 = vector.load %arg3[%c0_4, %c0_5] : memref<16x1xf32, #tpu.memory_space<vmem>>, vector<16x1xf32>
    %5 = vector.broadcast %4 : vector<16x1xf32> to vector<16x512xf32>
    %6 = arith.addf %3, %5 : vector<16x512xf32>
    %c0_6 = arith.constant 0 : index
    %c0_7 = arith.constant 0 : index
    %c0_8 = arith.constant 0 : index
    %7 = vector.load %arg4[%c0_6, %c0_7, %c0_8] : memref<1x16x512xf32, #tpu.memory_space<vmem>>, vector<1x16x512xf32>
    %8 = vector.shape_cast %7 : vector<1x16x512xf32> to vector<16x512xf32>
    %9 = vector.shape_cast %6 : vector<16x512xf32> to vector<1x16x512xf32>
    tpu.vector_store %arg4[%c0_6, %c0_7, %c0_8], %9 {strides = array<i32>} : memref<1x16x512xf32, #tpu.memory_space<vmem>>, vector<1x16x512xf32>,
    return
  }
  func.func @transform_0(%arg0: i32) -> (i32, i32, i32) {
    %c0_i32 = arith.constant 0 : i32
    %c0_i32_0 = arith.constant 0 : i32
    %c0_i32_1 = arith.constant 0 : i32
    return %arg0, %c0_i32, %c0_i32_0 : i32, i32, i32
  }
  func.func @transform_1(%arg0: i32) -> (i32, i32) {
    %c0_i32 = arith.constant 0 : i32
    %c0_i32_0 = arith.constant 0 : i32
    %c0_i32_1 = arith.constant 0 : i32
    return %c0_i32, %c0_i32_0 : i32, i32
  }
  func.func @transform_2(%arg0: i32) -> (i32, i32) {
    %c0_i32 = arith.constant 0 : i32
    %c0_i32_0 = arith.constant 0 : i32
    %c0_i32_1 = arith.constant 0 : i32
    return %c0_i32, %c0_i32_0 : i32, i32
  }
  func.func @transform_3(%arg0: i32) -> (i32, i32, i32) {
    %c0_i32 = arith.constant 0 : i32
    %c0_i32_0 = arith.constant 0 : i32
    %c0_i32_1 = arith.constant 0 : i32
    return %arg0, %c0_i32, %c0_i32_0 : i32, i32, i32
  }
}

module attributes {stable_mosaic.version = 11 : i64} {
  func.func @_groupnorm_kernel(%arg0: i32, %arg1: memref<1x16x512xf32, #tpu.memory_space<vmem>>, %arg2: memref<16x1xf32, #tpu.memory_space<vmem>>, %arg3: memref<16x1xf32, #tpu.memory_space<vmem>>, %arg4: memref<1x16x512xf32, #tpu.memory_space<vmem>>) attributes {dimension_semantics = [#tpu.dimension_semantics<parallel>], iteration_bounds = array<i64: 2>, scalar_prefetch = 0 : i64, scratch_operands = 0 : i64, tpu.core_type = #tpu.core_type<tc>, window_params = [{transform_indices = @transform_0, window_bounds = array<i64: 1, 16, 512>}, {pipeline_mode = #tpu.pipeline_mode<synchronous>, transform_indices = @transform_1, window_bounds = array<i64: 16, 1>}, {pipeline_mode = #tpu.pipeline_mode<synchronous>, transform_indices = @transform_2, window_bounds = array<i64: 16, 1>}, {transform_indices = @transform_3, window_bounds = array<i64: 1, 16, 512>}]} {
    %c0 = arith.constant 0 : index
    %c0_0 = arith.constant 0 : index
    %c0_1 = arith.constant 0 : index
    %0 = vector.load %arg1[%c0, %c0_0, %c0_1] : memref<1x16x512xf32, #tpu.memory_space<vmem>>, vector<1x16x512xf32>
    %1 = vector.shape_cast %0 : vector<1x16x512xf32> to vector<16x512xf32>
    %c0_2 = arith.constant 0 : index
    %c0_3 = arith.constant 0 : index
    %2 = vector.load %arg2[%c0_2, %c0_3] : memref<16x1xf32, #tpu.memory_space<vmem>>, vector<16x1xf32>
    %c0_4 = arith.constant 0 : index
    %c0_5 = arith.constant 0 : index
    %3 = vector.load %arg3[%c0_4, %c0_5] : memref<16x1xf32, #tpu.memory_space<vmem>>, vector<16x1xf32>
    %4 = vector.shape_cast %1 : vector<16x512xf32> to vector<1x16x512xf32>
    %cst = arith.constant dense<0.000000e+00> : vector<1xf32>
    %5 = vector.multi_reduction <add>, %4, %cst [1, 2] : vector<1x16x512xf32> to vector<1xf32>
    %6 = vector.shape_cast %5 : vector<1xf32> to vector<1x1x1xf32>
    %7 = vector.extract %6[0, 0, 0] : f32 from vector<1x1x1xf32>
    %8 = vector.broadcast %7 : f32 to vector<1x1xf32>
    %cst_6 = arith.constant 8.192000e+03 : f32
    %9 = vector.broadcast %cst_6 : f32 to vector<1x1xf32>
    %10 = arith.divf %8, %9 : vector<1x1xf32>
    %11 = vector.broadcast %10 : vector<1x1xf32> to vector<16x512xf32>
    %12 = arith.subf %1, %11 : vector<16x512xf32>
    %13 = arith.mulf %12, %12 : vector<16x512xf32>
    %14 = vector.shape_cast %13 : vector<16x512xf32> to vector<1x16x512xf32>
    %cst_7 = arith.constant dense<0.000000e+00> : vector<1xf32>
    %15 = vector.multi_reduction <add>, %14, %cst_7 [1, 2] : vector<1x16x512xf32> to vector<1xf32>
    %16 = vector.shape_cast %15 : vector<1xf32> to vector<1x1x1xf32>
    %17 = vector.extract %16[0, 0, 0] : f32 from vector<1x1x1xf32>
    %18 = vector.broadcast %17 : f32 to vector<1x1xf32>
    %cst_8 = arith.constant 8.192000e+03 : f32
    %19 = vector.broadcast %cst_8 : f32 to vector<1x1xf32>
    %20 = arith.divf %18, %19 : vector<1x1xf32>
    %21 = vector.broadcast %10 : vector<1x1xf32> to vector<16x512xf32>
    %22 = arith.subf %1, %21 : vector<16x512xf32>
    %cst_9 = arith.constant 9.99999974E-6 : f32
    %23 = vector.broadcast %cst_9 : f32 to vector<1x1xf32>
    %24 = arith.addf %20, %23 : vector<1x1xf32>
    %25 = math.rsqrt %24 : vector<1x1xf32>
    %26 = vector.broadcast %25 : vector<1x1xf32> to vector<16x512xf32>
    %27 = arith.mulf %22, %26 : vector<16x512xf32>
    %28 = vector.broadcast %2 : vector<16x1xf32> to vector<16x512xf32>
    %29 = arith.mulf %27, %28 : vector<16x512xf32>
    %30 = vector.broadcast %3 : vector<16x1xf32> to vector<16x512xf32>
    %31 = arith.addf %29, %30 : vector<16x512xf32>
    %c0_10 = arith.constant 0 : index
    %c0_11 = arith.constant 0 : index
    %c0_12 = arith.constant 0 : index
    %32 = vector.load %arg4[%c0_10, %c0_11, %c0_12] : memref<1x16x512xf32, #tpu.memory_space<vmem>>, vector<1x16x512xf32>
    %33 = vector.shape_cast %32 : vector<1x16x512xf32> to vector<16x512xf32>
    %34 = vector.shape_cast %31 : vector<16x512xf32> to vector<1x16x512xf32>
    tpu.vector_store %arg4[%c0_10, %c0_11, %c0_12], %34 {strides = array<i32>} : memref<1x16x512xf32, #tpu.memory_space<vmem>>, vector<1x16x512xf32>,
    return
  }
  func.func @transform_0(%arg0: i32) -> (i32, i32, i32) {
    %c0_i32 = arith.constant 0 : i32
    %c0_i32_0 = arith.constant 0 : i32
    %c0_i32_1 = arith.constant 0 : i32
    return %arg0, %c0_i32, %c0_i32_0 : i32, i32, i32
  }
  func.func @transform_1(%arg0: i32) -> (i32, i32) {
    %c0_i32 = arith.constant 0 : i32
    %c0_i32_0 = arith.constant 0 : i32
    %c0_i32_1 = arith.constant 0 : i32
    return %c0_i32, %c0_i32_0 : i32, i32
  }
  func.func @transform_2(%arg0: i32) -> (i32, i32) {
    %c0_i32 = arith.constant 0 : i32
    %c0_i32_0 = arith.constant 0 : i32
    %c0_i32_1 = arith.constant 0 : i32
    return %c0_i32, %c0_i32_0 : i32, i32
  }
  func.func @transform_3(%arg0: i32) -> (i32, i32, i32) {
    %c0_i32 = arith.constant 0 : i32
    %c0_i32_0 = arith.constant 0 : i32
    %c0_i32_1 = arith.constant 0 : i32
    return %arg0, %c0_i32, %c0_i32_0 : i32, i32, i32
  }
}

module attributes {stable_mosaic.version = 11 : i64} {
  func.func @_patch_conv_kernel(%arg0: i32, %arg1: memref<1x32x256xf32, #tpu.memory_space<vmem>>, %arg2: memref<16x32xf32, #tpu.memory_space<vmem>>, %arg3: memref<16x1xf32, #tpu.memory_space<vmem>>, %arg4: memref<1x16x256xf32, #tpu.memory_space<vmem>>) attributes {dimension_semantics = [#tpu.dimension_semantics<parallel>], iteration_bounds = array<i64: 2>, scalar_prefetch = 0 : i64, scratch_operands = 0 : i64, tpu.core_type = #tpu.core_type<tc>, window_params = [{transform_indices = @transform_0, window_bounds = array<i64: 1, 32, 256>}, {pipeline_mode = #tpu.pipeline_mode<synchronous>, transform_indices = @transform_1, window_bounds = array<i64: 16, 32>}, {pipeline_mode = #tpu.pipeline_mode<synchronous>, transform_indices = @transform_2, window_bounds = array<i64: 16, 1>}, {transform_indices = @transform_3, window_bounds = array<i64: 1, 16, 256>}]} {
    %c0 = arith.constant 0 : index
    %c0_0 = arith.constant 0 : index
    %0 = vector.load %arg2[%c0, %c0_0] : memref<16x32xf32, #tpu.memory_space<vmem>>, vector<16x32xf32>
    %c0_1 = arith.constant 0 : index
    %c0_2 = arith.constant 0 : index
    %c0_3 = arith.constant 0 : index
    %1 = vector.load %arg1[%c0_1, %c0_2, %c0_3] : memref<1x32x256xf32, #tpu.memory_space<vmem>>, vector<1x32x256xf32>
    %2 = vector.shape_cast %1 : vector<1x32x256xf32> to vector<32x256xf32>
    %cst = arith.constant dense<0.000000e+00> : vector<16x256xf32>
    %3 = tpu.matmul %0, %2, %cst {dimension_numbers = #tpu.dot_dimension_numbers<[1], [0], [0], [1], [0, 0, 1, 1], [], []>} : vector<16x32xf32>, vector<32x256xf32>, vector<16x256xf32> -> vector<16x256xf32>
    %c0_4 = arith.constant 0 : index
    %c0_5 = arith.constant 0 : index
    %4 = vector.load %arg3[%c0_4, %c0_5] : memref<16x1xf32, #tpu.memory_space<vmem>>, vector<16x1xf32>
    %5 = vector.broadcast %4 : vector<16x1xf32> to vector<16x256xf32>
    %6 = arith.addf %3, %5 : vector<16x256xf32>
    %c0_6 = arith.constant 0 : index
    %c0_7 = arith.constant 0 : index
    %c0_8 = arith.constant 0 : index
    %7 = vector.load %arg4[%c0_6, %c0_7, %c0_8] : memref<1x16x256xf32, #tpu.memory_space<vmem>>, vector<1x16x256xf32>
    %8 = vector.shape_cast %7 : vector<1x16x256xf32> to vector<16x256xf32>
    %9 = vector.shape_cast %6 : vector<16x256xf32> to vector<1x16x256xf32>
    tpu.vector_store %arg4[%c0_6, %c0_7, %c0_8], %9 {strides = array<i32>} : memref<1x16x256xf32, #tpu.memory_space<vmem>>, vector<1x16x256xf32>,
    return
  }
  func.func @transform_0(%arg0: i32) -> (i32, i32, i32) {
    %c0_i32 = arith.constant 0 : i32
    %c0_i32_0 = arith.constant 0 : i32
    %c0_i32_1 = arith.constant 0 : i32
    return %arg0, %c0_i32, %c0_i32_0 : i32, i32, i32
  }
  func.func @transform_1(%arg0: i32) -> (i32, i32) {
    %c0_i32 = arith.constant 0 : i32
    %c0_i32_0 = arith.constant 0 : i32
    %c0_i32_1 = arith.constant 0 : i32
    return %c0_i32, %c0_i32_0 : i32, i32
  }
  func.func @transform_2(%arg0: i32) -> (i32, i32) {
    %c0_i32 = arith.constant 0 : i32
    %c0_i32_0 = arith.constant 0 : i32
    %c0_i32_1 = arith.constant 0 : i32
    return %c0_i32, %c0_i32_0 : i32, i32
  }
  func.func @transform_3(%arg0: i32) -> (i32, i32, i32) {
    %c0_i32 = arith.constant 0 : i32
    %c0_i32_0 = arith.constant 0 : i32
    %c0_i32_1 = arith.constant 0 : i32
    return %arg0, %c0_i32, %c0_i32_0 : i32, i32, i32
  }
}

module attributes {stable_mosaic.version = 11 : i64} {
  func.func @_bottleneck_kernel(%arg0: i32, %arg1: memref<1x16x256xf32, #tpu.memory_space<vmem>>, %arg2: memref<1x16x262xf32, #tpu.memory_space<vmem>>, %arg3: memref<16x7xf32, #tpu.memory_space<vmem>>, %arg4: memref<16x1xf32, #tpu.memory_space<vmem>>, %arg5: memref<16x1xf32, #tpu.memory_space<vmem>>, %arg6: memref<32x16xf32, #tpu.memory_space<vmem>>, %arg7: memref<32x1xf32, #tpu.memory_space<vmem>>, %arg8: memref<16x32xf32, #tpu.memory_space<vmem>>, %arg9: memref<16x1xf32, #tpu.memory_space<vmem>>, %arg10: memref<16x1xf32, #tpu.memory_space<vmem>>, %arg11: memref<1x16x256xf32, #tpu.memory_space<vmem>>) attributes {dimension_semantics = [#tpu.dimension_semantics<parallel>], iteration_bounds = array<i64: 2>, scalar_prefetch = 0 : i64, scratch_operands = 0 : i64, tpu.core_type = #tpu.core_type<tc>, window_params = [{transform_indices = @transform_0, window_bounds = array<i64: 1, 16, 256>}, {transform_indices = @transform_1, window_bounds = array<i64: 1, 16, 262>}, {pipeline_mode = #tpu.pipeline_mode<synchronous>, transform_indices = @transform_2, window_bounds = array<i64: 16, 7>}, {pipeline_mode = #tpu.pipeline_mode<synchronous>, transform_indices = @transform_3, window_bounds = array<i64: 16, 1>}, {pipeline_mode = #tpu.pipeline_mode<synchronous>, transform_indices = @transform_4, window_bounds = array<i64: 16, 1>}, {pipeline_mode = #tpu.pipeline_mode<synchronous>, transform_indices = @transform_5, window_bounds = array<i64: 32, 16>}, {pipeline_mode = #tpu.pipeline_mode<synchronous>, transform_indices = @transform_6, window_bounds = array<i64: 32, 1>}, {pipeline_mode = #tpu.pipeline_mode<synchronous>, transform_indices = @transform_7, window_bounds = array<i64: 16, 32>}, {pipeline_mode = #tpu.pipeline_mode<synchronous>, transform_indices = @transform_8, window_bounds = array<i64: 16, 1>}, {pipeline_mode = #tpu.pipeline_mode<synchronous>, transform_indices = @transform_9, window_bounds = array<i64: 16, 1>}, {transform_indices = @transform_10, window_bounds = array<i64: 1, 16, 256>}]} {
    %c0 = arith.constant 0 : index
    %c0_0 = arith.constant 0 : index
    %c0_1 = arith.constant 0 : index
    %0 = vector.load %arg2[%c0, %c0_0, %c0_1] : memref<1x16x262xf32, #tpu.memory_space<vmem>>, vector<1x16x262xf32>
    %1 = vector.shape_cast %0 : vector<1x16x262xf32> to vector<16x262xf32>
    %c0_2 = arith.constant 0 : index
    %c0_3 = arith.constant 0 : index
    %2 = vector.load %arg3[%c0_2, %c0_3] : memref<16x7xf32, #tpu.memory_space<vmem>>, vector<16x7xf32>
    %3 = vector.extract_strided_slice %2 {offsets = [0, 0], sizes = [16, 1], strides = [1, 1]} : vector<16x7xf32> to vector<16x1xf32>
    %4 = vector.extract_strided_slice %1 {offsets = [0, 0], sizes = [16, 256], strides = [1, 1]} : vector<16x262xf32> to vector<16x256xf32>
    %5 = vector.broadcast %3 : vector<16x1xf32> to vector<16x256xf32>
    %6 = arith.mulf %5, %4 : vector<16x256xf32>
    %7 = vector.extract_strided_slice %2 {offsets = [0, 1], sizes = [16, 1], strides = [1, 1]} : vector<16x7xf32> to vector<16x1xf32>
    %8 = vector.extract_strided_slice %1 {offsets = [0, 1], sizes = [16, 256], strides = [1, 1]} : vector<16x262xf32> to vector<16x256xf32>
    %9 = vector.broadcast %7 : vector<16x1xf32> to vector<16x256xf32>
    %10 = arith.mulf %9, %8 : vector<16x256xf32>
    %11 = arith.addf %6, %10 : vector<16x256xf32>
    %12 = vector.extract_strided_slice %2 {offsets = [0, 2], sizes = [16, 1], strides = [1, 1]} : vector<16x7xf32> to vector<16x1xf32>
    %13 = vector.extract_strided_slice %1 {offsets = [0, 2], sizes = [16, 256], strides = [1, 1]} : vector<16x262xf32> to vector<16x256xf32>
    %14 = vector.broadcast %12 : vector<16x1xf32> to vector<16x256xf32>
    %15 = arith.mulf %14, %13 : vector<16x256xf32>
    %16 = arith.addf %11, %15 : vector<16x256xf32>
    %17 = vector.extract_strided_slice %2 {offsets = [0, 3], sizes = [16, 1], strides = [1, 1]} : vector<16x7xf32> to vector<16x1xf32>
    %18 = vector.extract_strided_slice %1 {offsets = [0, 3], sizes = [16, 256], strides = [1, 1]} : vector<16x262xf32> to vector<16x256xf32>
    %19 = vector.broadcast %17 : vector<16x1xf32> to vector<16x256xf32>
    %20 = arith.mulf %19, %18 : vector<16x256xf32>
    %21 = arith.addf %16, %20 : vector<16x256xf32>
    %22 = vector.extract_strided_slice %2 {offsets = [0, 4], sizes = [16, 1], strides = [1, 1]} : vector<16x7xf32> to vector<16x1xf32>
    %23 = vector.extract_strided_slice %1 {offsets = [0, 4], sizes = [16, 256], strides = [1, 1]} : vector<16x262xf32> to vector<16x256xf32>
    %24 = vector.broadcast %22 : vector<16x1xf32> to vector<16x256xf32>
    %25 = arith.mulf %24, %23 : vector<16x256xf32>
    %26 = arith.addf %21, %25 : vector<16x256xf32>
    %27 = vector.extract_strided_slice %2 {offsets = [0, 5], sizes = [16, 1], strides = [1, 1]} : vector<16x7xf32> to vector<16x1xf32>
    %28 = vector.extract_strided_slice %1 {offsets = [0, 5], sizes = [16, 256], strides = [1, 1]} : vector<16x262xf32> to vector<16x256xf32>
    %29 = vector.broadcast %27 : vector<16x1xf32> to vector<16x256xf32>
    %30 = arith.mulf %29, %28 : vector<16x256xf32>
    %31 = arith.addf %26, %30 : vector<16x256xf32>
    %32 = vector.extract_strided_slice %2 {offsets = [0, 6], sizes = [16, 1], strides = [1, 1]} : vector<16x7xf32> to vector<16x1xf32>
    %33 = vector.extract_strided_slice %1 {offsets = [0, 6], sizes = [16, 256], strides = [1, 1]} : vector<16x262xf32> to vector<16x256xf32>
    %34 = vector.broadcast %32 : vector<16x1xf32> to vector<16x256xf32>
    %35 = arith.mulf %34, %33 : vector<16x256xf32>
    %36 = arith.addf %31, %35 : vector<16x256xf32>
    %c0_4 = arith.constant 0 : index
    %c0_5 = arith.constant 0 : index
    %37 = vector.load %arg4[%c0_4, %c0_5] : memref<16x1xf32, #tpu.memory_space<vmem>>, vector<16x1xf32>
    %c0_6 = arith.constant 0 : index
    %c0_7 = arith.constant 0 : index
    %38 = vector.load %arg5[%c0_6, %c0_7] : memref<16x1xf32, #tpu.memory_space<vmem>>, vector<16x1xf32>
    %39 = vector.shape_cast %36 : vector<16x256xf32> to vector<1x16x256xf32>
    %cst = arith.constant dense<0.000000e+00> : vector<1xf32>
    %40 = vector.multi_reduction <add>, %39, %cst [1, 2] : vector<1x16x256xf32> to vector<1xf32>
    %41 = vector.shape_cast %40 : vector<1xf32> to vector<1x1x1xf32>
    %42 = vector.extract %41[0, 0, 0] : f32 from vector<1x1x1xf32>
    %43 = vector.broadcast %42 : f32 to vector<1x1xf32>
    %cst_8 = arith.constant 4.096000e+03 : f32
    %44 = vector.broadcast %cst_8 : f32 to vector<1x1xf32>
    %45 = arith.divf %43, %44 : vector<1x1xf32>
    %46 = vector.broadcast %45 : vector<1x1xf32> to vector<16x256xf32>
    %47 = arith.subf %36, %46 : vector<16x256xf32>
    %48 = arith.mulf %47, %47 : vector<16x256xf32>
    %49 = vector.shape_cast %48 : vector<16x256xf32> to vector<1x16x256xf32>
    %cst_9 = arith.constant dense<0.000000e+00> : vector<1xf32>
    %50 = vector.multi_reduction <add>, %49, %cst_9 [1, 2] : vector<1x16x256xf32> to vector<1xf32>
    %51 = vector.shape_cast %50 : vector<1xf32> to vector<1x1x1xf32>
    %52 = vector.extract %51[0, 0, 0] : f32 from vector<1x1x1xf32>
    %53 = vector.broadcast %52 : f32 to vector<1x1xf32>
    %cst_10 = arith.constant 4.096000e+03 : f32
    %54 = vector.broadcast %cst_10 : f32 to vector<1x1xf32>
    %55 = arith.divf %53, %54 : vector<1x1xf32>
    %56 = vector.broadcast %45 : vector<1x1xf32> to vector<16x256xf32>
    %57 = arith.subf %36, %56 : vector<16x256xf32>
    %cst_11 = arith.constant 9.99999974E-6 : f32
    %58 = vector.broadcast %cst_11 : f32 to vector<1x1xf32>
    %59 = arith.addf %55, %58 : vector<1x1xf32>
    %60 = math.rsqrt %59 : vector<1x1xf32>
    %61 = vector.broadcast %60 : vector<1x1xf32> to vector<16x256xf32>
    %62 = arith.mulf %57, %61 : vector<16x256xf32>
    %63 = vector.broadcast %37 : vector<16x1xf32> to vector<16x256xf32>
    %64 = arith.mulf %62, %63 : vector<16x256xf32>
    %65 = vector.broadcast %38 : vector<16x1xf32> to vector<16x256xf32>
    %66 = arith.addf %64, %65 : vector<16x256xf32>
    %c0_12 = arith.constant 0 : index
    %c0_13 = arith.constant 0 : index
    %67 = vector.load %arg6[%c0_12, %c0_13] : memref<32x16xf32, #tpu.memory_space<vmem>>, vector<32x16xf32>
    %cst_14 = arith.constant dense<0.000000e+00> : vector<32x256xf32>
    %68 = tpu.matmul %67, %66, %cst_14 {dimension_numbers = #tpu.dot_dimension_numbers<[1], [0], [0], [1], [0, 0, 1, 1], [], []>} : vector<32x16xf32>, vector<16x256xf32>, vector<32x256xf32> -> vector<32x256xf32>
    %c0_15 = arith.constant 0 : index
    %c0_16 = arith.constant 0 : index
    %69 = vector.load %arg7[%c0_15, %c0_16] : memref<32x1xf32, #tpu.memory_space<vmem>>, vector<32x1xf32>
    %70 = vector.broadcast %69 : vector<32x1xf32> to vector<32x256xf32>
    %71 = arith.addf %68, %70 : vector<32x256xf32>
    %cst_17 = arith.constant 5.000000e-01 : f32
    %72 = vector.broadcast %cst_17 : f32 to vector<32x256xf32>
    %73 = arith.mulf %72, %71 : vector<32x256xf32>
    %cst_18 = arith.constant 0.707106769 : f32
    %74 = vector.broadcast %cst_18 : f32 to vector<32x256xf32>
    %75 = arith.mulf %71, %74 : vector<32x256xf32>
    %76 = math.absf %75 : vector<32x256xf32>
    %cst_19 = arith.constant 0.327591091 : f32
    %77 = vector.broadcast %cst_19 : f32 to vector<32x256xf32>
    %78 = arith.mulf %77, %76 : vector<32x256xf32>
    %cst_20 = arith.constant 1.000000e+00 : f32
    %79 = vector.broadcast %cst_20 : f32 to vector<32x256xf32>
    %80 = arith.addf %79, %78 : vector<32x256xf32>
    %cst_21 = arith.constant 1.000000e+00 : f32
    %81 = vector.broadcast %cst_21 : f32 to vector<32x256xf32>
    %82 = arith.divf %81, %80 : vector<32x256xf32>
    %cst_22 = arith.constant 1.06140542 : f32
    %83 = vector.broadcast %cst_22 : f32 to vector<32x256xf32>
    %84 = arith.mulf %83, %82 : vector<32x256xf32>
    %cst_23 = arith.constant -1.45315206 : f32
    %85 = vector.broadcast %cst_23 : f32 to vector<32x256xf32>
    %86 = arith.addf %84, %85 : vector<32x256xf32>
    %87 = arith.mulf %86, %82 : vector<32x256xf32>
    %cst_24 = arith.constant 1.42141378 : f32
    %88 = vector.broadcast %cst_24 : f32 to vector<32x256xf32>
    %89 = arith.addf %87, %88 : vector<32x256xf32>
    %90 = arith.mulf %89, %82 : vector<32x256xf32>
    %cst_25 = arith.constant -0.284496725 : f32
    %91 = vector.broadcast %cst_25 : f32 to vector<32x256xf32>
    %92 = arith.addf %90, %91 : vector<32x256xf32>
    %93 = arith.mulf %92, %82 : vector<32x256xf32>
    %cst_26 = arith.constant 0.254829586 : f32
    %94 = vector.broadcast %cst_26 : f32 to vector<32x256xf32>
    %95 = arith.addf %93, %94 : vector<32x256xf32>
    %96 = arith.mulf %95, %82 : vector<32x256xf32>
    %cst_27 = arith.constant 0.000000e+00 : f32
    %97 = vector.broadcast %cst_27 : f32 to vector<32x256xf32>
    %98 = arith.subf %97, %76 : vector<32x256xf32>
    %99 = arith.mulf %98, %76 : vector<32x256xf32>
    %100 = math.exp %99 : vector<32x256xf32>
    %101 = arith.mulf %96, %100 : vector<32x256xf32>
    %cst_28 = arith.constant 1.000000e+00 : f32
    %102 = vector.broadcast %cst_28 : f32 to vector<32x256xf32>
    %103 = arith.subf %102, %101 : vector<32x256xf32>
    %cst_29 = arith.constant 0.000000e+00 : f32
    %104 = vector.broadcast %cst_29 : f32 to vector<32x256xf32>
    %105 = arith.cmpf olt, %75, %104 : vector<32x256xf32>
    %cst_30 = arith.constant 0.000000e+00 : f32
    %106 = vector.broadcast %cst_30 : f32 to vector<32x256xf32>
    %107 = arith.subf %106, %103 : vector<32x256xf32>
    %108 = arith.select %105, %107, %103 : vector<32x256xi1>, vector<32x256xf32>
    %cst_31 = arith.constant 1.000000e+00 : f32
    %109 = vector.broadcast %cst_31 : f32 to vector<32x256xf32>
    %110 = arith.addf %109, %108 : vector<32x256xf32>
    %111 = arith.mulf %73, %110 : vector<32x256xf32>
    %c0_32 = arith.constant 0 : index
    %c0_33 = arith.constant 0 : index
    %112 = vector.load %arg8[%c0_32, %c0_33] : memref<16x32xf32, #tpu.memory_space<vmem>>, vector<16x32xf32>
    %cst_34 = arith.constant dense<0.000000e+00> : vector<16x256xf32>
    %113 = tpu.matmul %112, %111, %cst_34 {dimension_numbers = #tpu.dot_dimension_numbers<[1], [0], [0], [1], [0, 0, 1, 1], [], []>} : vector<16x32xf32>, vector<32x256xf32>, vector<16x256xf32> -> vector<16x256xf32>
    %c0_35 = arith.constant 0 : index
    %c0_36 = arith.constant 0 : index
    %114 = vector.load %arg9[%c0_35, %c0_36] : memref<16x1xf32, #tpu.memory_space<vmem>>, vector<16x1xf32>
    %115 = vector.broadcast %114 : vector<16x1xf32> to vector<16x256xf32>
    %116 = arith.addf %113, %115 : vector<16x256xf32>
    %c0_37 = arith.constant 0 : index
    %c0_38 = arith.constant 0 : index
    %117 = vector.load %arg10[%c0_37, %c0_38] : memref<16x1xf32, #tpu.memory_space<vmem>>, vector<16x1xf32>
    %118 = vector.broadcast %117 : vector<16x1xf32> to vector<16x256xf32>
    %119 = arith.mulf %118, %116 : vector<16x256xf32>
    %c0_39 = arith.constant 0 : index
    %c0_40 = arith.constant 0 : index
    %c0_41 = arith.constant 0 : index
    %120 = vector.load %arg1[%c0_39, %c0_40, %c0_41] : memref<1x16x256xf32, #tpu.memory_space<vmem>>, vector<1x16x256xf32>
    %121 = vector.shape_cast %120 : vector<1x16x256xf32> to vector<16x256xf32>
    %122 = arith.addf %119, %121 : vector<16x256xf32>
    %c0_42 = arith.constant 0 : index
    %c0_43 = arith.constant 0 : index
    %c0_44 = arith.constant 0 : index
    %123 = vector.load %arg11[%c0_42, %c0_43, %c0_44] : memref<1x16x256xf32, #tpu.memory_space<vmem>>, vector<1x16x256xf32>
    %124 = vector.shape_cast %123 : vector<1x16x256xf32> to vector<16x256xf32>
    %125 = vector.shape_cast %122 : vector<16x256xf32> to vector<1x16x256xf32>
    tpu.vector_store %arg11[%c0_42, %c0_43, %c0_44], %125 {strides = array<i32>} : memref<1x16x256xf32, #tpu.memory_space<vmem>>, vector<1x16x256xf32>,
    return
  }
  func.func @transform_0(%arg0: i32) -> (i32, i32, i32) {
    %c0_i32 = arith.constant 0 : i32
    %c0_i32_0 = arith.constant 0 : i32
    %c0_i32_1 = arith.constant 0 : i32
    return %arg0, %c0_i32, %c0_i32_0 : i32, i32, i32
  }
  func.func @transform_1(%arg0: i32) -> (i32, i32, i32) {
    %c0_i32 = arith.constant 0 : i32
    %c0_i32_0 = arith.constant 0 : i32
    %c0_i32_1 = arith.constant 0 : i32
    return %arg0, %c0_i32, %c0_i32_0 : i32, i32, i32
  }
  func.func @transform_2(%arg0: i32) -> (i32, i32) {
    %c0_i32 = arith.constant 0 : i32
    %c0_i32_0 = arith.constant 0 : i32
    %c0_i32_1 = arith.constant 0 : i32
    return %c0_i32, %c0_i32_0 : i32, i32
  }
  func.func @transform_3(%arg0: i32) -> (i32, i32) {
    %c0_i32 = arith.constant 0 : i32
    %c0_i32_0 = arith.constant 0 : i32
    %c0_i32_1 = arith.constant 0 : i32
    return %c0_i32, %c0_i32_0 : i32, i32
  }
  func.func @transform_4(%arg0: i32) -> (i32, i32) {
    %c0_i32 = arith.constant 0 : i32
    %c0_i32_0 = arith.constant 0 : i32
    %c0_i32_1 = arith.constant 0 : i32
    return %c0_i32, %c0_i32_0 : i32, i32
  }
  func.func @transform_5(%arg0: i32) -> (i32, i32) {
    %c0_i32 = arith.constant 0 : i32
    %c0_i32_0 = arith.constant 0 : i32
    %c0_i32_1 = arith.constant 0 : i32
    return %c0_i32, %c0_i32_0 : i32, i32
  }
  func.func @transform_6(%arg0: i32) -> (i32, i32) {
    %c0_i32 = arith.constant 0 : i32
    %c0_i32_0 = arith.constant 0 : i32
    %c0_i32_1 = arith.constant 0 : i32
    return %c0_i32, %c0_i32_0 : i32, i32
  }
  func.func @transform_7(%arg0: i32) -> (i32, i32) {
    %c0_i32 = arith.constant 0 : i32
    %c0_i32_0 = arith.constant 0 : i32
    %c0_i32_1 = arith.constant 0 : i32
    return %c0_i32, %c0_i32_0 : i32, i32
  }
  func.func @transform_8(%arg0: i32) -> (i32, i32) {
    %c0_i32 = arith.constant 0 : i32
    %c0_i32_0 = arith.constant 0 : i32
    %c0_i32_1 = arith.constant 0 : i32
    return %c0_i32, %c0_i32_0 : i32, i32
  }
  func.func @transform_9(%arg0: i32) -> (i32, i32) {
    %c0_i32 = arith.constant 0 : i32
    %c0_i32_0 = arith.constant 0 : i32
    %c0_i32_1 = arith.constant 0 : i32
    return %c0_i32, %c0_i32_0 : i32, i32
  }
  func.func @transform_10(%arg0: i32) -> (i32, i32, i32) {
    %c0_i32 = arith.constant 0 : i32
    %c0_i32_0 = arith.constant 0 : i32
    %c0_i32_1 = arith.constant 0 : i32
    return %arg0, %c0_i32, %c0_i32_0 : i32, i32, i32
  }
}

module attributes {stable_mosaic.version = 11 : i64} {
  func.func @_groupnorm_kernel(%arg0: i32, %arg1: memref<1x16x256xf32, #tpu.memory_space<vmem>>, %arg2: memref<16x1xf32, #tpu.memory_space<vmem>>, %arg3: memref<16x1xf32, #tpu.memory_space<vmem>>, %arg4: memref<1x16x256xf32, #tpu.memory_space<vmem>>) attributes {dimension_semantics = [#tpu.dimension_semantics<parallel>], iteration_bounds = array<i64: 2>, scalar_prefetch = 0 : i64, scratch_operands = 0 : i64, tpu.core_type = #tpu.core_type<tc>, window_params = [{transform_indices = @transform_0, window_bounds = array<i64: 1, 16, 256>}, {pipeline_mode = #tpu.pipeline_mode<synchronous>, transform_indices = @transform_1, window_bounds = array<i64: 16, 1>}, {pipeline_mode = #tpu.pipeline_mode<synchronous>, transform_indices = @transform_2, window_bounds = array<i64: 16, 1>}, {transform_indices = @transform_3, window_bounds = array<i64: 1, 16, 256>}]} {
    %c0 = arith.constant 0 : index
    %c0_0 = arith.constant 0 : index
    %c0_1 = arith.constant 0 : index
    %0 = vector.load %arg1[%c0, %c0_0, %c0_1] : memref<1x16x256xf32, #tpu.memory_space<vmem>>, vector<1x16x256xf32>
    %1 = vector.shape_cast %0 : vector<1x16x256xf32> to vector<16x256xf32>
    %c0_2 = arith.constant 0 : index
    %c0_3 = arith.constant 0 : index
    %2 = vector.load %arg2[%c0_2, %c0_3] : memref<16x1xf32, #tpu.memory_space<vmem>>, vector<16x1xf32>
    %c0_4 = arith.constant 0 : index
    %c0_5 = arith.constant 0 : index
    %3 = vector.load %arg3[%c0_4, %c0_5] : memref<16x1xf32, #tpu.memory_space<vmem>>, vector<16x1xf32>
    %4 = vector.shape_cast %1 : vector<16x256xf32> to vector<1x16x256xf32>
    %cst = arith.constant dense<0.000000e+00> : vector<1xf32>
    %5 = vector.multi_reduction <add>, %4, %cst [1, 2] : vector<1x16x256xf32> to vector<1xf32>
    %6 = vector.shape_cast %5 : vector<1xf32> to vector<1x1x1xf32>
    %7 = vector.extract %6[0, 0, 0] : f32 from vector<1x1x1xf32>
    %8 = vector.broadcast %7 : f32 to vector<1x1xf32>
    %cst_6 = arith.constant 4.096000e+03 : f32
    %9 = vector.broadcast %cst_6 : f32 to vector<1x1xf32>
    %10 = arith.divf %8, %9 : vector<1x1xf32>
    %11 = vector.broadcast %10 : vector<1x1xf32> to vector<16x256xf32>
    %12 = arith.subf %1, %11 : vector<16x256xf32>
    %13 = arith.mulf %12, %12 : vector<16x256xf32>
    %14 = vector.shape_cast %13 : vector<16x256xf32> to vector<1x16x256xf32>
    %cst_7 = arith.constant dense<0.000000e+00> : vector<1xf32>
    %15 = vector.multi_reduction <add>, %14, %cst_7 [1, 2] : vector<1x16x256xf32> to vector<1xf32>
    %16 = vector.shape_cast %15 : vector<1xf32> to vector<1x1x1xf32>
    %17 = vector.extract %16[0, 0, 0] : f32 from vector<1x1x1xf32>
    %18 = vector.broadcast %17 : f32 to vector<1x1xf32>
    %cst_8 = arith.constant 4.096000e+03 : f32
    %19 = vector.broadcast %cst_8 : f32 to vector<1x1xf32>
    %20 = arith.divf %18, %19 : vector<1x1xf32>
    %21 = vector.broadcast %10 : vector<1x1xf32> to vector<16x256xf32>
    %22 = arith.subf %1, %21 : vector<16x256xf32>
    %cst_9 = arith.constant 9.99999974E-6 : f32
    %23 = vector.broadcast %cst_9 : f32 to vector<1x1xf32>
    %24 = arith.addf %20, %23 : vector<1x1xf32>
    %25 = math.rsqrt %24 : vector<1x1xf32>
    %26 = vector.broadcast %25 : vector<1x1xf32> to vector<16x256xf32>
    %27 = arith.mulf %22, %26 : vector<16x256xf32>
    %28 = vector.broadcast %2 : vector<16x1xf32> to vector<16x256xf32>
    %29 = arith.mulf %27, %28 : vector<16x256xf32>
    %30 = vector.broadcast %3 : vector<16x1xf32> to vector<16x256xf32>
    %31 = arith.addf %29, %30 : vector<16x256xf32>
    %c0_10 = arith.constant 0 : index
    %c0_11 = arith.constant 0 : index
    %c0_12 = arith.constant 0 : index
    %32 = vector.load %arg4[%c0_10, %c0_11, %c0_12] : memref<1x16x256xf32, #tpu.memory_space<vmem>>, vector<1x16x256xf32>
    %33 = vector.shape_cast %32 : vector<1x16x256xf32> to vector<16x256xf32>
    %34 = vector.shape_cast %31 : vector<16x256xf32> to vector<1x16x256xf32>
    tpu.vector_store %arg4[%c0_10, %c0_11, %c0_12], %34 {strides = array<i32>} : memref<1x16x256xf32, #tpu.memory_space<vmem>>, vector<1x16x256xf32>,
    return
  }
  func.func @transform_0(%arg0: i32) -> (i32, i32, i32) {
    %c0_i32 = arith.constant 0 : i32
    %c0_i32_0 = arith.constant 0 : i32
    %c0_i32_1 = arith.constant 0 : i32
    return %arg0, %c0_i32, %c0_i32_0 : i32, i32, i32
  }
  func.func @transform_1(%arg0: i32) -> (i32, i32) {
    %c0_i32 = arith.constant 0 : i32
    %c0_i32_0 = arith.constant 0 : i32
    %c0_i32_1 = arith.constant 0 : i32
    return %c0_i32, %c0_i32_0 : i32, i32
  }
  func.func @transform_2(%arg0: i32) -> (i32, i32) {
    %c0_i32 = arith.constant 0 : i32
    %c0_i32_0 = arith.constant 0 : i32
    %c0_i32_1 = arith.constant 0 : i32
    return %c0_i32, %c0_i32_0 : i32, i32
  }
  func.func @transform_3(%arg0: i32) -> (i32, i32, i32) {
    %c0_i32 = arith.constant 0 : i32
    %c0_i32_0 = arith.constant 0 : i32
    %c0_i32_1 = arith.constant 0 : i32
    return %arg0, %c0_i32, %c0_i32_0 : i32, i32, i32
  }
}

module attributes {stable_mosaic.version = 11 : i64} {
  func.func @_patch_conv_kernel(%arg0: i32, %arg1: memref<1x32x128xf32, #tpu.memory_space<vmem>>, %arg2: memref<32x32xf32, #tpu.memory_space<vmem>>, %arg3: memref<32x1xf32, #tpu.memory_space<vmem>>, %arg4: memref<1x32x128xf32, #tpu.memory_space<vmem>>) attributes {dimension_semantics = [#tpu.dimension_semantics<parallel>], iteration_bounds = array<i64: 2>, scalar_prefetch = 0 : i64, scratch_operands = 0 : i64, tpu.core_type = #tpu.core_type<tc>, window_params = [{transform_indices = @transform_0, window_bounds = array<i64: 1, 32, 128>}, {pipeline_mode = #tpu.pipeline_mode<synchronous>, transform_indices = @transform_1, window_bounds = array<i64: 32, 32>}, {pipeline_mode = #tpu.pipeline_mode<synchronous>, transform_indices = @transform_2, window_bounds = array<i64: 32, 1>}, {transform_indices = @transform_3, window_bounds = array<i64: 1, 32, 128>}]} {
    %c0 = arith.constant 0 : index
    %c0_0 = arith.constant 0 : index
    %0 = vector.load %arg2[%c0, %c0_0] : memref<32x32xf32, #tpu.memory_space<vmem>>, vector<32x32xf32>
    %c0_1 = arith.constant 0 : index
    %c0_2 = arith.constant 0 : index
    %c0_3 = arith.constant 0 : index
    %1 = vector.load %arg1[%c0_1, %c0_2, %c0_3] : memref<1x32x128xf32, #tpu.memory_space<vmem>>, vector<1x32x128xf32>
    %2 = vector.shape_cast %1 : vector<1x32x128xf32> to vector<32x128xf32>
    %cst = arith.constant dense<0.000000e+00> : vector<32x128xf32>
    %3 = tpu.matmul %0, %2, %cst {dimension_numbers = #tpu.dot_dimension_numbers<[1], [0], [0], [1], [0, 0, 1, 1], [], []>} : vector<32x32xf32>, vector<32x128xf32>, vector<32x128xf32> -> vector<32x128xf32>
    %c0_4 = arith.constant 0 : index
    %c0_5 = arith.constant 0 : index
    %4 = vector.load %arg3[%c0_4, %c0_5] : memref<32x1xf32, #tpu.memory_space<vmem>>, vector<32x1xf32>
    %5 = vector.broadcast %4 : vector<32x1xf32> to vector<32x128xf32>
    %6 = arith.addf %3, %5 : vector<32x128xf32>
    %c0_6 = arith.constant 0 : index
    %c0_7 = arith.constant 0 : index
    %c0_8 = arith.constant 0 : index
    %7 = vector.load %arg4[%c0_6, %c0_7, %c0_8] : memref<1x32x128xf32, #tpu.memory_space<vmem>>, vector<1x32x128xf32>
    %8 = vector.shape_cast %7 : vector<1x32x128xf32> to vector<32x128xf32>
    %9 = vector.shape_cast %6 : vector<32x128xf32> to vector<1x32x128xf32>
    tpu.vector_store %arg4[%c0_6, %c0_7, %c0_8], %9 {strides = array<i32>} : memref<1x32x128xf32, #tpu.memory_space<vmem>>, vector<1x32x128xf32>,
    return
  }
  func.func @transform_0(%arg0: i32) -> (i32, i32, i32) {
    %c0_i32 = arith.constant 0 : i32
    %c0_i32_0 = arith.constant 0 : i32
    %c0_i32_1 = arith.constant 0 : i32
    return %arg0, %c0_i32, %c0_i32_0 : i32, i32, i32
  }
  func.func @transform_1(%arg0: i32) -> (i32, i32) {
    %c0_i32 = arith.constant 0 : i32
    %c0_i32_0 = arith.constant 0 : i32
    %c0_i32_1 = arith.constant 0 : i32
    return %c0_i32, %c0_i32_0 : i32, i32
  }
  func.func @transform_2(%arg0: i32) -> (i32, i32) {
    %c0_i32 = arith.constant 0 : i32
    %c0_i32_0 = arith.constant 0 : i32
    %c0_i32_1 = arith.constant 0 : i32
    return %c0_i32, %c0_i32_0 : i32, i32
  }
  func.func @transform_3(%arg0: i32) -> (i32, i32, i32) {
    %c0_i32 = arith.constant 0 : i32
    %c0_i32_0 = arith.constant 0 : i32
    %c0_i32_1 = arith.constant 0 : i32
    return %arg0, %c0_i32, %c0_i32_0 : i32, i32, i32
  }
}

module attributes {stable_mosaic.version = 11 : i64} {
  func.func @_bottleneck_kernel(%arg0: i32, %arg1: memref<1x32x128xf32, #tpu.memory_space<vmem>>, %arg2: memref<1x32x134xf32, #tpu.memory_space<vmem>>, %arg3: memref<32x7xf32, #tpu.memory_space<vmem>>, %arg4: memref<32x1xf32, #tpu.memory_space<vmem>>, %arg5: memref<32x1xf32, #tpu.memory_space<vmem>>, %arg6: memref<64x32xf32, #tpu.memory_space<vmem>>, %arg7: memref<64x1xf32, #tpu.memory_space<vmem>>, %arg8: memref<32x64xf32, #tpu.memory_space<vmem>>, %arg9: memref<32x1xf32, #tpu.memory_space<vmem>>, %arg10: memref<32x1xf32, #tpu.memory_space<vmem>>, %arg11: memref<1x32x128xf32, #tpu.memory_space<vmem>>) attributes {dimension_semantics = [#tpu.dimension_semantics<parallel>], iteration_bounds = array<i64: 2>, scalar_prefetch = 0 : i64, scratch_operands = 0 : i64, tpu.core_type = #tpu.core_type<tc>, window_params = [{transform_indices = @transform_0, window_bounds = array<i64: 1, 32, 128>}, {transform_indices = @transform_1, window_bounds = array<i64: 1, 32, 134>}, {pipeline_mode = #tpu.pipeline_mode<synchronous>, transform_indices = @transform_2, window_bounds = array<i64: 32, 7>}, {pipeline_mode = #tpu.pipeline_mode<synchronous>, transform_indices = @transform_3, window_bounds = array<i64: 32, 1>}, {pipeline_mode = #tpu.pipeline_mode<synchronous>, transform_indices = @transform_4, window_bounds = array<i64: 32, 1>}, {pipeline_mode = #tpu.pipeline_mode<synchronous>, transform_indices = @transform_5, window_bounds = array<i64: 64, 32>}, {pipeline_mode = #tpu.pipeline_mode<synchronous>, transform_indices = @transform_6, window_bounds = array<i64: 64, 1>}, {pipeline_mode = #tpu.pipeline_mode<synchronous>, transform_indices = @transform_7, window_bounds = array<i64: 32, 64>}, {pipeline_mode = #tpu.pipeline_mode<synchronous>, transform_indices = @transform_8, window_bounds = array<i64: 32, 1>}, {pipeline_mode = #tpu.pipeline_mode<synchronous>, transform_indices = @transform_9, window_bounds = array<i64: 32, 1>}, {transform_indices = @transform_10, window_bounds = array<i64: 1, 32, 128>}]} {
    %c0 = arith.constant 0 : index
    %c0_0 = arith.constant 0 : index
    %c0_1 = arith.constant 0 : index
    %0 = vector.load %arg2[%c0, %c0_0, %c0_1] : memref<1x32x134xf32, #tpu.memory_space<vmem>>, vector<1x32x134xf32>
    %1 = vector.shape_cast %0 : vector<1x32x134xf32> to vector<32x134xf32>
    %c0_2 = arith.constant 0 : index
    %c0_3 = arith.constant 0 : index
    %2 = vector.load %arg3[%c0_2, %c0_3] : memref<32x7xf32, #tpu.memory_space<vmem>>, vector<32x7xf32>
    %3 = vector.extract_strided_slice %2 {offsets = [0, 0], sizes = [32, 1], strides = [1, 1]} : vector<32x7xf32> to vector<32x1xf32>
    %4 = vector.extract_strided_slice %1 {offsets = [0, 0], sizes = [32, 128], strides = [1, 1]} : vector<32x134xf32> to vector<32x128xf32>
    %5 = vector.broadcast %3 : vector<32x1xf32> to vector<32x128xf32>
    %6 = arith.mulf %5, %4 : vector<32x128xf32>
    %7 = vector.extract_strided_slice %2 {offsets = [0, 1], sizes = [32, 1], strides = [1, 1]} : vector<32x7xf32> to vector<32x1xf32>
    %8 = vector.extract_strided_slice %1 {offsets = [0, 1], sizes = [32, 128], strides = [1, 1]} : vector<32x134xf32> to vector<32x128xf32>
    %9 = vector.broadcast %7 : vector<32x1xf32> to vector<32x128xf32>
    %10 = arith.mulf %9, %8 : vector<32x128xf32>
    %11 = arith.addf %6, %10 : vector<32x128xf32>
    %12 = vector.extract_strided_slice %2 {offsets = [0, 2], sizes = [32, 1], strides = [1, 1]} : vector<32x7xf32> to vector<32x1xf32>
    %13 = vector.extract_strided_slice %1 {offsets = [0, 2], sizes = [32, 128], strides = [1, 1]} : vector<32x134xf32> to vector<32x128xf32>
    %14 = vector.broadcast %12 : vector<32x1xf32> to vector<32x128xf32>
    %15 = arith.mulf %14, %13 : vector<32x128xf32>
    %16 = arith.addf %11, %15 : vector<32x128xf32>
    %17 = vector.extract_strided_slice %2 {offsets = [0, 3], sizes = [32, 1], strides = [1, 1]} : vector<32x7xf32> to vector<32x1xf32>
    %18 = vector.extract_strided_slice %1 {offsets = [0, 3], sizes = [32, 128], strides = [1, 1]} : vector<32x134xf32> to vector<32x128xf32>
    %19 = vector.broadcast %17 : vector<32x1xf32> to vector<32x128xf32>
    %20 = arith.mulf %19, %18 : vector<32x128xf32>
    %21 = arith.addf %16, %20 : vector<32x128xf32>
    %22 = vector.extract_strided_slice %2 {offsets = [0, 4], sizes = [32, 1], strides = [1, 1]} : vector<32x7xf32> to vector<32x1xf32>
    %23 = vector.extract_strided_slice %1 {offsets = [0, 4], sizes = [32, 128], strides = [1, 1]} : vector<32x134xf32> to vector<32x128xf32>
    %24 = vector.broadcast %22 : vector<32x1xf32> to vector<32x128xf32>
    %25 = arith.mulf %24, %23 : vector<32x128xf32>
    %26 = arith.addf %21, %25 : vector<32x128xf32>
    %27 = vector.extract_strided_slice %2 {offsets = [0, 5], sizes = [32, 1], strides = [1, 1]} : vector<32x7xf32> to vector<32x1xf32>
    %28 = vector.extract_strided_slice %1 {offsets = [0, 5], sizes = [32, 128], strides = [1, 1]} : vector<32x134xf32> to vector<32x128xf32>
    %29 = vector.broadcast %27 : vector<32x1xf32> to vector<32x128xf32>
    %30 = arith.mulf %29, %28 : vector<32x128xf32>
    %31 = arith.addf %26, %30 : vector<32x128xf32>
    %32 = vector.extract_strided_slice %2 {offsets = [0, 6], sizes = [32, 1], strides = [1, 1]} : vector<32x7xf32> to vector<32x1xf32>
    %33 = vector.extract_strided_slice %1 {offsets = [0, 6], sizes = [32, 128], strides = [1, 1]} : vector<32x134xf32> to vector<32x128xf32>
    %34 = vector.broadcast %32 : vector<32x1xf32> to vector<32x128xf32>
    %35 = arith.mulf %34, %33 : vector<32x128xf32>
    %36 = arith.addf %31, %35 : vector<32x128xf32>
    %c0_4 = arith.constant 0 : index
    %c0_5 = arith.constant 0 : index
    %37 = vector.load %arg4[%c0_4, %c0_5] : memref<32x1xf32, #tpu.memory_space<vmem>>, vector<32x1xf32>
    %c0_6 = arith.constant 0 : index
    %c0_7 = arith.constant 0 : index
    %38 = vector.load %arg5[%c0_6, %c0_7] : memref<32x1xf32, #tpu.memory_space<vmem>>, vector<32x1xf32>
    %39 = vector.shape_cast %36 : vector<32x128xf32> to vector<1x32x128xf32>
    %cst = arith.constant dense<0.000000e+00> : vector<1xf32>
    %40 = vector.multi_reduction <add>, %39, %cst [1, 2] : vector<1x32x128xf32> to vector<1xf32>
    %41 = vector.shape_cast %40 : vector<1xf32> to vector<1x1x1xf32>
    %42 = vector.extract %41[0, 0, 0] : f32 from vector<1x1x1xf32>
    %43 = vector.broadcast %42 : f32 to vector<1x1xf32>
    %cst_8 = arith.constant 4.096000e+03 : f32
    %44 = vector.broadcast %cst_8 : f32 to vector<1x1xf32>
    %45 = arith.divf %43, %44 : vector<1x1xf32>
    %46 = vector.broadcast %45 : vector<1x1xf32> to vector<32x128xf32>
    %47 = arith.subf %36, %46 : vector<32x128xf32>
    %48 = arith.mulf %47, %47 : vector<32x128xf32>
    %49 = vector.shape_cast %48 : vector<32x128xf32> to vector<1x32x128xf32>
    %cst_9 = arith.constant dense<0.000000e+00> : vector<1xf32>
    %50 = vector.multi_reduction <add>, %49, %cst_9 [1, 2] : vector<1x32x128xf32> to vector<1xf32>
    %51 = vector.shape_cast %50 : vector<1xf32> to vector<1x1x1xf32>
    %52 = vector.extract %51[0, 0, 0] : f32 from vector<1x1x1xf32>
    %53 = vector.broadcast %52 : f32 to vector<1x1xf32>
    %cst_10 = arith.constant 4.096000e+03 : f32
    %54 = vector.broadcast %cst_10 : f32 to vector<1x1xf32>
    %55 = arith.divf %53, %54 : vector<1x1xf32>
    %56 = vector.broadcast %45 : vector<1x1xf32> to vector<32x128xf32>
    %57 = arith.subf %36, %56 : vector<32x128xf32>
    %cst_11 = arith.constant 9.99999974E-6 : f32
    %58 = vector.broadcast %cst_11 : f32 to vector<1x1xf32>
    %59 = arith.addf %55, %58 : vector<1x1xf32>
    %60 = math.rsqrt %59 : vector<1x1xf32>
    %61 = vector.broadcast %60 : vector<1x1xf32> to vector<32x128xf32>
    %62 = arith.mulf %57, %61 : vector<32x128xf32>
    %63 = vector.broadcast %37 : vector<32x1xf32> to vector<32x128xf32>
    %64 = arith.mulf %62, %63 : vector<32x128xf32>
    %65 = vector.broadcast %38 : vector<32x1xf32> to vector<32x128xf32>
    %66 = arith.addf %64, %65 : vector<32x128xf32>
    %c0_12 = arith.constant 0 : index
    %c0_13 = arith.constant 0 : index
    %67 = vector.load %arg6[%c0_12, %c0_13] : memref<64x32xf32, #tpu.memory_space<vmem>>, vector<64x32xf32>
    %cst_14 = arith.constant dense<0.000000e+00> : vector<64x128xf32>
    %68 = tpu.matmul %67, %66, %cst_14 {dimension_numbers = #tpu.dot_dimension_numbers<[1], [0], [0], [1], [0, 0, 1, 1], [], []>} : vector<64x32xf32>, vector<32x128xf32>, vector<64x128xf32> -> vector<64x128xf32>
    %c0_15 = arith.constant 0 : index
    %c0_16 = arith.constant 0 : index
    %69 = vector.load %arg7[%c0_15, %c0_16] : memref<64x1xf32, #tpu.memory_space<vmem>>, vector<64x1xf32>
    %70 = vector.broadcast %69 : vector<64x1xf32> to vector<64x128xf32>
    %71 = arith.addf %68, %70 : vector<64x128xf32>
    %cst_17 = arith.constant 5.000000e-01 : f32
    %72 = vector.broadcast %cst_17 : f32 to vector<64x128xf32>
    %73 = arith.mulf %72, %71 : vector<64x128xf32>
    %cst_18 = arith.constant 0.707106769 : f32
    %74 = vector.broadcast %cst_18 : f32 to vector<64x128xf32>
    %75 = arith.mulf %71, %74 : vector<64x128xf32>
    %76 = math.absf %75 : vector<64x128xf32>
    %cst_19 = arith.constant 0.327591091 : f32
    %77 = vector.broadcast %cst_19 : f32 to vector<64x128xf32>
    %78 = arith.mulf %77, %76 : vector<64x128xf32>
    %cst_20 = arith.constant 1.000000e+00 : f32
    %79 = vector.broadcast %cst_20 : f32 to vector<64x128xf32>
    %80 = arith.addf %79, %78 : vector<64x128xf32>
    %cst_21 = arith.constant 1.000000e+00 : f32
    %81 = vector.broadcast %cst_21 : f32 to vector<64x128xf32>
    %82 = arith.divf %81, %80 : vector<64x128xf32>
    %cst_22 = arith.constant 1.06140542 : f32
    %83 = vector.broadcast %cst_22 : f32 to vector<64x128xf32>
    %84 = arith.mulf %83, %82 : vector<64x128xf32>
    %cst_23 = arith.constant -1.45315206 : f32
    %85 = vector.broadcast %cst_23 : f32 to vector<64x128xf32>
    %86 = arith.addf %84, %85 : vector<64x128xf32>
    %87 = arith.mulf %86, %82 : vector<64x128xf32>
    %cst_24 = arith.constant 1.42141378 : f32
    %88 = vector.broadcast %cst_24 : f32 to vector<64x128xf32>
    %89 = arith.addf %87, %88 : vector<64x128xf32>
    %90 = arith.mulf %89, %82 : vector<64x128xf32>
    %cst_25 = arith.constant -0.284496725 : f32
    %91 = vector.broadcast %cst_25 : f32 to vector<64x128xf32>
    %92 = arith.addf %90, %91 : vector<64x128xf32>
    %93 = arith.mulf %92, %82 : vector<64x128xf32>
    %cst_26 = arith.constant 0.254829586 : f32
    %94 = vector.broadcast %cst_26 : f32 to vector<64x128xf32>
    %95 = arith.addf %93, %94 : vector<64x128xf32>
    %96 = arith.mulf %95, %82 : vector<64x128xf32>
    %cst_27 = arith.constant 0.000000e+00 : f32
    %97 = vector.broadcast %cst_27 : f32 to vector<64x128xf32>
    %98 = arith.subf %97, %76 : vector<64x128xf32>
    %99 = arith.mulf %98, %76 : vector<64x128xf32>
    %100 = math.exp %99 : vector<64x128xf32>
    %101 = arith.mulf %96, %100 : vector<64x128xf32>
    %cst_28 = arith.constant 1.000000e+00 : f32
    %102 = vector.broadcast %cst_28 : f32 to vector<64x128xf32>
    %103 = arith.subf %102, %101 : vector<64x128xf32>
    %cst_29 = arith.constant 0.000000e+00 : f32
    %104 = vector.broadcast %cst_29 : f32 to vector<64x128xf32>
    %105 = arith.cmpf olt, %75, %104 : vector<64x128xf32>
    %cst_30 = arith.constant 0.000000e+00 : f32
    %106 = vector.broadcast %cst_30 : f32 to vector<64x128xf32>
    %107 = arith.subf %106, %103 : vector<64x128xf32>
    %108 = arith.select %105, %107, %103 : vector<64x128xi1>, vector<64x128xf32>
    %cst_31 = arith.constant 1.000000e+00 : f32
    %109 = vector.broadcast %cst_31 : f32 to vector<64x128xf32>
    %110 = arith.addf %109, %108 : vector<64x128xf32>
    %111 = arith.mulf %73, %110 : vector<64x128xf32>
    %c0_32 = arith.constant 0 : index
    %c0_33 = arith.constant 0 : index
    %112 = vector.load %arg8[%c0_32, %c0_33] : memref<32x64xf32, #tpu.memory_space<vmem>>, vector<32x64xf32>
    %cst_34 = arith.constant dense<0.000000e+00> : vector<32x128xf32>
    %113 = tpu.matmul %112, %111, %cst_34 {dimension_numbers = #tpu.dot_dimension_numbers<[1], [0], [0], [1], [0, 0, 1, 1], [], []>} : vector<32x64xf32>, vector<64x128xf32>, vector<32x128xf32> -> vector<32x128xf32>
    %c0_35 = arith.constant 0 : index
    %c0_36 = arith.constant 0 : index
    %114 = vector.load %arg9[%c0_35, %c0_36] : memref<32x1xf32, #tpu.memory_space<vmem>>, vector<32x1xf32>
    %115 = vector.broadcast %114 : vector<32x1xf32> to vector<32x128xf32>
    %116 = arith.addf %113, %115 : vector<32x128xf32>
    %c0_37 = arith.constant 0 : index
    %c0_38 = arith.constant 0 : index
    %117 = vector.load %arg10[%c0_37, %c0_38] : memref<32x1xf32, #tpu.memory_space<vmem>>, vector<32x1xf32>
    %118 = vector.broadcast %117 : vector<32x1xf32> to vector<32x128xf32>
    %119 = arith.mulf %118, %116 : vector<32x128xf32>
    %c0_39 = arith.constant 0 : index
    %c0_40 = arith.constant 0 : index
    %c0_41 = arith.constant 0 : index
    %120 = vector.load %arg1[%c0_39, %c0_40, %c0_41] : memref<1x32x128xf32, #tpu.memory_space<vmem>>, vector<1x32x128xf32>
    %121 = vector.shape_cast %120 : vector<1x32x128xf32> to vector<32x128xf32>
    %122 = arith.addf %119, %121 : vector<32x128xf32>
    %c0_42 = arith.constant 0 : index
    %c0_43 = arith.constant 0 : index
    %c0_44 = arith.constant 0 : index
    %123 = vector.load %arg11[%c0_42, %c0_43, %c0_44] : memref<1x32x128xf32, #tpu.memory_space<vmem>>, vector<1x32x128xf32>
    %124 = vector.shape_cast %123 : vector<1x32x128xf32> to vector<32x128xf32>
    %125 = vector.shape_cast %122 : vector<32x128xf32> to vector<1x32x128xf32>
    tpu.vector_store %arg11[%c0_42, %c0_43, %c0_44], %125 {strides = array<i32>} : memref<1x32x128xf32, #tpu.memory_space<vmem>>, vector<1x32x128xf32>,
    return
  }
  func.func @transform_0(%arg0: i32) -> (i32, i32, i32) {
    %c0_i32 = arith.constant 0 : i32
    %c0_i32_0 = arith.constant 0 : i32
    %c0_i32_1 = arith.constant 0 : i32
    return %arg0, %c0_i32, %c0_i32_0 : i32, i32, i32
  }
  func.func @transform_1(%arg0: i32) -> (i32, i32, i32) {
    %c0_i32 = arith.constant 0 : i32
    %c0_i32_0 = arith.constant 0 : i32
    %c0_i32_1 = arith.constant 0 : i32
    return %arg0, %c0_i32, %c0_i32_0 : i32, i32, i32
  }
  func.func @transform_2(%arg0: i32) -> (i32, i32) {
    %c0_i32 = arith.constant 0 : i32
    %c0_i32_0 = arith.constant 0 : i32
    %c0_i32_1 = arith.constant 0 : i32
    return %c0_i32, %c0_i32_0 : i32, i32
  }
  func.func @transform_3(%arg0: i32) -> (i32, i32) {
    %c0_i32 = arith.constant 0 : i32
    %c0_i32_0 = arith.constant 0 : i32
    %c0_i32_1 = arith.constant 0 : i32
    return %c0_i32, %c0_i32_0 : i32, i32
  }
  func.func @transform_4(%arg0: i32) -> (i32, i32) {
    %c0_i32 = arith.constant 0 : i32
    %c0_i32_0 = arith.constant 0 : i32
    %c0_i32_1 = arith.constant 0 : i32
    return %c0_i32, %c0_i32_0 : i32, i32
  }
  func.func @transform_5(%arg0: i32) -> (i32, i32) {
    %c0_i32 = arith.constant 0 : i32
    %c0_i32_0 = arith.constant 0 : i32
    %c0_i32_1 = arith.constant 0 : i32
    return %c0_i32, %c0_i32_0 : i32, i32
  }
  func.func @transform_6(%arg0: i32) -> (i32, i32) {
    %c0_i32 = arith.constant 0 : i32
    %c0_i32_0 = arith.constant 0 : i32
    %c0_i32_1 = arith.constant 0 : i32
    return %c0_i32, %c0_i32_0 : i32, i32
  }
  func.func @transform_7(%arg0: i32) -> (i32, i32) {
    %c0_i32 = arith.constant 0 : i32
    %c0_i32_0 = arith.constant 0 : i32
    %c0_i32_1 = arith.constant 0 : i32
    return %c0_i32, %c0_i32_0 : i32, i32
  }
  func.func @transform_8(%arg0: i32) -> (i32, i32) {
    %c0_i32 = arith.constant 0 : i32
    %c0_i32_0 = arith.constant 0 : i32
    %c0_i32_1 = arith.constant 0 : i32
    return %c0_i32, %c0_i32_0 : i32, i32
  }
  func.func @transform_9(%arg0: i32) -> (i32, i32) {
    %c0_i32 = arith.constant 0 : i32
    %c0_i32_0 = arith.constant 0 : i32
    %c0_i32_1 = arith.constant 0 : i32
    return %c0_i32, %c0_i32_0 : i32, i32
  }
  func.func @transform_10(%arg0: i32) -> (i32, i32, i32) {
    %c0_i32 = arith.constant 0 : i32
    %c0_i32_0 = arith.constant 0 : i32
    %c0_i32_1 = arith.constant 0 : i32
    return %arg0, %c0_i32, %c0_i32_0 : i32, i32, i32
  }
}

</mosaic_0001>

<llo_original>
// kernel: convnext_encoder.9
$region0: #{convnext_encoder.9}
  #allocation0 [shape = 'u32[]', space=smem, size = 0x4, offset = 0x4, fixed_abs, tag = 'smem constant byte address 0x4 - core index']
  #allocation1 [shape = 'u32[144,128]{1,0:T(1,128)}', space=vmem, size = 0x12000, scoped, tag = 'internal scratch']
  %s0 = inlined_call_operand.vmem [shape: f32[2,16,512], index: 0, kind: input, shape index: {}]
  %s1 = inlined_call_operand.vmem [shape: f32[16,1], index: 1, kind: input, shape index: {}]
  %s2 = inlined_call_operand.vmem [shape: f32[16,1], index: 2, kind: input, shape index: {}]
  %s3 = inlined_call_operand.vmem [shape: f32[2,16,512], index: 3, kind: output, shape index: {}]
  %s4 = sld [smem:[#allocation0]]
  $region45: #{convnext_encoder.9} parent=0
    _
  %s6 = ssub.s32 1, %s4
  %s7 = scalar_select 0, %s6, %s4
  loop: start=0, step=1, limit=4
  $region2: #{convnext_encoder.9} parent=0 // loop_pre_header
    _
  $region3: #{convnext_encoder.9} parent=0 // loop_header
    %s9 = sphi 0, %s13
    %p10 = scmp.ge.s32.totalorder %s9, 4
    %s19 = sphi 0, %s21
    %s22 = sphi 0, %s19
    %s23 = sphi 0, %s22
    %s39 = sphi 0, %s23
    %s43 = sphi 0, %s43
    %s45 = sphi 0, %s43
    %s46 = sphi 0, %s45
    %s60 = sphi 0, %s46
    %s64 = sphi 0, %s64
    %s66 = sphi 0, %s64
    %s67 = sphi 0, %s66
    %s81 = sphi 0, %s67
    %s87 = sphi 0, %s89
    %s90 = sphi 0, %s87
    %s91 = sphi 0, %s90
    %s107 = sphi 0, %s91
  $region4: #{convnext_encoder.9} parent=0 // loop_header_branch
    %12 = sbr.rel (%p10) target = $region8
  $region5: #{convnext_encoder.9} parent=0 // loop_body
    %s14 = ssub.s32 %s9, 1
    %s15 = ssub.s32 %s9, 2
    %s16 = sadd.s32 %s9, 1
    %s17 = ssub.s32 %s9, %s16
    %p18 = scmp.eq.s32.totalorder %s17, 0
    %s20 = sadd.s32 %s19, 1
    %s21 = scalar_select %p18, %s19, %s20
    %p24 = pneg %p18
    %p25 = scmp.eq.s32.totalorder %s9, 1
    %p26 = por %p24, %p25
    %p27 = scmp.ne.s32.totalorder %s19, %s22
    %p28 = scmp.eq.s32.totalorder %s9, 0
    %p29 = por %p27, %p28
    %p30 = scmp.ne.s32.totalorder %s19, %s22
    %p31 = scmp.eq.s32.totalorder %s14, 1
    %p32 = por %p30, %p31
    %p33 = scmp.ne.s32.totalorder %s22, %s23
    %p34 = scmp.eq.s32.totalorder %s14, 0
    %p35 = por %p33, %p34
    %p36 = scmp.ne.s32.totalorder %s22, %s23
    %p37 = scmp.eq.s32.totalorder %s15, 1
    %p38 = por %p36, %p37
    %p40 = scmp.ne.s32.totalorder %s23, %s39
    %p41 = scmp.eq.s32.totalorder %s15, 0
    %p42 = por %p40, %p41
    %s44 = sadd.s32 %s43, 1
    %p47 = scmp.eq.s32.totalorder %s9, 1
    %p48 = scmp.ne.s32.totalorder %s43, %s45
    %p49 = scmp.eq.s32.totalorder %s9, 0
    %p50 = por %p48, %p49
    %p51 = scmp.ne.s32.totalorder %s43, %s45
    %p52 = scmp.eq.s32.totalorder %s14, 1
    %p53 = por %p51, %p52
    %p54 = scmp.ne.s32.totalorder %s45, %s46
    %p55 = scmp.eq.s32.totalorder %s14, 0
    %p56 = por %p54, %p55
    %p57 = scmp.ne.s32.totalorder %s45, %s46
    %p58 = scmp.eq.s32.totalorder %s15, 1
    %p59 = por %p57, %p58
    %p61 = scmp.ne.s32.totalorder %s46, %s60
    %p62 = scmp.eq.s32.totalorder %s15, 0
    %p63 = por %p61, %p62
    %s65 = sadd.s32 %s64, 1
    %p68 = scmp.eq.s32.totalorder %s9, 1
    %p69 = scmp.ne.s32.totalorder %s64, %s66
    %p70 = scmp.eq.s32.totalorder %s9, 0
    %p71 = por %p69, %p70
    %p72 = scmp.ne.s32.totalorder %s64, %s66
    %p73 = scmp.eq.s32.totalorder %s14, 1
    %p74 = por %p72, %p73
    %p75 = scmp.ne.s32.totalorder %s66, %s67
    %p76 = scmp.eq.s32.totalorder %s14, 0
    %p77 = por %p75, %p76
    %p78 = scmp.ne.s32.totalorder %s66, %s67
    %p79 = scmp.eq.s32.totalorder %s15, 1
    %p80 = por %p78, %p79
    %p82 = scmp.ne.s32.totalorder %s67, %s81
    %p83 = scmp.eq.s32.totalorder %s15, 0
    %p84 = por %p82, %p83
    %s85 = ssub.s32 %s9, %s16
    %p86 = scmp.eq.s32.totalorder %s85, 0
    %s88 = sadd.s32 %s87, 1
    %s89 = scalar_select %p86, %s87, %s88
    %p92 = pneg %p86
    %p93 = scmp.eq.s32.totalorder %s9, 1
    %p94 = por %p92, %p93
    %p95 = scmp.ne.s32.totalorder %s87, %s90
    %p96 = scmp.eq.s32.totalorder %s9, 0
    %p97 = por %p95, %p96
    %p98 = scmp.ne.s32.totalorder %s87, %s90
    %p99 = scmp.eq.s32.totalorder %s14, 1
    %p100 = por %p98, %p99
    %p101 = scmp.ne.s32.totalorder %s90, %s91
    %p102 = scmp.eq.s32.totalorder %s14, 0
    %p103 = por %p101, %p102
    %p104 = scmp.ne.s32.totalorder %s90, %s91
    %p105 = scmp.eq.s32.totalorder %s15, 1
    %p106 = por %p104, %p105
    %p108 = scmp.ne.s32.totalorder %s91, %s107
    %p109 = scmp.eq.s32.totalorder %s15, 0
    %p110 = por %p108, %p109
    %p111 = scmp.le.s32.totalorder 1, %s9
    %p112 = scmp.lt.s32.totalorder %s9, 3
    %p113 = pnand %p111, %p112
    %p114 = pneg %p113
    // Predicated region
    $region9: #{convnext_encoder.9} parent=5 // pred_check
      _
    $region10: #{convnext_encoder.9} parent=5 // pred_check_branch
      %116 = sbr.rel (%p113) target = $region12
    $region11: #{convnext_encoder.9} parent=5 // pred_region
      %s117 = ssub.s32 %s9, 1
      // Predicated region
      $region13: #{convnext_encoder.9} parent=11 // pred_check
        %p118 = pneg %p56
      $region14: #{convnext_encoder.9} parent=11 // pred_check_branch
        %120 = sbr.rel (%p118) target = $region16
      $region15: #{convnext_encoder.9} parent=11 // pred_region
        _
      $region16: #{convnext_encoder.9} parent=11 // pred_fallthru
        _
      // Predicated region
      $region17: #{convnext_encoder.9} parent=11 // pred_check
        %p121 = pneg %p77
      $region18: #{convnext_encoder.9} parent=11 // pred_check_branch
        %123 = sbr.rel (%p121) target = $region20
      $region19: #{convnext_encoder.9} parent=11 // pred_region
        _
      $region20: #{convnext_encoder.9} parent=11 // pred_fallthru
        _
    $region12: #{convnext_encoder.9} parent=5 // pred_fallthru
      _
    %p124 = scmp.lt.s32.totalorder %s9, 2
    // Predicated region
    $region21: #{convnext_encoder.9} parent=5 // pred_check
      %p125 = pneg %p124
    $region22: #{convnext_encoder.9} parent=5 // pred_check_branch
      %127 = sbr.rel (%p125) target = $region24
    $region23: #{convnext_encoder.9} parent=5 // pred_region
      // Predicated region
      $region25: #{convnext_encoder.9} parent=23 // pred_check
        %p128 = pneg %p29
      $region26: #{convnext_encoder.9} parent=23 // pred_check_branch
        %130 = sbr.rel (%p128) target = $region28
      $region27: #{convnext_encoder.9} parent=23 // pred_region
        %p131 = scmp.lt.s32.totalorder %s9, 1
        %s132 = scalar_select %p131, %s9, 1
        %s133 = smul.addr %s132, 8
        %s134 = smul.addr %s133, 8
        %s135 = scalar_lea.vmem %s0, %s134
      $region28: #{convnext_encoder.9} parent=23 // pred_fallthru
        _
    $region24: #{convnext_encoder.9} parent=5 // pred_fallthru
      _
    %p136 = scmp.le.s32.totalorder 1, %s9
    %p137 = scmp.lt.s32.totalorder %s9, 3
    %p138 = pnand %p136, %p137
    %p139 = pneg %p138
    // Predicated region
    $region29: #{convnext_encoder.9} parent=5 // pred_check
      _
    $region30: #{convnext_encoder.9} parent=5 // pred_check_branch
      %141 = sbr.rel (%p138) target = $region32
    $region31: #{convnext_encoder.9} parent=5 // pred_region
      %s142 = ssub.s32 %s9, 1
      %p143 = scmp.lt.s32.totalorder %s14, 1
      %s144 = scalar_select %p143, %s14, 1
      %s145 = smul.addr %s144, 8
      %s146 = smul.addr %s145, 8
      %s147 = scalar_lea.vmem %s0, %s146
      %p148 = pneg %p35
      %p149 = pneg %p32
      %p150 = pneg %p56
      %p151 = pneg %p53
      %p152 = pneg %p77
      %p153 = pneg %p74
      %p154 = pneg %p103
      %p155 = pneg %p100
      %p156 = scmp.lt.s32.totalorder %s14, 1
      %s157 = scalar_select %p156, %s14, 1
      %s158 = smul.addr %s157, 8
      %s159 = smul.addr %s158, 8
      %s160 = scalar_lea.vmem %s3, %s159
      %p161 = scmp.lt.s32.totalorder %s14, 1
      %s162 = scalar_select %p161, %s14, 1
      %s163 = smul.addr %s162, 8
      %s164 = smul.addr %s163, 8
      %s165 = scalar_lea.vmem %s0, %s164
      %p166 = scmp.lt.s32.totalorder %s14, 1
      %s167 = scalar_select %p166, %s14, 1
      %s168 = smul.addr %s167, 8
      %s169 = smul.addr %s168, 8
      %s170 = scalar_lea.vmem %s3, %s169
      %v171 = vld [vmem:[%s165] sm:$0xff]
      %v172 = vld [vmem:[%s165 + $0x8] sm:$0xff]
      %v173 = vld [vmem:[%s165 + $0x10] sm:$0xff]
      %v174 = vld [vmem:[%s165 + $0x18] sm:$0xff]
      %v175 = vld [vmem:[%s165 + $0x20] sm:$0xff]
      %v176 = vld [vmem:[%s165 + $0x28] sm:$0xff]
      %v177 = vld [vmem:[%s165 + $0x30] sm:$0xff]
      %v178 = vld [vmem:[%s165 + $0x38] sm:$0xff]
      %v179 = vld [vmem:[%s1] sm:$0xff]
      %v180 = vld [vmem:[%s1 + $0x8] sm:$0xff]
      %v181 = vld [vmem:[%s2] sm:$0xff]
      %v182 = vld [vmem:[%s2 + $0x8] sm:$0xff]
      %v183 = vadd.f32 %v171, %v172
      %v184 = vadd.f32 %v183, %v173
      %v185 = vadd.f32 %v184, %v174
      %v186 = vadd.f32 %v185, %v175
      %v187 = vadd.f32 %v186, %v176
      %v188 = vadd.f32 %v187, %v177
      %v189 = vadd.f32 %v188, %v178
      %190 = vadd.xlane.f32.xlu0 %v189
      %v191 = vpop.xlane.xlu0 %190
      %v192 = vrot.slane %v191, 4
      %v193 = vadd.f32 %v191, %v192
      %v194 = vrot.slane %v193, 2
      %v195 = vadd.f32 %v193, %v194
      %v196 = vrot.slane %v195, 1
      %v197 = vadd.f32 %v195, %v196
      %s198 = vtos %v197
      %v199 = vstv %s198
      %v200 = vrcp.pop 8192.0
      %v201 = vmul.f32 %v199, %v200
      %v202 = vsub.f32 %v171, %v201
      %v203 = vsub.f32 %v172, %v201
      %v204 = vsub.f32 %v173, %v201
      %v205 = vsub.f32 %v174, %v201
      %v206 = vsub.f32 %v175, %v201
      %v207 = vsub.f32 %v176, %v201
      %v208 = vsub.f32 %v177, %v201
      %v209 = vsub.f32 %v178, %v201
      %v210 = vmul.f32 %v202, %v202
      %v211 = vmul.f32 %v203, %v203
      %v212 = vmul.f32 %v204, %v204
      %v213 = vmul.f32 %v205, %v205
      %v214 = vmul.f32 %v206, %v206
      %v215 = vmul.f32 %v207, %v207
      %v216 = vmul.f32 %v208, %v208
      %v217 = vmul.f32 %v209, %v209
      %v218 = vadd.f32 %v210, %v211
      %v219 = vadd.f32 %v218, %v212
      %v220 = vadd.f32 %v219, %v213
      %v221 = vadd.f32 %v220, %v214
      %v222 = vadd.f32 %v221, %v215
      %v223 = vadd.f32 %v222, %v216
      %v224 = vadd.f32 %v223, %v217
      %225 = vadd.xlane.f32.xlu0 %v224
      %v226 = vpop.xlane.xlu0 %225
      %v227 = vrot.slane %v226, 4
      %v228 = vadd.f32 %v226, %v227
      %v229 = vrot.slane %v228, 2
      %v230 = vadd.f32 %v228, %v229
      %v231 = vrot.slane %v230, 1
      %v232 = vadd.f32 %v230, %v231
      %s233 = vtos %v232
      %v234 = vstv %s233
      %v235 = vmul.f32 %v234, %v200
      %v236 = vadd.f32 %v235, 1e-05
      %v237 = vrsqrt.pop %v236
      %v238 = vmul.f32 %v202, %v237
      %v239 = vmul.f32 %v203, %v237
      %v240 = vmul.f32 %v204, %v237
      %v241 = vmul.f32 %v205, %v237
      %v242 = vmul.f32 %v206, %v237
      %v243 = vmul.f32 %v207, %v237
      %v244 = vmul.f32 %v208, %v237
      %v245 = vmul.f32 %v209, %v237
      %247 = vset.pattern.permute.xlu0 0
      %248 = vperm.xlu0 %247, %v179
      %v249 = vpop.permute.xlu0 %248
      %252 = vset.pattern.permute.xlu0 0
      %253 = vperm.xlu0 %252, %v180
      %v254 = vpop.permute.xlu0 %253
      %v256 = vmul.f32 %v238, %v249
      %v257 = vmul.f32 %v239, %v249
      %v258 = vmul.f32 %v240, %v249
      %v259 = vmul.f32 %v241, %v249
      %v260 = vmul.f32 %v242, %v254
      %v261 = vmul.f32 %v243, %v254
      %v262 = vmul.f32 %v244, %v254
      %v263 = vmul.f32 %v245, %v254
      %265 = vset.pattern.permute.xlu0 0
      %266 = vperm.xlu0 %265, %v181
      %v267 = vpop.permute.xlu0 %266
      %270 = vset.pattern.permute.xlu0 0
      %271 = vperm.xlu0 %270, %v182
      %v272 = vpop.permute.xlu0 %271
      %v274 = vadd.f32 %v256, %v267
      %v275 = vadd.f32 %v257, %v267
      %v276 = vadd.f32 %v258, %v267
      %v277 = vadd.f32 %v259, %v267
      %v278 = vadd.f32 %v260, %v272
      %v279 = vadd.f32 %v261, %v272
      %v280 = vadd.f32 %v262, %v272
      %v281 = vadd.f32 %v263, %v272
      %282 = vst [vmem:[%s170] sm:$0xff] %v274
      %283 = vst [vmem:[%s170 + $0x8] sm:$0xff] %v275
      %284 = vst [vmem:[%s170 + $0x10] sm:$0xff] %v276
      %285 = vst [vmem:[%s170 + $0x18] sm:$0xff] %v277
      %286 = vst [vmem:[%s170 + $0x20] sm:$0xff] %v278
      %287 = vst [vmem:[%s170 + $0x28] sm:$0xff] %v279
      %288 = vst [vmem:[%s170 + $0x30] sm:$0xff] %v280
      %289 = vst [vmem:[%s170 + $0x38] sm:$0xff] %v281
      %p290 = scmp.lt.s32.totalorder %s14, 1
      %s291 = scalar_select %p290, %s14, 1
      %s292 = smul.addr %s291, 8
      %s293 = smul.addr %s292, 8
      %s294 = scalar_lea.vmem %s3, %s293
      // Predicated region
      $region33: #{convnext_encoder.9} parent=31 // pred_check
        %p295 = pneg %p100
      $region34: #{convnext_encoder.9} parent=31 // pred_check_branch
        %297 = sbr.rel (%p295) target = $region36
      $region35: #{convnext_encoder.9} parent=31 // pred_region
        _
      $region36: #{convnext_encoder.9} parent=31 // pred_fallthru
        _
    $region32: #{convnext_encoder.9} parent=5 // pred_fallthru
      _
    %p298 = scmp.le.s32.totalorder 2, %s9
    // Predicated region
    $region37: #{convnext_encoder.9} parent=5 // pred_check
      %p299 = pneg %p298
    $region38: #{convnext_encoder.9} parent=5 // pred_check_branch
      %301 = sbr.rel (%p299) target = $region40
    $region39: #{convnext_encoder.9} parent=5 // pred_region
      %s302 = ssub.s32 %s9, 2
      // Predicated region
      $region41: #{convnext_encoder.9} parent=39 // pred_check
        %p303 = pneg %p106
      $region42: #{convnext_encoder.9} parent=39 // pred_check_branch
        %305 = sbr.rel (%p303) target = $region44
      $region43: #{convnext_encoder.9} parent=39 // pred_region
        %p306 = scmp.lt.s32.totalorder %s15, 1
        %s307 = scalar_select %p306, %s15, 1
        %s308 = smul.addr %s307, 8
        %s309 = smul.addr %s308, 8
        %s310 = scalar_lea.vmem %s3, %s309
      $region44: #{convnext_encoder.9} parent=39 // pred_fallthru
        _
    $region40: #{convnext_encoder.9} parent=5 // pred_fallthru
      _
  $region6: #{convnext_encoder.9} parent=0 // loop_footer
    %s13 = sadd.s32 1, %s9
  $region7: #{convnext_encoder.9} parent=0 // loop_footer_branch
    %8 = sbr.rel target = $region3
  $region8: #{convnext_encoder.9} parent=0 // loop_exit
    _

// kernel: convnext_encoder.8
$region0: #{convnext_encoder.8}
  #allocation0 [shape = 'u32[]', space=smem, size = 0x4, offset = 0x4, fixed_abs, tag = 'smem constant byte address 0x4 - core index']
  #allocation1 [shape = 'u32[144,128]{1,0:T(1,128)}', space=vmem, size = 0x12000, scoped, tag = 'internal scratch']
  %s0 = inlined_call_operand.vmem [shape: f32[2,16,512], index: 0, kind: input, shape index: {}]
  %s1 = inlined_call_operand.vmem [shape: f32[16,16], index: 1, kind: input, shape index: {}]
  %s2 = inlined_call_operand.vmem [shape: f32[16,1], index: 2, kind: input, shape index: {}]
  %s3 = inlined_call_operand.vmem [shape: f32[2,16,512], index: 3, kind: output, shape index: {}]
  %s4 = sld [smem:[#allocation0]]
  $region45: #{convnext_encoder.8} parent=0
    _
  %s6 = ssub.s32 1, %s4
  %s7 = scalar_select 0, %s6, %s4
  loop: start=0, step=1, limit=4
  $region2: #{convnext_encoder.8} parent=0 // loop_pre_header
    _
  $region3: #{convnext_encoder.8} parent=0 // loop_header
    %s9 = sphi 0, %s13
    %p10 = scmp.ge.s32.totalorder %s9, 4
    %s19 = sphi 0, %s21
    %s22 = sphi 0, %s19
    %s23 = sphi 0, %s22
    %s39 = sphi 0, %s23
    %s43 = sphi 0, %s43
    %s45 = sphi 0, %s43
    %s46 = sphi 0, %s45
    %s60 = sphi 0, %s46
    %s64 = sphi 0, %s64
    %s66 = sphi 0, %s64
    %s67 = sphi 0, %s66
    %s81 = sphi 0, %s67
    %s87 = sphi 0, %s89
    %s90 = sphi 0, %s87
    %s91 = sphi 0, %s90
    %s107 = sphi 0, %s91
  $region4: #{convnext_encoder.8} parent=0 // loop_header_branch
    %12 = sbr.rel (%p10) target = $region8
  $region5: #{convnext_encoder.8} parent=0 // loop_body
    %s14 = ssub.s32 %s9, 1
    %s15 = ssub.s32 %s9, 2
    %s16 = sadd.s32 %s9, 1
    %s17 = ssub.s32 %s9, %s16
    %p18 = scmp.eq.s32.totalorder %s17, 0
    %s20 = sadd.s32 %s19, 1
    %s21 = scalar_select %p18, %s19, %s20
    %p24 = pneg %p18
    %p25 = scmp.eq.s32.totalorder %s9, 1
    %p26 = por %p24, %p25
    %p27 = scmp.ne.s32.totalorder %s19, %s22
    %p28 = scmp.eq.s32.totalorder %s9, 0
    %p29 = por %p27, %p28
    %p30 = scmp.ne.s32.totalorder %s19, %s22
    %p31 = scmp.eq.s32.totalorder %s14, 1
    %p32 = por %p30, %p31
    %p33 = scmp.ne.s32.totalorder %s22, %s23
    %p34 = scmp.eq.s32.totalorder %s14, 0
    %p35 = por %p33, %p34
    %p36 = scmp.ne.s32.totalorder %s22, %s23
    %p37 = scmp.eq.s32.totalorder %s15, 1
    %p38 = por %p36, %p37
    %p40 = scmp.ne.s32.totalorder %s23, %s39
    %p41 = scmp.eq.s32.totalorder %s15, 0
    %p42 = por %p40, %p41
    %s44 = sadd.s32 %s43, 1
    %p47 = scmp.eq.s32.totalorder %s9, 1
    %p48 = scmp.ne.s32.totalorder %s43, %s45
    %p49 = scmp.eq.s32.totalorder %s9, 0
    %p50 = por %p48, %p49
    %p51 = scmp.ne.s32.totalorder %s43, %s45
    %p52 = scmp.eq.s32.totalorder %s14, 1
    %p53 = por %p51, %p52
    %p54 = scmp.ne.s32.totalorder %s45, %s46
    %p55 = scmp.eq.s32.totalorder %s14, 0
    %p56 = por %p54, %p55
    %p57 = scmp.ne.s32.totalorder %s45, %s46
    %p58 = scmp.eq.s32.totalorder %s15, 1
    %p59 = por %p57, %p58
    %p61 = scmp.ne.s32.totalorder %s46, %s60
    %p62 = scmp.eq.s32.totalorder %s15, 0
    %p63 = por %p61, %p62
    %s65 = sadd.s32 %s64, 1
    %p68 = scmp.eq.s32.totalorder %s9, 1
    %p69 = scmp.ne.s32.totalorder %s64, %s66
    %p70 = scmp.eq.s32.totalorder %s9, 0
    %p71 = por %p69, %p70
    %p72 = scmp.ne.s32.totalorder %s64, %s66
    %p73 = scmp.eq.s32.totalorder %s14, 1
    %p74 = por %p72, %p73
    %p75 = scmp.ne.s32.totalorder %s66, %s67
    %p76 = scmp.eq.s32.totalorder %s14, 0
    %p77 = por %p75, %p76
    %p78 = scmp.ne.s32.totalorder %s66, %s67
    %p79 = scmp.eq.s32.totalorder %s15, 1
    %p80 = por %p78, %p79
    %p82 = scmp.ne.s32.totalorder %s67, %s81
    %p83 = scmp.eq.s32.totalorder %s15, 0
    %p84 = por %p82, %p83
    %s85 = ssub.s32 %s9, %s16
    %p86 = scmp.eq.s32.totalorder %s85, 0
    %s88 = sadd.s32 %s87, 1
    %s89 = scalar_select %p86, %s87, %s88
    %p92 = pneg %p86
    %p93 = scmp.eq.s32.totalorder %s9, 1
    %p94 = por %p92, %p93
    %p95 = scmp.ne.s32.totalorder %s87, %s90
    %p96 = scmp.eq.s32.totalorder %s9, 0
    %p97 = por %p95, %p96
    %p98 = scmp.ne.s32.totalorder %s87, %s90
    %p99 = scmp.eq.s32.totalorder %s14, 1
    %p100 = por %p98, %p99
    %p101 = scmp.ne.s32.totalorder %s90, %s91
    %p102 = scmp.eq.s32.totalorder %s14, 0
    %p103 = por %p101, %p102
    %p104 = scmp.ne.s32.totalorder %s90, %s91
    %p105 = scmp.eq.s32.totalorder %s15, 1
    %p106 = por %p104, %p105
    %p108 = scmp.ne.s32.totalorder %s91, %s107
    %p109 = scmp.eq.s32.totalorder %s15, 0
    %p110 = por %p108, %p109
    %p111 = scmp.le.s32.totalorder 1, %s9
    %p112 = scmp.lt.s32.totalorder %s9, 3
    %p113 = pnand %p111, %p112
    %p114 = pneg %p113
    // Predicated region
    $region9: #{convnext_encoder.8} parent=5 // pred_check
      _
    $region10: #{convnext_encoder.8} parent=5 // pred_check_branch
      %116 = sbr.rel (%p113) target = $region12
    $region11: #{convnext_encoder.8} parent=5 // pred_region
      %s117 = ssub.s32 %s9, 1
      // Predicated region
      $region13: #{convnext_encoder.8} parent=11 // pred_check
        %p118 = pneg %p56
      $region14: #{convnext_encoder.8} parent=11 // pred_check_branch
        %120 = sbr.rel (%p118) target = $region16
      $region15: #{convnext_encoder.8} parent=11 // pred_region
        _
      $region16: #{convnext_encoder.8} parent=11 // pred_fallthru
        _
      // Predicated region
      $region17: #{convnext_encoder.8} parent=11 // pred_check
        %p121 = pneg %p77
      $region18: #{convnext_encoder.8} parent=11 // pred_check_branch
        %123 = sbr.rel (%p121) target = $region20
      $region19: #{convnext_encoder.8} parent=11 // pred_region
        _
      $region20: #{convnext_encoder.8} parent=11 // pred_fallthru
        _
    $region12: #{convnext_encoder.8} parent=5 // pred_fallthru
      _
    %p124 = scmp.lt.s32.totalorder %s9, 2
    // Predicated region
    $region21: #{convnext_encoder.8} parent=5 // pred_check
      %p125 = pneg %p124
    $region22: #{convnext_encoder.8} parent=5 // pred_check_branch
      %127 = sbr.rel (%p125) target = $region24
    $region23: #{convnext_encoder.8} parent=5 // pred_region
      // Predicated region
      $region25: #{convnext_encoder.8} parent=23 // pred_check
        %p128 = pneg %p29
      $region26: #{convnext_encoder.8} parent=23 // pred_check_branch
        %130 = sbr.rel (%p128) target = $region28
      $region27: #{convnext_encoder.8} parent=23 // pred_region
        %p131 = scmp.lt.s32.totalorder %s9, 1
        %s132 = scalar_select %p131, %s9, 1
        %s133 = smul.addr %s132, 8
        %s134 = smul.addr %s133, 8
        %s135 = scalar_lea.vmem %s0, %s134
      $region28: #{convnext_encoder.8} parent=23 // pred_fallthru
        _
    $region24: #{convnext_encoder.8} parent=5 // pred_fallthru
      _
    %p136 = scmp.le.s32.totalorder 1, %s9
    %p137 = scmp.lt.s32.totalorder %s9, 3
    %p138 = pnand %p136, %p137
    %p139 = pneg %p138
    // Predicated region
    $region29: #{convnext_encoder.8} parent=5 // pred_check
      _
    $region30: #{convnext_encoder.8} parent=5 // pred_check_branch
      %141 = sbr.rel (%p138) target = $region32
    $region31: #{convnext_encoder.8} parent=5 // pred_region
      %s142 = ssub.s32 %s9, 1
      %p143 = scmp.lt.s32.totalorder %s14, 1
      %s144 = scalar_select %p143, %s14, 1
      %s145 = smul.addr %s144, 8
      %s146 = smul.addr %s145, 8
      %s147 = scalar_lea.vmem %s0, %s146
      %p148 = pneg %p35
      %p149 = pneg %p32
      %p150 = pneg %p56
      %p151 = pneg %p53
      %p152 = pneg %p77
      %p153 = pneg %p74
      %p154 = pneg %p103
      %p155 = pneg %p100
      %p156 = scmp.lt.s32.totalorder %s14, 1
      %s157 = scalar_select %p156, %s14, 1
      %s158 = smul.addr %s157, 8
      %s159 = smul.addr %s158, 8
      %s160 = scalar_lea.vmem %s3, %s159
      %p161 = scmp.lt.s32.totalorder %s14, 1
      %s162 = scalar_select %p161, %s14, 1
      %s163 = smul.addr %s162, 8
      %s164 = smul.addr %s163, 8
      %s165 = scalar_lea.vmem %s0, %s164
      %p166 = scmp.lt.s32.totalorder %s14, 1
      %s167 = scalar_select %p166, %s14, 1
      %s168 = smul.addr %s167, 8
      %s169 = smul.addr %s168, 8
      %s170 = scalar_lea.vmem %s3, %s169
      %v171 = vld [vmem:[%s1] sm:$0xff]
      %v172 = vld [vmem:[%s1 + $0x8] sm:$0xff]
      %v173 = vld [vmem:[%s165] sm:$0xff]
      %v174 = vld [vmem:[%s165 + $0x8] sm:$0xff]
      %v175 = vld [vmem:[%s165 + $0x10] sm:$0xff]
      %v176 = vld [vmem:[%s165 + $0x18] sm:$0xff]
      %v177 = vld [vmem:[%s165 + $0x20] sm:$0xff]
      %v178 = vld [vmem:[%s165 + $0x28] sm:$0xff]
      %v179 = vld [vmem:[%s165 + $0x30] sm:$0xff]
      %v180 = vld [vmem:[%s165 + $0x38] sm:$0xff]
      %v181 = vld [vmem:[%s2] sm:$0xff]
      %v182 = vld [vmem:[%s2 + $0x8] sm:$0xff]
      %184 = vset.pattern.permute.xlu0 0
      %185 = vperm.xlu0 %184, %v181
      %v186 = vpop.permute.xlu0 %185
      %189 = vset.pattern.permute.xlu0 0
      %190 = vperm.xlu0 %189, %v182
      %v191 = vpop.permute.xlu0 %190
      %vm193 = vcmask 130048
      %v195 = vsel %vm193, %v171, 0
      %v198 = vsel %vm193, %v172, 0
      %200 = vmatprep.subr.mxu0 %v174
      %201 = vmatpush1.msra.mxu0 %v173
      %202 = vmatprep.subr.mxu0 %v178
      %203 = vmatpush1.msra.mxu0 %v177
      %204 = vmatprep.subr.mxu0 0.0
      %205 = vmatpush1.msra.mxu0 0.0
      %206 = vmatprep.subr.mxu0 0.0
      %207 = vmatpush1.msra.mxu0 0.0
      %208 = vmatprep.subr.mxu0 0.0
      %209 = vmatpush1.msra.mxu0 0.0
      %210 = vmatprep.subr.mxu0 0.0
      %211 = vmatpush1.msra.mxu0 0.0
      %212 = vmatprep.subr.mxu0 0.0
      %213 = vmatpush1.msra.mxu0 0.0
      %214 = vmatprep.subr.mxu0 0.0
      %215 = vmatpush1.msra.mxu0 0.0
      %216 = vmatprep.subr.mxu0 0.0
      %217 = vmatpush1.msra.mxu0 0.0
      %218 = vmatprep.subr.mxu0 0.0
      %219 = vmatpush1.msra.mxu0 0.0
      %220 = vmatprep.subr.mxu0 0.0
      %221 = vmatpush1.msra.mxu0 0.0
      %222 = vmatprep.subr.mxu0 0.0
      %223 = vmatpush1.msra.mxu0 0.0
      %224 = vmatprep.subr.mxu0 0.0
      %225 = vmatpush1.msra.mxu0 0.0
      %226 = vmatprep.subr.mxu0 0.0
      %227 = vmatpush1.msra.mxu0 0.0
      %228 = vmatprep.subr.mxu0 0.0
      %229 = vmatpush1.msra.mxu0 0.0
      %230 = vmatprep.subr.mxu0 0.0
      %231 = vmatpush1.msra.mxu0 0.0
      %232 = vmatprep.subr.mxu0 0.0
      %233 = vmatpush1.msra.mxu0 0.0
      %234 = vmatprep.subr.mxu0 0.0
      %235 = vmatpush1.msra.mxu0 0.0
      %236 = vmatprep.subr.mxu0 0.0
      %237 = vmatpush1.msra.mxu0 0.0
      %238 = vmatprep.subr.mxu0 0.0
      %239 = vmatpush1.msra.mxu0 0.0
      %240 = vmatprep.subr.mxu0 0.0
      %241 = vmatpush1.msra.mxu0 0.0
      %242 = vmatprep.subr.mxu0 0.0
      %243 = vmatpush1.msra.mxu0 0.0
      %244 = vmatprep.subr.mxu0 0.0
      %245 = vmatpush1.msra.mxu0 0.0
      %246 = vmatprep.subr.mxu0 0.0
      %247 = vmatpush1.msra.mxu0 0.0
      %248 = vmatprep.subr.mxu0 0.0
      %249 = vmatpush1.msra.mxu0 0.0
      %250 = vmatprep.subr.mxu0 0.0
      %251 = vmatpush1.msra.mxu0 0.0
      %252 = vmatprep.subr.mxu0 0.0
      %253 = vmatpush1.msra.mxu0 0.0
      %254 = vmatprep.subr.mxu0 0.0
      %255 = vmatpush1.msra.mxu0 0.0
      %256 = vmatprep.subr.mxu0 0.0
      %257 = vmatpush1.msra.mxu0 0.0
      %258 = vmatprep.subr.mxu0 0.0
      %259 = vmatpush1.msra.mxu0 0.0
      %260 = vmatprep.subr.mxu0 0.0
      %261 = vmatpush1.msra.mxu0 0.0
      %262 = vmatprep.subr.mxu0 0.0
      %263 = vmatpush1.msra.mxu0 0.0
      %264 = vmatprep.mubr.f32.mxu0 0.0
      %265 = vmatmul.mubr.f32.gmra.mrb[0].mxu0 %v195
      %v266 = vpop.f32.mrb[0].mxu0
      %v267 = vadd.f32 %v186, %v266
      %v268 = vpop.f32.mrb[0].mxu0
      %v269 = vadd.f32 %v186, %v268
      %270 = vmatprep.mubr.f32.mxu0 0.0
      %271 = vmatmul.mubr.f32.gmra.mrb[0].mxu0 %v198
      %v272 = vpop.f32.mrb[0].mxu0
      %v273 = vadd.f32 %v191, %v272
      %v274 = vpop.f32.mrb[0].mxu0
      %v275 = vadd.f32 %v191, %v274
      %276 = vdwg.mxu0
      %277 = vmatprep.subr.mxu0 %v176
      %278 = vmatpush1.msra.mxu0 %v175
      %279 = vmatprep.subr.mxu0 %v180
      %280 = vmatpush1.msra.mxu0 %v179
      %281 = vmatprep.subr.mxu0 0.0
      %282 = vmatpush1.msra.mxu0 0.0
      %283 = vmatprep.subr.mxu0 0.0
      %284 = vmatpush1.msra.mxu0 0.0
      %285 = vmatprep.subr.mxu0 0.0
      %286 = vmatpush1.msra.mxu0 0.0
      %287 = vmatprep.subr.mxu0 0.0
      %288 = vmatpush1.msra.mxu0 0.0
      %289 = vmatprep.subr.mxu0 0.0
      %290 = vmatpush1.msra.mxu0 0.0
      %291 = vmatprep.subr.mxu0 0.0
      %292 = vmatpush1.msra.mxu0 0.0
      %293 = vmatprep.subr.mxu0 0.0
      %294 = vmatpush1.msra.mxu0 0.0
      %295 = vmatprep.subr.mxu0 0.0
      %296 = vmatpush1.msra.mxu0 0.0
      %297 = vmatprep.subr.mxu0 0.0
      %298 = vmatpush1.msra.mxu0 0.0
      %299 = vmatprep.subr.mxu0 0.0
      %300 = vmatpush1.msra.mxu0 0.0
      %301 = vmatprep.subr.mxu0 0.0
      %302 = vmatpush1.msra.mxu0 0.0
      %303 = vmatprep.subr.mxu0 0.0
      %304 = vmatpush1.msra.mxu0 0.0
      %305 = vmatprep.subr.mxu0 0.0
      %306 = vmatpush1.msra.mxu0 0.0
      %307 = vmatprep.subr.mxu0 0.0
      %308 = vmatpush1.msra.mxu0 0.0
      %309 = vmatprep.subr.mxu0 0.0
      %310 = vmatpush1.msra.mxu0 0.0
      %311 = vmatprep.subr.mxu0 0.0
      %312 = vmatpush1.msra.mxu0 0.0
      %313 = vmatprep.subr.mxu0 0.0
      %314 = vmatpush1.msra.mxu0 0.0
      %315 = vmatprep.subr.mxu0 0.0
      %316 = vmatpush1.msra.mxu0 0.0
      %317 = vmatprep.subr.mxu0 0.0
      %318 = vmatpush1.msra.mxu0 0.0
      %319 = vmatprep.subr.mxu0 0.0
      %320 = vmatpush1.msra.mxu0 0.0
      %321 = vmatprep.subr.mxu0 0.0
      %322 = vmatpush1.msra.mxu0 0.0
      %323 = vmatprep.subr.mxu0 0.0
      %324 = vmatpush1.msra.mxu0 0.0
      %325 = vmatprep.subr.mxu0 0.0
      %326 = vmatpush1.msra.mxu0 0.0
      %327 = vmatprep.subr.mxu0 0.0
      %328 = vmatpush1.msra.mxu0 0.0
      %329 = vmatprep.subr.mxu0 0.0
      %330 = vmatpush1.msra.mxu0 0.0
      %331 = vmatprep.subr.mxu0 0.0
      %332 = vmatpush1.msra.mxu0 0.0
      %333 = vmatprep.subr.mxu0 0.0
      %334 = vmatpush1.msra.mxu0 0.0
      %335 = vmatprep.subr.mxu0 0.0
      %336 = vmatpush1.msra.mxu0 0.0
      %337 = vmatprep.subr.mxu0 0.0
      %338 = vmatpush1.msra.mxu0 0.0
      %339 = vmatprep.subr.mxu0 0.0
      %340 = vmatpush1.msra.mxu0 0.0
      %341 = vmatprep.mubr.f32.mxu0 0.0
      %342 = vmatmul.mubr.f32.gmra.mrb[0].mxu0 %v195
      %v343 = vpop.f32.mrb[0].mxu0
      %v344 = vadd.f32 %v186, %v343
      %v345 = vpop.f32.mrb[0].mxu0
      %v346 = vadd.f32 %v186, %v345
      %347 = vmatprep.mubr.f32.mxu0 0.0
      %348 = vmatmul.mubr.f32.gmra.mrb[0].mxu0 %v198
      %v349 = vpop.f32.mrb[0].mxu0
      %v350 = vadd.f32 %v191, %v349
      %v351 = vpop.f32.mrb[0].mxu0
      %v352 = vadd.f32 %v191, %v351
      %353 = vdwg.mxu0
      %354 = vst [vmem:[%s170] sm:$0xff] %v267
      %355 = vst [vmem:[%s170 + $0x8] sm:$0xff] %v269
      %356 = vst [vmem:[%s170 + $0x10] sm:$0xff] %v344
      %357 = vst [vmem:[%s170 + $0x18] sm:$0xff] %v346
      %358 = vst [vmem:[%s170 + $0x20] sm:$0xff] %v273
      %359 = vst [vmem:[%s170 + $0x28] sm:$0xff] %v275
      %360 = vst [vmem:[%s170 + $0x30] sm:$0xff] %v350
      %361 = vst [vmem:[%s170 + $0x38] sm:$0xff] %v352
      %p362 = scmp.lt.s32.totalorder %s14, 1
      %s363 = scalar_select %p362, %s14, 1
      %s364 = smul.addr %s363, 8
      %s365 = smul.addr %s364, 8
      %s366 = scalar_lea.vmem %s3, %s365
      // Predicated region
      $region33: #{convnext_encoder.8} parent=31 // pred_check
        %p367 = pneg %p100
      $region34: #{convnext_encoder.8} parent=31 // pred_check_branch
        %369 = sbr.rel (%p367) target = $region36
      $region35: #{convnext_encoder.8} parent=31 // pred_region
        _
      $region36: #{convnext_encoder.8} parent=31 // pred_fallthru
        _
    $region32: #{convnext_encoder.8} parent=5 // pred_fallthru
      _
    %p370 = scmp.le.s32.totalorder 2, %s9
    // Predicated region
    $region37: #{convnext_encoder.8} parent=5 // pred_check
      %p371 = pneg %p370
    $region38: #{convnext_encoder.8} parent=5 // pred_check_branch
      %373 = sbr.rel (%p371) target = $region40
    $region39: #{convnext_encoder.8} parent=5 // pred_region
      %s374 = ssub.s32 %s9, 2
      // Predicated region
      $region41: #{convnext_encoder.8} parent=39 // pred_check
        %p375 = pneg %p106
      $region42: #{convnext_encoder.8} parent=39 // pred_check_branch
        %377 = sbr.rel (%p375) target = $region44
      $region43: #{convnext_encoder.8} parent=39 // pred_region
        %p378 = scmp.lt.s32.totalorder %s15, 1
        %s379 = scalar_select %p378, %s15, 1
        %s380 = smul.addr %s379, 8
        %s381 = smul.addr %s380, 8
        %s382 = scalar_lea.vmem %s3, %s381
      $region44: #{convnext_encoder.8} parent=39 // pred_fallthru
        _
    $region40: #{convnext_encoder.8} parent=5 // pred_fallthru
      _
  $region6: #{convnext_encoder.8} parent=0 // loop_footer
    %s13 = sadd.s32 1, %s9
  $region7: #{convnext_encoder.8} parent=0 // loop_footer_branch
    %8 = sbr.rel target = $region3
  $region8: #{convnext_encoder.8} parent=0 // loop_exit
    _

// kernel: convnext_encoder.11
$region0: #{convnext_encoder.11}
  #allocation0 [shape = 'u32[]', space=smem, size = 0x4, offset = 0x4, fixed_abs, tag = 'smem constant byte address 0x4 - core index']
  #allocation1 [shape = 'u32[144,128]{1,0:T(1,128)}', space=vmem, size = 0x12000, scoped, tag = 'internal scratch']
  %s0 = inlined_call_operand.vmem [shape: f32[2,32,256], index: 0, kind: input, shape index: {}]
  %s1 = inlined_call_operand.vmem [shape: f32[16,32], index: 1, kind: input, shape index: {}]
  %s2 = inlined_call_operand.vmem [shape: f32[16,1], index: 2, kind: input, shape index: {}]
  %s3 = inlined_call_operand.vmem [shape: f32[2,16,256], index: 3, kind: output, shape index: {}]
  %s4 = sld [smem:[#allocation0]]
  $region45: #{convnext_encoder.11} parent=0
    _
  %s6 = ssub.s32 1, %s4
  %s7 = scalar_select 0, %s6, %s4
  loop: start=0, step=1, limit=4
  $region2: #{convnext_encoder.11} parent=0 // loop_pre_header
    _
  $region3: #{convnext_encoder.11} parent=0 // loop_header
    %s9 = sphi 0, %s13
    %p10 = scmp.ge.s32.totalorder %s9, 4
    %s19 = sphi 0, %s21
    %s22 = sphi 0, %s19
    %s23 = sphi 0, %s22
    %s39 = sphi 0, %s23
    %s43 = sphi 0, %s43
    %s45 = sphi 0, %s43
    %s46 = sphi 0, %s45
    %s60 = sphi 0, %s46
    %s64 = sphi 0, %s64
    %s66 = sphi 0, %s64
    %s67 = sphi 0, %s66
    %s81 = sphi 0, %s67
    %s87 = sphi 0, %s89
    %s90 = sphi 0, %s87
    %s91 = sphi 0, %s90
    %s107 = sphi 0, %s91
  $region4: #{convnext_encoder.11} parent=0 // loop_header_branch
    %12 = sbr.rel (%p10) target = $region8
  $region5: #{convnext_encoder.11} parent=0 // loop_body
    %s14 = ssub.s32 %s9, 1
    %s15 = ssub.s32 %s9, 2
    %s16 = sadd.s32 %s9, 1
    %s17 = ssub.s32 %s9, %s16
    %p18 = scmp.eq.s32.totalorder %s17, 0
    %s20 = sadd.s32 %s19, 1
    %s21 = scalar_select %p18, %s19, %s20
    %p24 = pneg %p18
    %p25 = scmp.eq.s32.totalorder %s9, 1
    %p26 = por %p24, %p25
    %p27 = scmp.ne.s32.totalorder %s19, %s22
    %p28 = scmp.eq.s32.totalorder %s9, 0
    %p29 = por %p27, %p28
    %p30 = scmp.ne.s32.totalorder %s19, %s22
    %p31 = scmp.eq.s32.totalorder %s14, 1
    %p32 = por %p30, %p31
    %p33 = scmp.ne.s32.totalorder %s22, %s23
    %p34 = scmp.eq.s32.totalorder %s14, 0
    %p35 = por %p33, %p34
    %p36 = scmp.ne.s32.totalorder %s22, %s23
    %p37 = scmp.eq.s32.totalorder %s15, 1
    %p38 = por %p36, %p37
    %p40 = scmp.ne.s32.totalorder %s23, %s39
    %p41 = scmp.eq.s32.totalorder %s15, 0
    %p42 = por %p40, %p41
    %s44 = sadd.s32 %s43, 1
    %p47 = scmp.eq.s32.totalorder %s9, 1
    %p48 = scmp.ne.s32.totalorder %s43, %s45
    %p49 = scmp.eq.s32.totalorder %s9, 0
    %p50 = por %p48, %p49
    %p51 = scmp.ne.s32.totalorder %s43, %s45
    %p52 = scmp.eq.s32.totalorder %s14, 1
    %p53 = por %p51, %p52
    %p54 = scmp.ne.s32.totalorder %s45, %s46
    %p55 = scmp.eq.s32.totalorder %s14, 0
    %p56 = por %p54, %p55
    %p57 = scmp.ne.s32.totalorder %s45, %s46
    %p58 = scmp.eq.s32.totalorder %s15, 1
    %p59 = por %p57, %p58
    %p61 = scmp.ne.s32.totalorder %s46, %s60
    %p62 = scmp.eq.s32.totalorder %s15, 0
    %p63 = por %p61, %p62
    %s65 = sadd.s32 %s64, 1
    %p68 = scmp.eq.s32.totalorder %s9, 1
    %p69 = scmp.ne.s32.totalorder %s64, %s66
    %p70 = scmp.eq.s32.totalorder %s9, 0
    %p71 = por %p69, %p70
    %p72 = scmp.ne.s32.totalorder %s64, %s66
    %p73 = scmp.eq.s32.totalorder %s14, 1
    %p74 = por %p72, %p73
    %p75 = scmp.ne.s32.totalorder %s66, %s67
    %p76 = scmp.eq.s32.totalorder %s14, 0
    %p77 = por %p75, %p76
    %p78 = scmp.ne.s32.totalorder %s66, %s67
    %p79 = scmp.eq.s32.totalorder %s15, 1
    %p80 = por %p78, %p79
    %p82 = scmp.ne.s32.totalorder %s67, %s81
    %p83 = scmp.eq.s32.totalorder %s15, 0
    %p84 = por %p82, %p83
    %s85 = ssub.s32 %s9, %s16
    %p86 = scmp.eq.s32.totalorder %s85, 0
    %s88 = sadd.s32 %s87, 1
    %s89 = scalar_select %p86, %s87, %s88
    %p92 = pneg %p86
    %p93 = scmp.eq.s32.totalorder %s9, 1
    %p94 = por %p92, %p93
    %p95 = scmp.ne.s32.totalorder %s87, %s90
    %p96 = scmp.eq.s32.totalorder %s9, 0
    %p97 = por %p95, %p96
    %p98 = scmp.ne.s32.totalorder %s87, %s90
    %p99 = scmp.eq.s32.totalorder %s14, 1
    %p100 = por %p98, %p99
    %p101 = scmp.ne.s32.totalorder %s90, %s91
    %p102 = scmp.eq.s32.totalorder %s14, 0
    %p103 = por %p101, %p102
    %p104 = scmp.ne.s32.totalorder %s90, %s91
    %p105 = scmp.eq.s32.totalorder %s15, 1
    %p106 = por %p104, %p105
    %p108 = scmp.ne.s32.totalorder %s91, %s107
    %p109 = scmp.eq.s32.totalorder %s15, 0
    %p110 = por %p108, %p109
    %p111 = scmp.le.s32.totalorder 1, %s9
    %p112 = scmp.lt.s32.totalorder %s9, 3
    %p113 = pnand %p111, %p112
    %p114 = pneg %p113
    // Predicated region
    $region9: #{convnext_encoder.11} parent=5 // pred_check
      _
    $region10: #{convnext_encoder.11} parent=5 // pred_check_branch
      %116 = sbr.rel (%p113) target = $region12
    $region11: #{convnext_encoder.11} parent=5 // pred_region
      %s117 = ssub.s32 %s9, 1
      // Predicated region
      $region13: #{convnext_encoder.11} parent=11 // pred_check
        %p118 = pneg %p56
      $region14: #{convnext_encoder.11} parent=11 // pred_check_branch
        %120 = sbr.rel (%p118) target = $region16
      $region15: #{convnext_encoder.11} parent=11 // pred_region
        _
      $region16: #{convnext_encoder.11} parent=11 // pred_fallthru
        _
      // Predicated region
      $region17: #{convnext_encoder.11} parent=11 // pred_check
        %p121 = pneg %p77
      $region18: #{convnext_encoder.11} parent=11 // pred_check_branch
        %123 = sbr.rel (%p121) target = $region20
      $region19: #{convnext_encoder.11} parent=11 // pred_region
        _
      $region20: #{convnext_encoder.11} parent=11 // pred_fallthru
        _
    $region12: #{convnext_encoder.11} parent=5 // pred_fallthru
      _
    %p124 = scmp.lt.s32.totalorder %s9, 2
    // Predicated region
    $region21: #{convnext_encoder.11} parent=5 // pred_check
      %p125 = pneg %p124
    $region22: #{convnext_encoder.11} parent=5 // pred_check_branch
      %127 = sbr.rel (%p125) target = $region24
    $region23: #{convnext_encoder.11} parent=5 // pred_region
      // Predicated region
      $region25: #{convnext_encoder.11} parent=23 // pred_check
        %p128 = pneg %p29
      $region26: #{convnext_encoder.11} parent=23 // pred_check_branch
        %130 = sbr.rel (%p128) target = $region28
      $region27: #{convnext_encoder.11} parent=23 // pred_region
        %p131 = scmp.lt.s32.totalorder %s9, 1
        %s132 = scalar_select %p131, %s9, 1
        %s133 = smul.addr %s132, 8
        %s134 = smul.addr %s133, 8
        %s135 = scalar_lea.vmem %s0, %s134
      $region28: #{convnext_encoder.11} parent=23 // pred_fallthru
        _
    $region24: #{convnext_encoder.11} parent=5 // pred_fallthru
      _
    %p136 = scmp.le.s32.totalorder 1, %s9
    %p137 = scmp.lt.s32.totalorder %s9, 3
    %p138 = pnand %p136, %p137
    %p139 = pneg %p138
    // Predicated region
    $region29: #{convnext_encoder.11} parent=5 // pred_check
      _
    $region30: #{convnext_encoder.11} parent=5 // pred_check_branch
      %141 = sbr.rel (%p138) target = $region32
    $region31: #{convnext_encoder.11} parent=5 // pred_region
      %s142 = ssub.s32 %s9, 1
      %p143 = scmp.lt.s32.totalorder %s14, 1
      %s144 = scalar_select %p143, %s14, 1
      %s145 = smul.addr %s144, 8
      %s146 = smul.addr %s145, 8
      %s147 = scalar_lea.vmem %s0, %s146
      %p148 = pneg %p35
      %p149 = pneg %p32
      %p150 = pneg %p56
      %p151 = pneg %p53
      %p152 = pneg %p77
      %p153 = pneg %p74
      %p154 = pneg %p103
      %p155 = pneg %p100
      %p156 = scmp.lt.s32.totalorder %s14, 1
      %s157 = scalar_select %p156, %s14, 1
      %s158 = smul.addr %s157, 4
      %s159 = smul.addr %s158, 8
      %s160 = scalar_lea.vmem %s3, %s159
      %p161 = scmp.lt.s32.totalorder %s14, 1
      %s162 = scalar_select %p161, %s14, 1
      %s163 = smul.addr %s162, 8
      %s164 = smul.addr %s163, 8
      %s165 = scalar_lea.vmem %s0, %s164
      %p166 = scmp.lt.s32.totalorder %s14, 1
      %s167 = scalar_select %p166, %s14, 1
      %s168 = smul.addr %s167, 4
      %s169 = smul.addr %s168, 8
      %s170 = scalar_lea.vmem %s3, %s169
      %v171 = vld [vmem:[%s1] sm:$0xff]
      %v172 = vld [vmem:[%s1 + $0x8] sm:$0xff]
      %v173 = vld [vmem:[%s165] sm:$0xff]
      %v174 = vld [vmem:[%s165 + $0x8] sm:$0xff]
      %v175 = vld [vmem:[%s165 + $0x10] sm:$0xff]
      %v176 = vld [vmem:[%s165 + $0x18] sm:$0xff]
      %v177 = vld [vmem:[%s165 + $0x20] sm:$0xff]
      %v178 = vld [vmem:[%s165 + $0x28] sm:$0xff]
      %v179 = vld [vmem:[%s165 + $0x30] sm:$0xff]
      %v180 = vld [vmem:[%s165 + $0x38] sm:$0xff]
      %v181 = vld [vmem:[%s2] sm:$0xff]
      %v182 = vld [vmem:[%s2 + $0x8] sm:$0xff]
      %184 = vset.pattern.permute.xlu0 0
      %185 = vperm.xlu0 %184, %v181
      %v186 = vpop.permute.xlu0 %185
      %189 = vset.pattern.permute.xlu0 0
      %190 = vperm.xlu0 %189, %v182
      %v191 = vpop.permute.xlu0 %190
      %vm193 = vcmask 261120
      %v195 = vsel %vm193, %v171, 0
      %v198 = vsel %vm193, %v172, 0
      %200 = vmatprep.subr.mxu0 %v174
      %201 = vmatpush1.msra.mxu0 %v173
      %202 = vmatprep.subr.mxu0 %v176
      %203 = vmatpush1.msra.mxu0 %v175
      %204 = vmatprep.subr.mxu0 %v178
      %205 = vmatpush1.msra.mxu0 %v177
      %206 = vmatprep.subr.mxu0 %v180
      %207 = vmatpush1.msra.mxu0 %v179
      %208 = vmatprep.subr.mxu0 0.0
      %209 = vmatpush1.msra.mxu0 0.0
      %210 = vmatprep.subr.mxu0 0.0
      %211 = vmatpush1.msra.mxu0 0.0
      %212 = vmatprep.subr.mxu0 0.0
      %213 = vmatpush1.msra.mxu0 0.0
      %214 = vmatprep.subr.mxu0 0.0
      %215 = vmatpush1.msra.mxu0 0.0
      %216 = vmatprep.subr.mxu0 0.0
      %217 = vmatpush1.msra.mxu0 0.0
      %218 = vmatprep.subr.mxu0 0.0
      %219 = vmatpush1.msra.mxu0 0.0
      %220 = vmatprep.subr.mxu0 0.0
      %221 = vmatpush1.msra.mxu0 0.0
      %222 = vmatprep.subr.mxu0 0.0
      %223 = vmatpush1.msra.mxu0 0.0
      %224 = vmatprep.subr.mxu0 0.0
      %225 = vmatpush1.msra.mxu0 0.0
      %226 = vmatprep.subr.mxu0 0.0
      %227 = vmatpush1.msra.mxu0 0.0
      %228 = vmatprep.subr.mxu0 0.0
      %229 = vmatpush1.msra.mxu0 0.0
      %230 = vmatprep.subr.mxu0 0.0
      %231 = vmatpush1.msra.mxu0 0.0
      %232 = vmatprep.subr.mxu0 0.0
      %233 = vmatpush1.msra.mxu0 0.0
      %234 = vmatprep.subr.mxu0 0.0
      %235 = vmatpush1.msra.mxu0 0.0
      %236 = vmatprep.subr.mxu0 0.0
      %237 = vmatpush1.msra.mxu0 0.0
      %238 = vmatprep.subr.mxu0 0.0
      %239 = vmatpush1.msra.mxu0 0.0
      %240 = vmatprep.subr.mxu0 0.0
      %241 = vmatpush1.msra.mxu0 0.0
      %242 = vmatprep.subr.mxu0 0.0
      %243 = vmatpush1.msra.mxu0 0.0
      %244 = vmatprep.subr.mxu0 0.0
      %245 = vmatpush1.msra.mxu0 0.0
      %246 = vmatprep.subr.mxu0 0.0
      %247 = vmatpush1.msra.mxu0 0.0
      %248 = vmatprep.subr.mxu0 0.0
      %249 = vmatpush1.msra.mxu0 0.0
      %250 = vmatprep.subr.mxu0 0.0
      %251 = vmatpush1.msra.mxu0 0.0
      %252 = vmatprep.subr.mxu0 0.0
      %253 = vmatpush1.msra.mxu0 0.0
      %254 = vmatprep.subr.mxu0 0.0
      %255 = vmatpush1.msra.mxu0 0.0
      %256 = vmatprep.subr.mxu0 0.0
      %257 = vmatpush1.msra.mxu0 0.0
      %258 = vmatprep.subr.mxu0 0.0
      %259 = vmatpush1.msra.mxu0 0.0
      %260 = vmatprep.subr.mxu0 0.0
      %261 = vmatpush1.msra.mxu0 0.0
      %262 = vmatprep.subr.mxu0 0.0
      %263 = vmatpush1.msra.mxu0 0.0
      %264 = vmatprep.mubr.f32.mxu0 0.0
      %265 = vmatmul.mubr.f32.gmra.mrb[0].mxu0 %v195
      %v266 = vpop.f32.mrb[0].mxu0
      %v267 = vadd.f32 %v186, %v266
      %v268 = vpop.f32.mrb[0].mxu0
      %v269 = vadd.f32 %v186, %v268
      %270 = vmatprep.mubr.f32.mxu0 0.0
      %271 = vmatmul.mubr.f32.gmra.mrb[0].mxu0 %v198
      %v272 = vpop.f32.mrb[0].mxu0
      %v273 = vadd.f32 %v191, %v272
      %v274 = vpop.f32.mrb[0].mxu0
      %v275 = vadd.f32 %v191, %v274
      %276 = vdwg.mxu0
      %277 = vst [vmem:[%s170] sm:$0xff] %v267
      %278 = vst [vmem:[%s170 + $0x8] sm:$0xff] %v269
      %279 = vst [vmem:[%s170 + $0x10] sm:$0xff] %v273
      %280 = vst [vmem:[%s170 + $0x18] sm:$0xff] %v275
      %p281 = scmp.lt.s32.totalorder %s14, 1
      %s282 = scalar_select %p281, %s14, 1
      %s283 = smul.addr %s282, 4
      %s284 = smul.addr %s283, 8
      %s285 = scalar_lea.vmem %s3, %s284
      // Predicated region
      $region33: #{convnext_encoder.11} parent=31 // pred_check
        %p286 = pneg %p100
      $region34: #{convnext_encoder.11} parent=31 // pred_check_branch
        %288 = sbr.rel (%p286) target = $region36
      $region35: #{convnext_encoder.11} parent=31 // pred_region
        _
      $region36: #{convnext_encoder.11} parent=31 // pred_fallthru
        _
    $region32: #{convnext_encoder.11} parent=5 // pred_fallthru
      _
    %p289 = scmp.le.s32.totalorder 2, %s9
    // Predicated region
    $region37: #{convnext_encoder.11} parent=5 // pred_check
      %p290 = pneg %p289
    $region38: #{convnext_encoder.11} parent=5 // pred_check_branch
      %292 = sbr.rel (%p290) target = $region40
    $region39: #{convnext_encoder.11} parent=5 // pred_region
      %s293 = ssub.s32 %s9, 2
      // Predicated region
      $region41: #{convnext_encoder.11} parent=39 // pred_check
        %p294 = pneg %p106
      $region42: #{convnext_encoder.11} parent=39 // pred_check_branch
        %296 = sbr.rel (%p294) target = $region44
      $region43: #{convnext_encoder.11} parent=39 // pred_region
        %p297 = scmp.lt.s32.totalorder %s15, 1
        %s298 = scalar_select %p297, %s15, 1
        %s299 = smul.addr %s298, 4
        %s300 = smul.addr %s299, 8
        %s301 = scalar_lea.vmem %s3, %s300
      $region44: #{convnext_encoder.11} parent=39 // pred_fallthru
        _
    $region40: #{convnext_encoder.11} parent=5 // pred_fallthru
      _
  $region6: #{convnext_encoder.11} parent=0 // loop_footer
    %s13 = sadd.s32 1, %s9
  $region7: #{convnext_encoder.11} parent=0 // loop_footer_branch
    %8 = sbr.rel target = $region3
  $region8: #{convnext_encoder.11} parent=0 // loop_exit
    _

// kernel: convnext_encoder.13
$region0: #{convnext_encoder.13}
  #allocation0 [shape = 'u32[]', space=smem, size = 0x4, offset = 0x4, fixed_abs, tag = 'smem constant byte address 0x4 - core index']
  #allocation1 [shape = 'u32[144,128]{1,0:T(1,128)}', space=vmem, size = 0x12000, scoped, tag = 'internal scratch']
  %s0 = inlined_call_operand.vmem [shape: f32[2,16,256], index: 0, kind: input, shape index: {}]
  %s1 = inlined_call_operand.vmem [shape: f32[16,1], index: 1, kind: input, shape index: {}]
  %s2 = inlined_call_operand.vmem [shape: f32[16,1], index: 2, kind: input, shape index: {}]
  %s3 = inlined_call_operand.vmem [shape: f32[2,16,256], index: 3, kind: output, shape index: {}]
  %s4 = sld [smem:[#allocation0]]
  $region45: #{convnext_encoder.13} parent=0
    _
  %s6 = ssub.s32 1, %s4
  %s7 = scalar_select 0, %s6, %s4
  loop: start=0, step=1, limit=4
  $region2: #{convnext_encoder.13} parent=0 // loop_pre_header
    _
  $region3: #{convnext_encoder.13} parent=0 // loop_header
    %s9 = sphi 0, %s13
    %p10 = scmp.ge.s32.totalorder %s9, 4
    %s19 = sphi 0, %s21
    %s22 = sphi 0, %s19
    %s23 = sphi 0, %s22
    %s39 = sphi 0, %s23
    %s43 = sphi 0, %s43
    %s45 = sphi 0, %s43
    %s46 = sphi 0, %s45
    %s60 = sphi 0, %s46
    %s64 = sphi 0, %s64
    %s66 = sphi 0, %s64
    %s67 = sphi 0, %s66
    %s81 = sphi 0, %s67
    %s87 = sphi 0, %s89
    %s90 = sphi 0, %s87
    %s91 = sphi 0, %s90
    %s107 = sphi 0, %s91
  $region4: #{convnext_encoder.13} parent=0 // loop_header_branch
    %12 = sbr.rel (%p10) target = $region8
  $region5: #{convnext_encoder.13} parent=0 // loop_body
    %s14 = ssub.s32 %s9, 1
    %s15 = ssub.s32 %s9, 2
    %s16 = sadd.s32 %s9, 1
    %s17 = ssub.s32 %s9, %s16
    %p18 = scmp.eq.s32.totalorder %s17, 0
    %s20 = sadd.s32 %s19, 1
    %s21 = scalar_select %p18, %s19, %s20
    %p24 = pneg %p18
    %p25 = scmp.eq.s32.totalorder %s9, 1
    %p26 = por %p24, %p25
    %p27 = scmp.ne.s32.totalorder %s19, %s22
    %p28 = scmp.eq.s32.totalorder %s9, 0
    %p29 = por %p27, %p28
    %p30 = scmp.ne.s32.totalorder %s19, %s22
    %p31 = scmp.eq.s32.totalorder %s14, 1
    %p32 = por %p30, %p31
    %p33 = scmp.ne.s32.totalorder %s22, %s23
    %p34 = scmp.eq.s32.totalorder %s14, 0
    %p35 = por %p33, %p34
    %p36 = scmp.ne.s32.totalorder %s22, %s23
    %p37 = scmp.eq.s32.totalorder %s15, 1
    %p38 = por %p36, %p37
    %p40 = scmp.ne.s32.totalorder %s23, %s39
    %p41 = scmp.eq.s32.totalorder %s15, 0
    %p42 = por %p40, %p41
    %s44 = sadd.s32 %s43, 1
    %p47 = scmp.eq.s32.totalorder %s9, 1
    %p48 = scmp.ne.s32.totalorder %s43, %s45
    %p49 = scmp.eq.s32.totalorder %s9, 0
    %p50 = por %p48, %p49
    %p51 = scmp.ne.s32.totalorder %s43, %s45
    %p52 = scmp.eq.s32.totalorder %s14, 1
    %p53 = por %p51, %p52
    %p54 = scmp.ne.s32.totalorder %s45, %s46
    %p55 = scmp.eq.s32.totalorder %s14, 0
    %p56 = por %p54, %p55
    %p57 = scmp.ne.s32.totalorder %s45, %s46
    %p58 = scmp.eq.s32.totalorder %s15, 1
    %p59 = por %p57, %p58
    %p61 = scmp.ne.s32.totalorder %s46, %s60
    %p62 = scmp.eq.s32.totalorder %s15, 0
    %p63 = por %p61, %p62
    %s65 = sadd.s32 %s64, 1
    %p68 = scmp.eq.s32.totalorder %s9, 1
    %p69 = scmp.ne.s32.totalorder %s64, %s66
    %p70 = scmp.eq.s32.totalorder %s9, 0
    %p71 = por %p69, %p70
    %p72 = scmp.ne.s32.totalorder %s64, %s66
    %p73 = scmp.eq.s32.totalorder %s14, 1
    %p74 = por %p72, %p73
    %p75 = scmp.ne.s32.totalorder %s66, %s67
    %p76 = scmp.eq.s32.totalorder %s14, 0
    %p77 = por %p75, %p76
    %p78 = scmp.ne.s32.totalorder %s66, %s67
    %p79 = scmp.eq.s32.totalorder %s15, 1
    %p80 = por %p78, %p79
    %p82 = scmp.ne.s32.totalorder %s67, %s81
    %p83 = scmp.eq.s32.totalorder %s15, 0
    %p84 = por %p82, %p83
    %s85 = ssub.s32 %s9, %s16
    %p86 = scmp.eq.s32.totalorder %s85, 0
    %s88 = sadd.s32 %s87, 1
    %s89 = scalar_select %p86, %s87, %s88
    %p92 = pneg %p86
    %p93 = scmp.eq.s32.totalorder %s9, 1
    %p94 = por %p92, %p93
    %p95 = scmp.ne.s32.totalorder %s87, %s90
    %p96 = scmp.eq.s32.totalorder %s9, 0
    %p97 = por %p95, %p96
    %p98 = scmp.ne.s32.totalorder %s87, %s90
    %p99 = scmp.eq.s32.totalorder %s14, 1
    %p100 = por %p98, %p99
    %p101 = scmp.ne.s32.totalorder %s90, %s91
    %p102 = scmp.eq.s32.totalorder %s14, 0
    %p103 = por %p101, %p102
    %p104 = scmp.ne.s32.totalorder %s90, %s91
    %p105 = scmp.eq.s32.totalorder %s15, 1
    %p106 = por %p104, %p105
    %p108 = scmp.ne.s32.totalorder %s91, %s107
    %p109 = scmp.eq.s32.totalorder %s15, 0
    %p110 = por %p108, %p109
    %p111 = scmp.le.s32.totalorder 1, %s9
    %p112 = scmp.lt.s32.totalorder %s9, 3
    %p113 = pnand %p111, %p112
    %p114 = pneg %p113
    // Predicated region
    $region9: #{convnext_encoder.13} parent=5 // pred_check
      _
    $region10: #{convnext_encoder.13} parent=5 // pred_check_branch
      %116 = sbr.rel (%p113) target = $region12
    $region11: #{convnext_encoder.13} parent=5 // pred_region
      %s117 = ssub.s32 %s9, 1
      // Predicated region
      $region13: #{convnext_encoder.13} parent=11 // pred_check
        %p118 = pneg %p56
      $region14: #{convnext_encoder.13} parent=11 // pred_check_branch
        %120 = sbr.rel (%p118) target = $region16
      $region15: #{convnext_encoder.13} parent=11 // pred_region
        _
      $region16: #{convnext_encoder.13} parent=11 // pred_fallthru
        _
      // Predicated region
      $region17: #{convnext_encoder.13} parent=11 // pred_check
        %p121 = pneg %p77
      $region18: #{convnext_encoder.13} parent=11 // pred_check_branch
        %123 = sbr.rel (%p121) target = $region20
      $region19: #{convnext_encoder.13} parent=11 // pred_region
        _
      $region20: #{convnext_encoder.13} parent=11 // pred_fallthru
        _
    $region12: #{convnext_encoder.13} parent=5 // pred_fallthru
      _
    %p124 = scmp.lt.s32.totalorder %s9, 2
    // Predicated region
    $region21: #{convnext_encoder.13} parent=5 // pred_check
      %p125 = pneg %p124
    $region22: #{convnext_encoder.13} parent=5 // pred_check_branch
      %127 = sbr.rel (%p125) target = $region24
    $region23: #{convnext_encoder.13} parent=5 // pred_region
      // Predicated region
      $region25: #{convnext_encoder.13} parent=23 // pred_check
        %p128 = pneg %p29
      $region26: #{convnext_encoder.13} parent=23 // pred_check_branch
        %130 = sbr.rel (%p128) target = $region28
      $region27: #{convnext_encoder.13} parent=23 // pred_region
        %p131 = scmp.lt.s32.totalorder %s9, 1
        %s132 = scalar_select %p131, %s9, 1
        %s133 = smul.addr %s132, 4
        %s134 = smul.addr %s133, 8
        %s135 = scalar_lea.vmem %s0, %s134
      $region28: #{convnext_encoder.13} parent=23 // pred_fallthru
        _
    $region24: #{convnext_encoder.13} parent=5 // pred_fallthru
      _
    %p136 = scmp.le.s32.totalorder 1, %s9
    %p137 = scmp.lt.s32.totalorder %s9, 3
    %p138 = pnand %p136, %p137
    %p139 = pneg %p138
    // Predicated region
    $region29: #{convnext_encoder.13} parent=5 // pred_check
      _
    $region30: #{convnext_encoder.13} parent=5 // pred_check_branch
      %141 = sbr.rel (%p138) target = $region32
    $region31: #{convnext_encoder.13} parent=5 // pred_region
      %s142 = ssub.s32 %s9, 1
      %p143 = scmp.lt.s32.totalorder %s14, 1
      %s144 = scalar_select %p143, %s14, 1
      %s145 = smul.addr %s144, 4
      %s146 = smul.addr %s145, 8
      %s147 = scalar_lea.vmem %s0, %s146
      %p148 = pneg %p35
      %p149 = pneg %p32
      %p150 = pneg %p56
      %p151 = pneg %p53
      %p152 = pneg %p77
      %p153 = pneg %p74
      %p154 = pneg %p103
      %p155 = pneg %p100
      %p156 = scmp.lt.s32.totalorder %s14, 1
      %s157 = scalar_select %p156, %s14, 1
      %s158 = smul.addr %s157, 4
      %s159 = smul.addr %s158, 8
      %s160 = scalar_lea.vmem %s3, %s159
      %p161 = scmp.lt.s32.totalorder %s14, 1
      %s162 = scalar_select %p161, %s14, 1
      %s163 = smul.addr %s162, 4
      %s164 = smul.addr %s163, 8
      %s165 = scalar_lea.vmem %s0, %s164
      %p166 = scmp.lt.s32.totalorder %s14, 1
      %s167 = scalar_select %p166, %s14, 1
      %s168 = smul.addr %s167, 4
      %s169 = smul.addr %s168, 8
      %s170 = scalar_lea.vmem %s3, %s169
      %v171 = vld [vmem:[%s165] sm:$0xff]
      %v172 = vld [vmem:[%s165 + $0x8] sm:$0xff]
      %v173 = vld [vmem:[%s165 + $0x10] sm:$0xff]
      %v174 = vld [vmem:[%s165 + $0x18] sm:$0xff]
      %v175 = vld [vmem:[%s1] sm:$0xff]
      %v176 = vld [vmem:[%s1 + $0x8] sm:$0xff]
      %v177 = vld [vmem:[%s2] sm:$0xff]
      %v178 = vld [vmem:[%s2 + $0x8] sm:$0xff]
      %v179 = vadd.f32 %v171, %v172
      %v180 = vadd.f32 %v179, %v173
      %v181 = vadd.f32 %v180, %v174
      %182 = vadd.xlane.f32.xlu0 %v181
      %v183 = vpop.xlane.xlu0 %182
      %v184 = vrot.slane %v183, 4
      %v185 = vadd.f32 %v183, %v184
      %v186 = vrot.slane %v185, 2
      %v187 = vadd.f32 %v185, %v186
      %v188 = vrot.slane %v187, 1
      %v189 = vadd.f32 %v187, %v188
      %s190 = vtos %v189
      %v191 = vstv %s190
      %v192 = vrcp.pop 4096.0
      %v193 = vmul.f32 %v191, %v192
      %v194 = vsub.f32 %v171, %v193
      %v195 = vsub.f32 %v172, %v193
      %v196 = vsub.f32 %v173, %v193
      %v197 = vsub.f32 %v174, %v193
      %v198 = vmul.f32 %v194, %v194
      %v199 = vmul.f32 %v195, %v195
      %v200 = vmul.f32 %v196, %v196
      %v201 = vmul.f32 %v197, %v197
      %v202 = vadd.f32 %v198, %v199
      %v203 = vadd.f32 %v202, %v200
      %v204 = vadd.f32 %v203, %v201
      %205 = vadd.xlane.f32.xlu0 %v204
      %v206 = vpop.xlane.xlu0 %205
      %v207 = vrot.slane %v206, 4
      %v208 = vadd.f32 %v206, %v207
      %v209 = vrot.slane %v208, 2
      %v210 = vadd.f32 %v208, %v209
      %v211 = vrot.slane %v210, 1
      %v212 = vadd.f32 %v210, %v211
      %s213 = vtos %v212
      %v214 = vstv %s213
      %v215 = vmul.f32 %v214, %v192
      %v216 = vadd.f32 %v215, 1e-05
      %v217 = vrsqrt.pop %v216
      %v218 = vmul.f32 %v194, %v217
      %v219 = vmul.f32 %v195, %v217
      %v220 = vmul.f32 %v196, %v217
      %v221 = vmul.f32 %v197, %v217
      %223 = vset.pattern.permute.xlu0 0
      %224 = vperm.xlu0 %223, %v175
      %v225 = vpop.permute.xlu0 %224
      %228 = vset.pattern.permute.xlu0 0
      %229 = vperm.xlu0 %228, %v176
      %v230 = vpop.permute.xlu0 %229
      %v232 = vmul.f32 %v218, %v225
      %v233 = vmul.f32 %v219, %v225
      %v234 = vmul.f32 %v220, %v230
      %v235 = vmul.f32 %v221, %v230
      %237 = vset.pattern.permute.xlu0 0
      %238 = vperm.xlu0 %237, %v177
      %v239 = vpop.permute.xlu0 %238
      %242 = vset.pattern.permute.xlu0 0
      %243 = vperm.xlu0 %242, %v178
      %v244 = vpop.permute.xlu0 %243
      %v246 = vadd.f32 %v232, %v239
      %v247 = vadd.f32 %v233, %v239
      %v248 = vadd.f32 %v234, %v244
      %v249 = vadd.f32 %v235, %v244
      %250 = vst [vmem:[%s170] sm:$0xff] %v246
      %251 = vst [vmem:[%s170 + $0x8] sm:$0xff] %v247
      %252 = vst [vmem:[%s170 + $0x10] sm:$0xff] %v248
      %253 = vst [vmem:[%s170 + $0x18] sm:$0xff] %v249
      %p254 = scmp.lt.s32.totalorder %s14, 1
      %s255 = scalar_select %p254, %s14, 1
      %s256 = smul.addr %s255, 4
      %s257 = smul.addr %s256, 8
      %s258 = scalar_lea.vmem %s3, %s257
      // Predicated region
      $region33: #{convnext_encoder.13} parent=31 // pred_check
        %p259 = pneg %p100
      $region34: #{convnext_encoder.13} parent=31 // pred_check_branch
        %261 = sbr.rel (%p259) target = $region36
      $region35: #{convnext_encoder.13} parent=31 // pred_region
        _
      $region36: #{convnext_encoder.13} parent=31 // pred_fallthru
        _
    $region32: #{convnext_encoder.13} parent=5 // pred_fallthru
      _
    %p262 = scmp.le.s32.totalorder 2, %s9
    // Predicated region
    $region37: #{convnext_encoder.13} parent=5 // pred_check
      %p263 = pneg %p262
    $region38: #{convnext_encoder.13} parent=5 // pred_check_branch
      %265 = sbr.rel (%p263) target = $region40
    $region39: #{convnext_encoder.13} parent=5 // pred_region
      %s266 = ssub.s32 %s9, 2
      // Predicated region
      $region41: #{convnext_encoder.13} parent=39 // pred_check
        %p267 = pneg %p106
      $region42: #{convnext_encoder.13} parent=39 // pred_check_branch
        %269 = sbr.rel (%p267) target = $region44
      $region43: #{convnext_encoder.13} parent=39 // pred_region
        %p270 = scmp.lt.s32.totalorder %s15, 1
        %s271 = scalar_select %p270, %s15, 1
        %s272 = smul.addr %s271, 4
        %s273 = smul.addr %s272, 8
        %s274 = scalar_lea.vmem %s3, %s273
      $region44: #{convnext_encoder.13} parent=39 // pred_fallthru
        _
    $region40: #{convnext_encoder.13} parent=5 // pred_fallthru
      _
  $region6: #{convnext_encoder.13} parent=0 // loop_footer
    %s13 = sadd.s32 1, %s9
  $region7: #{convnext_encoder.13} parent=0 // loop_footer_branch
    %8 = sbr.rel target = $region3
  $region8: #{convnext_encoder.13} parent=0 // loop_exit
    _

// kernel: convnext_encoder.12
$region0: #{convnext_encoder.12}
  #allocation0 [shape = 'u32[]', space=smem, size = 0x4, offset = 0x4, fixed_abs, tag = 'smem constant byte address 0x4 - core index']
  #allocation1 [shape = 'u32[144,128]{1,0:T(1,128)}', space=vmem, size = 0x12000, scoped, tag = 'internal scratch']
  %s0 = inlined_call_operand.vmem [shape: f32[2,16,256], index: 0, kind: input, shape index: {}]
  %s1 = inlined_call_operand.vmem [shape: f32[2,16,262], index: 1, kind: input, shape index: {}]
  %s2 = inlined_call_operand.vmem [shape: f32[16,7], index: 2, kind: input, shape index: {}]
  %s3 = inlined_call_operand.vmem [shape: f32[16,1], index: 3, kind: input, shape index: {}]
  %s4 = inlined_call_operand.vmem [shape: f32[16,1], index: 4, kind: input, shape index: {}]
  %s5 = inlined_call_operand.vmem [shape: f32[32,16], index: 5, kind: input, shape index: {}]
  %s6 = inlined_call_operand.vmem [shape: f32[32,1], index: 6, kind: input, shape index: {}]
  %s7 = inlined_call_operand.vmem [shape: f32[16,32], index: 7, kind: input, shape index: {}]
  %s8 = inlined_call_operand.vmem [shape: f32[16,1], index: 8, kind: input, shape index: {}]
  %s9 = inlined_call_operand.vmem [shape: f32[16,1], index: 9, kind: input, shape index: {}]
  %s10 = inlined_call_operand.vmem [shape: f32[2,16,256], index: 10, kind: output, shape index: {}]
  %s11 = sld [smem:[#allocation0]]
  $region73: #{convnext_encoder.12} parent=0
    _
  %s13 = ssub.s32 1, %s11
  %s14 = scalar_select 0, %s13, %s11
  loop: start=0, step=1, limit=4
  $region2: #{convnext_encoder.12} parent=0 // loop_pre_header
    _
  $region3: #{convnext_encoder.12} parent=0 // loop_header
    %s16 = sphi 0, %s20
    %p17 = scmp.ge.s32.totalorder %s16, 4
    %s26 = sphi 0, %s28
    %s29 = sphi 0, %s26
    %s30 = sphi 0, %s29
    %s46 = sphi 0, %s30
    %s52 = sphi 0, %s54
    %s55 = sphi 0, %s52
    %s56 = sphi 0, %s55
    %s72 = sphi 0, %s56
    %s76 = sphi 0, %s76
    %s78 = sphi 0, %s76
    %s79 = sphi 0, %s78
    %s93 = sphi 0, %s79
    %s97 = sphi 0, %s97
    %s99 = sphi 0, %s97
    %s100 = sphi 0, %s99
    %s114 = sphi 0, %s100
    %s118 = sphi 0, %s118
    %s120 = sphi 0, %s118
    %s121 = sphi 0, %s120
    %s135 = sphi 0, %s121
    %s139 = sphi 0, %s139
    %s141 = sphi 0, %s139
    %s142 = sphi 0, %s141
    %s156 = sphi 0, %s142
    %s160 = sphi 0, %s160
    %s162 = sphi 0, %s160
    %s163 = sphi 0, %s162
    %s177 = sphi 0, %s163
    %s181 = sphi 0, %s181
    %s183 = sphi 0, %s181
    %s184 = sphi 0, %s183
    %s198 = sphi 0, %s184
    %s202 = sphi 0, %s202
    %s204 = sphi 0, %s202
    %s205 = sphi 0, %s204
    %s219 = sphi 0, %s205
    %s223 = sphi 0, %s223
    %s225 = sphi 0, %s223
    %s226 = sphi 0, %s225
    %s240 = sphi 0, %s226
    %s246 = sphi 0, %s248
    %s249 = sphi 0, %s246
    %s250 = sphi 0, %s249
    %s266 = sphi 0, %s250
  $region4: #{convnext_encoder.12} parent=0 // loop_header_branch
    %19 = sbr.rel (%p17) target = $region8
  $region5: #{convnext_encoder.12} parent=0 // loop_body
    %s21 = ssub.s32 %s16, 1
    %s22 = ssub.s32 %s16, 2
    %s23 = sadd.s32 %s16, 1
    %s24 = ssub.s32 %s16, %s23
    %p25 = scmp.eq.s32.totalorder %s24, 0
    %s27 = sadd.s32 %s26, 1
    %s28 = scalar_select %p25, %s26, %s27
    %p31 = pneg %p25
    %p32 = scmp.eq.s32.totalorder %s16, 1
    %p33 = por %p31, %p32
    %p34 = scmp.ne.s32.totalorder %s26, %s29
    %p35 = scmp.eq.s32.totalorder %s16, 0
    %p36 = por %p34, %p35
    %p37 = scmp.ne.s32.totalorder %s26, %s29
    %p38 = scmp.eq.s32.totalorder %s21, 1
    %p39 = por %p37, %p38
    %p40 = scmp.ne.s32.totalorder %s29, %s30
    %p41 = scmp.eq.s32.totalorder %s21, 0
    %p42 = por %p40, %p41
    %p43 = scmp.ne.s32.totalorder %s29, %s30
    %p44 = scmp.eq.s32.totalorder %s22, 1
    %p45 = por %p43, %p44
    %p47 = scmp.ne.s32.totalorder %s30, %s46
    %p48 = scmp.eq.s32.totalorder %s22, 0
    %p49 = por %p47, %p48
    %s50 = ssub.s32 %s16, %s23
    %p51 = scmp.eq.s32.totalorder %s50, 0
    %s53 = sadd.s32 %s52, 1
    %s54 = scalar_select %p51, %s52, %s53
    %p57 = pneg %p51
    %p58 = scmp.eq.s32.totalorder %s16, 1
    %p59 = por %p57, %p58
    %p60 = scmp.ne.s32.totalorder %s52, %s55
    %p61 = scmp.eq.s32.totalorder %s16, 0
    %p62 = por %p60, %p61
    %p63 = scmp.ne.s32.totalorder %s52, %s55
    %p64 = scmp.eq.s32.totalorder %s21, 1
    %p65 = por %p63, %p64
    %p66 = scmp.ne.s32.totalorder %s55, %s56
    %p67 = scmp.eq.s32.totalorder %s21, 0
    %p68 = por %p66, %p67
    %p69 = scmp.ne.s32.totalorder %s55, %s56
    %p70 = scmp.eq.s32.totalorder %s22, 1
    %p71 = por %p69, %p70
    %p73 = scmp.ne.s32.totalorder %s56, %s72
    %p74 = scmp.eq.s32.totalorder %s22, 0
    %p75 = por %p73, %p74
    %s77 = sadd.s32 %s76, 1
    %p80 = scmp.eq.s32.totalorder %s16, 1
    %p81 = scmp.ne.s32.totalorder %s76, %s78
    %p82 = scmp.eq.s32.totalorder %s16, 0
    %p83 = por %p81, %p82
    %p84 = scmp.ne.s32.totalorder %s76, %s78
    %p85 = scmp.eq.s32.totalorder %s21, 1
    %p86 = por %p84, %p85
    %p87 = scmp.ne.s32.totalorder %s78, %s79
    %p88 = scmp.eq.s32.totalorder %s21, 0
    %p89 = por %p87, %p88
    %p90 = scmp.ne.s32.totalorder %s78, %s79
    %p91 = scmp.eq.s32.totalorder %s22, 1
    %p92 = por %p90, %p91
    %p94 = scmp.ne.s32.totalorder %s79, %s93
    %p95 = scmp.eq.s32.totalorder %s22, 0
    %p96 = por %p94, %p95
    %s98 = sadd.s32 %s97, 1
    %p101 = scmp.eq.s32.totalorder %s16, 1
    %p102 = scmp.ne.s32.totalorder %s97, %s99
    %p103 = scmp.eq.s32.totalorder %s16, 0
    %p104 = por %p102, %p103
    %p105 = scmp.ne.s32.totalorder %s97, %s99
    %p106 = scmp.eq.s32.totalorder %s21, 1
    %p107 = por %p105, %p106
    %p108 = scmp.ne.s32.totalorder %s99, %s100
    %p109 = scmp.eq.s32.totalorder %s21, 0
    %p110 = por %p108, %p109
    %p111 = scmp.ne.s32.totalorder %s99, %s100
    %p112 = scmp.eq.s32.totalorder %s22, 1
    %p113 = por %p111, %p112
    %p115 = scmp.ne.s32.totalorder %s100, %s114
    %p116 = scmp.eq.s32.totalorder %s22, 0
    %p117 = por %p115, %p116
    %s119 = sadd.s32 %s118, 1
    %p122 = scmp.eq.s32.totalorder %s16, 1
    %p123 = scmp.ne.s32.totalorder %s118, %s120
    %p124 = scmp.eq.s32.totalorder %s16, 0
    %p125 = por %p123, %p124
    %p126 = scmp.ne.s32.totalorder %s118, %s120
    %p127 = scmp.eq.s32.totalorder %s21, 1
    %p128 = por %p126, %p127
    %p129 = scmp.ne.s32.totalorder %s120, %s121
    %p130 = scmp.eq.s32.totalorder %s21, 0
    %p131 = por %p129, %p130
    %p132 = scmp.ne.s32.totalorder %s120, %s121
    %p133 = scmp.eq.s32.totalorder %s22, 1
    %p134 = por %p132, %p133
    %p136 = scmp.ne.s32.totalorder %s121, %s135
    %p137 = scmp.eq.s32.totalorder %s22, 0
    %p138 = por %p136, %p137
    %s140 = sadd.s32 %s139, 1
    %p143 = scmp.eq.s32.totalorder %s16, 1
    %p144 = scmp.ne.s32.totalorder %s139, %s141
    %p145 = scmp.eq.s32.totalorder %s16, 0
    %p146 = por %p144, %p145
    %p147 = scmp.ne.s32.totalorder %s139, %s141
    %p148 = scmp.eq.s32.totalorder %s21, 1
    %p149 = por %p147, %p148
    %p150 = scmp.ne.s32.totalorder %s141, %s142
    %p151 = scmp.eq.s32.totalorder %s21, 0
    %p152 = por %p150, %p151
    %p153 = scmp.ne.s32.totalorder %s141, %s142
    %p154 = scmp.eq.s32.totalorder %s22, 1
    %p155 = por %p153, %p154
    %p157 = scmp.ne.s32.totalorder %s142, %s156
    %p158 = scmp.eq.s32.totalorder %s22, 0
    %p159 = por %p157, %p158
    %s161 = sadd.s32 %s160, 1
    %p164 = scmp.eq.s32.totalorder %s16, 1
    %p165 = scmp.ne.s32.totalorder %s160, %s162
    %p166 = scmp.eq.s32.totalorder %s16, 0
    %p167 = por %p165, %p166
    %p168 = scmp.ne.s32.totalorder %s160, %s162
    %p169 = scmp.eq.s32.totalorder %s21, 1
    %p170 = por %p168, %p169
    %p171 = scmp.ne.s32.totalorder %s162, %s163
    %p172 = scmp.eq.s32.totalorder %s21, 0
    %p173 = por %p171, %p172
    %p174 = scmp.ne.s32.totalorder %s162, %s163
    %p175 = scmp.eq.s32.totalorder %s22, 1
    %p176 = por %p174, %p175
    %p178 = scmp.ne.s32.totalorder %s163, %s177
    %p179 = scmp.eq.s32.totalorder %s22, 0
    %p180 = por %p178, %p179
    %s182 = sadd.s32 %s181, 1
    %p185 = scmp.eq.s32.totalorder %s16, 1
    %p186 = scmp.ne.s32.totalorder %s181, %s183
    %p187 = scmp.eq.s32.totalorder %s16, 0
    %p188 = por %p186, %p187
    %p189 = scmp.ne.s32.totalorder %s181, %s183
    %p190 = scmp.eq.s32.totalorder %s21, 1
    %p191 = por %p189, %p190
    %p192 = scmp.ne.s32.totalorder %s183, %s184
    %p193 = scmp.eq.s32.totalorder %s21, 0
    %p194 = por %p192, %p193
    %p195 = scmp.ne.s32.totalorder %s183, %s184
    %p196 = scmp.eq.s32.totalorder %s22, 1
    %p197 = por %p195, %p196
    %p199 = scmp.ne.s32.totalorder %s184, %s198
    %p200 = scmp.eq.s32.totalorder %s22, 0
    %p201 = por %p199, %p200
    %s203 = sadd.s32 %s202, 1
    %p206 = scmp.eq.s32.totalorder %s16, 1
    %p207 = scmp.ne.s32.totalorder %s202, %s204
    %p208 = scmp.eq.s32.totalorder %s16, 0
    %p209 = por %p207, %p208
    %p210 = scmp.ne.s32.totalorder %s202, %s204
    %p211 = scmp.eq.s32.totalorder %s21, 1
    %p212 = por %p210, %p211
    %p213 = scmp.ne.s32.totalorder %s204, %s205
    %p214 = scmp.eq.s32.totalorder %s21, 0
    %p215 = por %p213, %p214
    %p216 = scmp.ne.s32.totalorder %s204, %s205
    %p217 = scmp.eq.s32.totalorder %s22, 1
    %p218 = por %p216, %p217
    %p220 = scmp.ne.s32.totalorder %s205, %s219
    %p221 = scmp.eq.s32.totalorder %s22, 0
    %p222 = por %p220, %p221
    %s224 = sadd.s32 %s223, 1
    %p227 = scmp.eq.s32.totalorder %s16, 1
    %p228 = scmp.ne.s32.totalorder %s223, %s225
    %p229 = scmp.eq.s32.totalorder %s16, 0
    %p230 = por %p228, %p229
    %p231 = scmp.ne.s32.totalorder %s223, %s225
    %p232 = scmp.eq.s32.totalorder %s21, 1
    %p233 = por %p231, %p232
    %p234 = scmp.ne.s32.totalorder %s225, %s226
    %p235 = scmp.eq.s32.totalorder %s21, 0
    %p236 = por %p234, %p235
    %p237 = scmp.ne.s32.totalorder %s225, %s226
    %p238 = scmp.eq.s32.totalorder %s22, 1
    %p239 = por %p237, %p238
    %p241 = scmp.ne.s32.totalorder %s226, %s240
    %p242 = scmp.eq.s32.totalorder %s22, 0
    %p243 = por %p241, %p242
    %s244 = ssub.s32 %s16, %s23
    %p245 = scmp.eq.s32.totalorder %s244, 0
    %s247 = sadd.s32 %s246, 1
    %s248 = scalar_select %p245, %s246, %s247
    %p251 = pneg %p245
    %p252 = scmp.eq.s32.totalorder %s16, 1
    %p253 = por %p251, %p252
    %p254 = scmp.ne.s32.totalorder %s246, %s249
    %p255 = scmp.eq.s32.totalorder %s16, 0
    %p256 = por %p254, %p255
    %p257 = scmp.ne.s32.totalorder %s246, %s249
    %p258 = scmp.eq.s32.totalorder %s21, 1
    %p259 = por %p257, %p258
    %p260 = scmp.ne.s32.totalorder %s249, %s250
    %p261 = scmp.eq.s32.totalorder %s21, 0
    %p262 = por %p260, %p261
    %p263 = scmp.ne.s32.totalorder %s249, %s250
    %p264 = scmp.eq.s32.totalorder %s22, 1
    %p265 = por %p263, %p264
    %p267 = scmp.ne.s32.totalorder %s250, %s266
    %p268 = scmp.eq.s32.totalorder %s22, 0
    %p269 = por %p267, %p268
    %p270 = scmp.le.s32.totalorder 1, %s16
    %p271 = scmp.lt.s32.totalorder %s16, 3
    %p272 = pnand %p270, %p271
    %p273 = pneg %p272
    // Predicated region
    $region9: #{convnext_encoder.12} parent=5 // pred_check
      _
    $region10: #{convnext_encoder.12} parent=5 // pred_check_branch
      %275 = sbr.rel (%p272) target = $region12
    $region11: #{convnext_encoder.12} parent=5 // pred_region
      %s276 = ssub.s32 %s16, 1
      // Predicated region
      $region13: #{convnext_encoder.12} parent=11 // pred_check
        %p277 = pneg %p89
      $region14: #{convnext_encoder.12} parent=11 // pred_check_branch
        %279 = sbr.rel (%p277) target = $region16
      $region15: #{convnext_encoder.12} parent=11 // pred_region
        _
      $region16: #{convnext_encoder.12} parent=11 // pred_fallthru
        _
      // Predicated region
      $region17: #{convnext_encoder.12} parent=11 // pred_check
        %p280 = pneg %p110
      $region18: #{convnext_encoder.12} parent=11 // pred_check_branch
        %282 = sbr.rel (%p280) target = $region20
      $region19: #{convnext_encoder.12} parent=11 // pred_region
        _
      $region20: #{convnext_encoder.12} parent=11 // pred_fallthru
        _
      // Predicated region
      $region21: #{convnext_encoder.12} parent=11 // pred_check
        %p283 = pneg %p131
      $region22: #{convnext_encoder.12} parent=11 // pred_check_branch
        %285 = sbr.rel (%p283) target = $region24
      $region23: #{convnext_encoder.12} parent=11 // pred_region
        _
      $region24: #{convnext_encoder.12} parent=11 // pred_fallthru
        _
      // Predicated region
      $region25: #{convnext_encoder.12} parent=11 // pred_check
        %p286 = pneg %p152
      $region26: #{convnext_encoder.12} parent=11 // pred_check_branch
        %288 = sbr.rel (%p286) target = $region28
      $region27: #{convnext_encoder.12} parent=11 // pred_region
        _
      $region28: #{convnext_encoder.12} parent=11 // pred_fallthru
        _
      // Predicated region
      $region29: #{convnext_encoder.12} parent=11 // pred_check
        %p289 = pneg %p173
      $region30: #{convnext_encoder.12} parent=11 // pred_check_branch
        %291 = sbr.rel (%p289) target = $region32
      $region31: #{convnext_encoder.12} parent=11 // pred_region
        _
      $region32: #{convnext_encoder.12} parent=11 // pred_fallthru
        _
      // Predicated region
      $region33: #{convnext_encoder.12} parent=11 // pred_check
        %p292 = pneg %p194
      $region34: #{convnext_encoder.12} parent=11 // pred_check_branch
        %294 = sbr.rel (%p292) target = $region36
      $region35: #{convnext_encoder.12} parent=11 // pred_region
        _
      $region36: #{convnext_encoder.12} parent=11 // pred_fallthru
        _
      // Predicated region
      $region37: #{convnext_encoder.12} parent=11 // pred_check
        %p295 = pneg %p215
      $region38: #{convnext_encoder.12} parent=11 // pred_check_branch
        %297 = sbr.rel (%p295) target = $region40
      $region39: #{convnext_encoder.12} parent=11 // pred_region
        _
      $region40: #{convnext_encoder.12} parent=11 // pred_fallthru
        _
      // Predicated region
      $region41: #{convnext_encoder.12} parent=11 // pred_check
        %p298 = pneg %p236
      $region42: #{convnext_encoder.12} parent=11 // pred_check_branch
        %300 = sbr.rel (%p298) target = $region44
      $region43: #{convnext_encoder.12} parent=11 // pred_region
        _
      $region44: #{convnext_encoder.12} parent=11 // pred_fallthru
        _
    $region12: #{convnext_encoder.12} parent=5 // pred_fallthru
      _
    %p301 = scmp.lt.s32.totalorder %s16, 2
    // Predicated region
    $region45: #{convnext_encoder.12} parent=5 // pred_check
      %p302 = pneg %p301
    $region46: #{convnext_encoder.12} parent=5 // pred_check_branch
      %304 = sbr.rel (%p302) target = $region48
    $region47: #{convnext_encoder.12} parent=5 // pred_region
      // Predicated region
      $region49: #{convnext_encoder.12} parent=47 // pred_check
        %p305 = pneg %p36
      $region50: #{convnext_encoder.12} parent=47 // pred_check_branch
        %307 = sbr.rel (%p305) target = $region52
      $region51: #{convnext_encoder.12} parent=47 // pred_region
        %p308 = scmp.lt.s32.totalorder %s16, 1
        %s309 = scalar_select %p308, %s16, 1
        %s310 = smul.addr %s309, 4
        %s311 = smul.addr %s310, 8
        %s312 = scalar_lea.vmem %s0, %s311
      $region52: #{convnext_encoder.12} parent=47 // pred_fallthru
        _
      // Predicated region
      $region53: #{convnext_encoder.12} parent=47 // pred_check
        %p313 = pneg %p62
      $region54: #{convnext_encoder.12} parent=47 // pred_check_branch
        %315 = sbr.rel (%p313) target = $region56
      $region55: #{convnext_encoder.12} parent=47 // pred_region
        %p316 = scmp.lt.s32.totalorder %s16, 1
        %s317 = scalar_select %p316, %s16, 1
        %s318 = smul.addr %s317, 6
        %s319 = smul.addr %s318, 8
        %s320 = scalar_lea.vmem %s1, %s319
      $region56: #{convnext_encoder.12} parent=47 // pred_fallthru
        _
    $region48: #{convnext_encoder.12} parent=5 // pred_fallthru
      _
    %p321 = scmp.le.s32.totalorder 1, %s16
    %p322 = scmp.lt.s32.totalorder %s16, 3
    %p323 = pnand %p321, %p322
    %p324 = pneg %p323
    // Predicated region
    $region57: #{convnext_encoder.12} parent=5 // pred_check
      _
    $region58: #{convnext_encoder.12} parent=5 // pred_check_branch
      %326 = sbr.rel (%p323) target = $region60
    $region59: #{convnext_encoder.12} parent=5 // pred_region
      %s327 = ssub.s32 %s16, 1
      %p328 = scmp.lt.s32.totalorder %s21, 1
      %s329 = scalar_select %p328, %s21, 1
      %s330 = smul.addr %s329, 4
      %s331 = smul.addr %s330, 8
      %s332 = scalar_lea.vmem %s0, %s331
      %p333 = pneg %p42
      %p334 = pneg %p39
      %p335 = scmp.lt.s32.totalorder %s21, 1
      %s336 = scalar_select %p335, %s21, 1
      %s337 = smul.addr %s336, 6
      %s338 = smul.addr %s337, 8
      %s339 = scalar_lea.vmem %s1, %s338
      %p340 = pneg %p68
      %p341 = pneg %p65
      %p342 = pneg %p89
      %p343 = pneg %p86
      %p344 = pneg %p110
      %p345 = pneg %p107
      %p346 = pneg %p131
      %p347 = pneg %p128
      %p348 = pneg %p152
      %p349 = pneg %p149
      %p350 = pneg %p173
      %p351 = pneg %p170
      %p352 = pneg %p194
      %p353 = pneg %p191
      %p354 = pneg %p215
      %p355 = pneg %p212
      %p356 = pneg %p236
      %p357 = pneg %p233
      %p358 = pneg %p262
      %p359 = pneg %p259
      %p360 = scmp.lt.s32.totalorder %s21, 1
      %s361 = scalar_select %p360, %s21, 1
      %s362 = smul.addr %s361, 4
      %s363 = smul.addr %s362, 8
      %s364 = scalar_lea.vmem %s10, %s363
      %p365 = scmp.lt.s32.totalorder %s21, 1
      %s366 = scalar_select %p365, %s21, 1
      %s367 = smul.addr %s366, 4
      %s368 = smul.addr %s367, 8
      %s369 = scalar_lea.vmem %s0, %s368
      %p370 = scmp.lt.s32.totalorder %s21, 1
      %s371 = scalar_select %p370, %s21, 1
      %s372 = smul.addr %s371, 6
      %s373 = smul.addr %s372, 8
      %s374 = scalar_lea.vmem %s1, %s373
      %p375 = scmp.lt.s32.totalorder %s21, 1
      %s376 = scalar_select %p375, %s21, 1
      %s377 = smul.addr %s376, 4
      %s378 = smul.addr %s377, 8
      %s379 = scalar_lea.vmem %s10, %s378
      %v380 = vld [vmem:[%s374] sm:$0xff]
      %v381 = vld [vmem:[%s374 + $0x8] sm:$0xff]
      %v382 = vld [vmem:[%s374 + $0x10] sm:$0xff]
      %v383 = vld [vmem:[%s374 + $0x18] sm:$0xff]
      %v384 = vld [vmem:[%s374 + $0x20] sm:$0xff]
      %v385 = vld [vmem:[%s374 + $0x28] sm:$0xff]
      %v386 = vld [vmem:[%s2] sm:$0xff]
      %v387 = vld [vmem:[%s2 + $0x8] sm:$0xff]
      %389 = vset.pattern.permute.xlu0 0
      %390 = vperm.xlu0 %389, %v386
      %v391 = vpop.permute.xlu0 %390
      %394 = vset.pattern.permute.xlu0 0
      %395 = vperm.xlu0 %394, %v387
      %v396 = vpop.permute.xlu0 %395
      %v398 = vmul.f32 %v391, %v380
      %v399 = vmul.f32 %v391, %v381
      %v400 = vmul.f32 %v396, %v383
      %v401 = vmul.f32 %v396, %v384
      %402 = vset.pattern.permute.xlu0 1
      %403 = vperm.xlu0 %402, %v386
      %v404 = vpop.permute.xlu0 %403
      %406 = vset.pattern.permute.xlu0 1
      %407 = vperm.xlu0 %406, %v387
      %v408 = vpop.permute.xlu0 %407
      %v410 = vmul.f32 %v404, %v380
      %v411 = vmul.f32 %v404, %v381
      %v412 = vmul.f32 %v404, %v382
      %v413 = vmul.f32 %v408, %v383
      %v414 = vmul.f32 %v408, %v384
      %v415 = vmul.f32 %v408, %v385
      %422 = vrot.lane.b32.xlu0 %v410, 127
      %v423 = vpop.permute.xlu0 %422
      %424 = vrot.lane.b32.xlu0 %v411, 127
      %v425 = vpop.permute.xlu0 %424
      %426 = vrot.lane.b32.xlu0 %v412, 127
      %v427 = vpop.permute.xlu0 %426
      %428 = vrot.lane.b32.xlu0 %v413, 127
      %v429 = vpop.permute.xlu0 %428
      %430 = vrot.lane.b32.xlu0 %v414, 127
      %v431 = vpop.permute.xlu0 %430
      %432 = vrot.lane.b32.xlu0 %v415, 127
      %v433 = vpop.permute.xlu0 %432
      %vm434 = vcmask 1039360
      %v435 = vsel %vm434, %v423, %v425
      %v436 = vsel %vm434, %v425, %v427
      %v437 = vsel %vm434, %v429, %v431
      %v438 = vsel %vm434, %v431, %v433
      %v443 = vadd.f32 %v398, %v435
      %v444 = vadd.f32 %v399, %v436
      %v445 = vadd.f32 %v400, %v437
      %v446 = vadd.f32 %v401, %v438
      %447 = vset.pattern.permute.xlu0 2
      %448 = vperm.xlu0 %447, %v386
      %v449 = vpop.permute.xlu0 %448
      %451 = vset.pattern.permute.xlu0 2
      %452 = vperm.xlu0 %451, %v387
      %v453 = vpop.permute.xlu0 %452
      %v455 = vmul.f32 %v449, %v380
      %v456 = vmul.f32 %v449, %v381
      %v457 = vmul.f32 %v449, %v382
      %v458 = vmul.f32 %v453, %v383
      %v459 = vmul.f32 %v453, %v384
      %v460 = vmul.f32 %v453, %v385
      %467 = vrot.lane.b32.xlu0 %v455, 126
      %v468 = vpop.permute.xlu0 %467
      %469 = vrot.lane.b32.xlu0 %v456, 126
      %v470 = vpop.permute.xlu0 %469
      %471 = vrot.lane.b32.xlu0 %v457, 126
      %v472 = vpop.permute.xlu0 %471
      %473 = vrot.lane.b32.xlu0 %v458, 126
      %v474 = vpop.permute.xlu0 %473
      %475 = vrot.lane.b32.xlu0 %v459, 126
      %v476 = vpop.permute.xlu0 %475
      %477 = vrot.lane.b32.xlu0 %v460, 126
      %v478 = vpop.permute.xlu0 %477
      %vm479 = vcmask 1031168
      %v480 = vsel %vm479, %v468, %v470
      %v481 = vsel %vm479, %v470, %v472
      %v482 = vsel %vm479, %v474, %v476
      %v483 = vsel %vm479, %v476, %v478
      %v488 = vadd.f32 %v443, %v480
      %v489 = vadd.f32 %v444, %v481
      %v490 = vadd.f32 %v445, %v482
      %v491 = vadd.f32 %v446, %v483
      %492 = vset.pattern.permute.xlu0 3
      %493 = vperm.xlu0 %492, %v386
      %v494 = vpop.permute.xlu0 %493
      %496 = vset.pattern.permute.xlu0 3
      %497 = vperm.xlu0 %496, %v387
      %v498 = vpop.permute.xlu0 %497
      %v500 = vmul.f32 %v494, %v380
      %v501 = vmul.f32 %v494, %v381
      %v502 = vmul.f32 %v494, %v382
      %v503 = vmul.f32 %v498, %v383
      %v504 = vmul.f32 %v498, %v384
      %v505 = vmul.f32 %v498, %v385
      %512 = vrot.lane.b32.xlu0 %v500, 125
      %v513 = vpop.permute.xlu0 %512
      %514 = vrot.lane.b32.xlu0 %v501, 125
      %v515 = vpop.permute.xlu0 %514
      %516 = vrot.lane.b32.xlu0 %v502, 125
      %v517 = vpop.permute.xlu0 %516
      %518 = vrot.lane.b32.xlu0 %v503, 125
      %v519 = vpop.permute.xlu0 %518
      %520 = vrot.lane.b32.xlu0 %v504, 125
      %v521 = vpop.permute.xlu0 %520
      %522 = vrot.lane.b32.xlu0 %v505, 125
      %v523 = vpop.permute.xlu0 %522
      %vm524 = vcmask 1022976
      %v525 = vsel %vm524, %v513, %v515
      %v526 = vsel %vm524, %v515, %v517
      %v527 = vsel %vm524, %v519, %v521
      %v528 = vsel %vm524, %v521, %v523
      %v533 = vadd.f32 %v488, %v525
      %v534 = vadd.f32 %v489, %v526
      %v535 = vadd.f32 %v490, %v527
      %v536 = vadd.f32 %v491, %v528
      %537 = vset.pattern.permute.xlu0 4
      %538 = vperm.xlu0 %537, %v386
      %v539 = vpop.permute.xlu0 %538
      %541 = vset.pattern.permute.xlu0 4
      %542 = vperm.xlu0 %541, %v387
      %v543 = vpop.permute.xlu0 %542
      %v545 = vmul.f32 %v539, %v380
      %v546 = vmul.f32 %v539, %v381
      %v547 = vmul.f32 %v539, %v382
      %v548 = vmul.f32 %v543, %v383
      %v549 = vmul.f32 %v543, %v384
      %v550 = vmul.f32 %v543, %v385
      %557 = vrot.lane.b32.xlu0 %v545, 124
      %v558 = vpop.permute.xlu0 %557
      %559 = vrot.lane.b32.xlu0 %v546, 124
      %v560 = vpop.permute.xlu0 %559
      %561 = vrot.lane.b32.xlu0 %v547, 124
      %v562 = vpop.permute.xlu0 %561
      %563 = vrot.lane.b32.xlu0 %v548, 124
      %v564 = vpop.permute.xlu0 %563
      %565 = vrot.lane.b32.xlu0 %v549, 124
      %v566 = vpop.permute.xlu0 %565
      %567 = vrot.lane.b32.xlu0 %v550, 124
      %v568 = vpop.permute.xlu0 %567
      %vm569 = vcmask 1014784
      %v570 = vsel %vm569, %v558, %v560
      %v571 = vsel %vm569, %v560, %v562
      %v572 = vsel %vm569, %v564, %v566
      %v573 = vsel %vm569, %v566, %v568
      %v578 = vadd.f32 %v533, %v570
      %v579 = vadd.f32 %v534, %v571
      %v580 = vadd.f32 %v535, %v572
      %v581 = vadd.f32 %v536, %v573
      %582 = vset.pattern.permute.xlu0 5
      %583 = vperm.xlu0 %582, %v386
      %v584 = vpop.permute.xlu0 %583
      %586 = vset.pattern.permute.xlu0 5
      %587 = vperm.xlu0 %586, %v387
      %v588 = vpop.permute.xlu0 %587
      %v590 = vmul.f32 %v584, %v380
      %v591 = vmul.f32 %v584, %v381
      %v592 = vmul.f32 %v584, %v382
      %v593 = vmul.f32 %v588, %v383
      %v594 = vmul.f32 %v588, %v384
      %v595 = vmul.f32 %v588, %v385
      %602 = vrot.lane.b32.xlu0 %v590, 123
      %v603 = vpop.permute.xlu0 %602
      %604 = vrot.lane.b32.xlu0 %v591, 123
      %v605 = vpop.permute.xlu0 %604
      %606 = vrot.lane.b32.xlu0 %v592, 123
      %v607 = vpop.permute.xlu0 %606
      %608 = vrot.lane.b32.xlu0 %v593, 123
      %v609 = vpop.permute.xlu0 %608
      %610 = vrot.lane.b32.xlu0 %v594, 123
      %v611 = vpop.permute.xlu0 %610
      %612 = vrot.lane.b32.xlu0 %v595, 123
      %v613 = vpop.permute.xlu0 %612
      %vm614 = vcmask 1006592
      %v615 = vsel %vm614, %v603, %v605
      %v616 = vsel %vm614, %v605, %v607
      %v617 = vsel %vm614, %v609, %v611
      %v618 = vsel %vm614, %v611, %v613
      %v623 = vadd.f32 %v578, %v615
      %v624 = vadd.f32 %v579, %v616
      %v625 = vadd.f32 %v580, %v617
      %v626 = vadd.f32 %v581, %v618
      %627 = vset.pattern.permute.xlu0 6
      %628 = vperm.xlu0 %627, %v386
      %v629 = vpop.permute.xlu0 %628
      %631 = vset.pattern.permute.xlu0 6
      %632 = vperm.xlu0 %631, %v387
      %v633 = vpop.permute.xlu0 %632
      %v635 = vmul.f32 %v629, %v380
      %v636 = vmul.f32 %v629, %v381
      %v637 = vmul.f32 %v629, %v382
      %v638 = vmul.f32 %v633, %v383
      %v639 = vmul.f32 %v633, %v384
      %v640 = vmul.f32 %v633, %v385
      %647 = vrot.lane.b32.xlu0 %v635, 122
      %v648 = vpop.permute.xlu0 %647
      %649 = vrot.lane.b32.xlu0 %v636, 122
      %v650 = vpop.permute.xlu0 %649
      %651 = vrot.lane.b32.xlu0 %v637, 122
      %v652 = vpop.permute.xlu0 %651
      %653 = vrot.lane.b32.xlu0 %v638, 122
      %v654 = vpop.permute.xlu0 %653
      %655 = vrot.lane.b32.xlu0 %v639, 122
      %v656 = vpop.permute.xlu0 %655
      %657 = vrot.lane.b32.xlu0 %v640, 122
      %v658 = vpop.permute.xlu0 %657
      %vm659 = vcmask 998400
      %v660 = vsel %vm659, %v648, %v650
      %v661 = vsel %vm659, %v650, %v652
      %v662 = vsel %vm659, %v654, %v656
      %v663 = vsel %vm659, %v656, %v658
      %v668 = vadd.f32 %v623, %v660
      %v669 = vadd.f32 %v624, %v661
      %v670 = vadd.f32 %v625, %v662
      %v671 = vadd.f32 %v626, %v663
      %v672 = vld [vmem:[%s3] sm:$0xff]
      %v673 = vld [vmem:[%s3 + $0x8] sm:$0xff]
      %v674 = vld [vmem:[%s4] sm:$0xff]
      %v675 = vld [vmem:[%s4 + $0x8] sm:$0xff]
      %v676 = vadd.f32 %v668, %v669
      %v677 = vadd.f32 %v676, %v670
      %v678 = vadd.f32 %v677, %v671
      %679 = vadd.xlane.f32.xlu0 %v678
      %v680 = vpop.xlane.xlu0 %679
      %v681 = vrot.slane %v680, 4
      %v682 = vadd.f32 %v680, %v681
      %v683 = vrot.slane %v682, 2
      %v684 = vadd.f32 %v682, %v683
      %v685 = vrot.slane %v684, 1
      %v686 = vadd.f32 %v684, %v685
      %s687 = vtos %v686
      %v688 = vstv %s687
      %v689 = vrcp.pop 4096.0
      %v690 = vmul.f32 %v688, %v689
      %v691 = vsub.f32 %v668, %v690
      %v692 = vsub.f32 %v669, %v690
      %v693 = vsub.f32 %v670, %v690
      %v694 = vsub.f32 %v671, %v690
      %v695 = vmul.f32 %v691, %v691
      %v696 = vmul.f32 %v692, %v692
      %v697 = vmul.f32 %v693, %v693
      %v698 = vmul.f32 %v694, %v694
      %v699 = vadd.f32 %v695, %v696
      %v700 = vadd.f32 %v699, %v697
      %v701 = vadd.f32 %v700, %v698
      %702 = vadd.xlane.f32.xlu0 %v701
      %v703 = vpop.xlane.xlu0 %702
      %v704 = vrot.slane %v703, 4
      %v705 = vadd.f32 %v703, %v704
      %v706 = vrot.slane %v705, 2
      %v707 = vadd.f32 %v705, %v706
      %v708 = vrot.slane %v707, 1
      %v709 = vadd.f32 %v707, %v708
      %s710 = vtos %v709
      %v711 = vstv %s710
      %v712 = vmul.f32 %v711, %v689
      %v713 = vadd.f32 %v712, 1e-05
      %v714 = vrsqrt.pop %v713
      %v715 = vmul.f32 %v691, %v714
      %v716 = vmul.f32 %v692, %v714
      %v717 = vmul.f32 %v693, %v714
      %v718 = vmul.f32 %v694, %v714
      %720 = vset.pattern.permute.xlu0 0
      %721 = vperm.xlu0 %720, %v672
      %v722 = vpop.permute.xlu0 %721
      %725 = vset.pattern.permute.xlu0 0
      %726 = vperm.xlu0 %725, %v673
      %v727 = vpop.permute.xlu0 %726
      %v729 = vmul.f32 %v715, %v722
      %v730 = vmul.f32 %v716, %v722
      %v731 = vmul.f32 %v717, %v727
      %v732 = vmul.f32 %v718, %v727
      %734 = vset.pattern.permute.xlu0 0
      %735 = vperm.xlu0 %734, %v674
      %v736 = vpop.permute.xlu0 %735
      %739 = vset.pattern.permute.xlu0 0
      %740 = vperm.xlu0 %739, %v675
      %v741 = vpop.permute.xlu0 %740
      %v743 = vadd.f32 %v729, %v736
      %v744 = vadd.f32 %v730, %v736
      %v745 = vadd.f32 %v731, %v741
      %v746 = vadd.f32 %v732, %v741
      %v747 = vld [vmem:[%s5] sm:$0xff]
      %v748 = vld [vmem:[%s5 + $0x8] sm:$0xff]
      %v749 = vld [vmem:[%s5 + $0x10] sm:$0xff]
      %v750 = vld [vmem:[%s5 + $0x18] sm:$0xff]
      %v751 = vld [vmem:[%s6] sm:$0xff]
      %v752 = vld [vmem:[%s6 + $0x8] sm:$0xff]
      %v753 = vld [vmem:[%s6 + $0x10] sm:$0xff]
      %v754 = vld [vmem:[%s6 + $0x18] sm:$0xff]
      %756 = vset.pattern.permute.xlu0 0
      %757 = vperm.xlu0 %756, %v751
      %v758 = vpop.permute.xlu0 %757
      %761 = vset.pattern.permute.xlu0 0
      %762 = vperm.xlu0 %761, %v752
      %v763 = vpop.permute.xlu0 %762
      %766 = vset.pattern.permute.xlu0 0
      %767 = vperm.xlu0 %766, %v753
      %v768 = vpop.permute.xlu0 %767
      %771 = vset.pattern.permute.xlu0 0
      %772 = vperm.xlu0 %771, %v754
      %v773 = vpop.permute.xlu0 %772
      %vm775 = vcmask 130048
      %v777 = vsel %vm775, %v747, 0
      %v780 = vsel %vm775, %v748, 0
      %v783 = vsel %vm775, %v749, 0
      %v786 = vsel %vm775, %v750, 0
      %788 = vmatprep.subr.mxu0 %v744
      %789 = vmatpush1.msra.mxu0 %v743
      %790 = vmatprep.subr.mxu0 %v746
      %791 = vmatpush1.msra.mxu0 %v745
      %792 = vmatprep.subr.mxu0 0.0
      %793 = vmatpush1.msra.mxu0 0.0
      %794 = vmatprep.subr.mxu0 0.0
      %795 = vmatpush1.msra.mxu0 0.0
      %796 = vmatprep.subr.mxu0 0.0
      %797 = vmatpush1.msra.mxu0 0.0
      %798 = vmatprep.subr.mxu0 0.0
      %799 = vmatpush1.msra.mxu0 0.0
      %800 = vmatprep.subr.mxu0 0.0
      %801 = vmatpush1.msra.mxu0 0.0
      %802 = vmatprep.subr.mxu0 0.0
      %803 = vmatpush1.msra.mxu0 0.0
      %804 = vmatprep.subr.mxu0 0.0
      %805 = vmatpush1.msra.mxu0 0.0
      %806 = vmatprep.subr.mxu0 0.0
      %807 = vmatpush1.msra.mxu0 0.0
      %808 = vmatprep.subr.mxu0 0.0
      %809 = vmatpush1.msra.mxu0 0.0
      %810 = vmatprep.subr.mxu0 0.0
      %811 = vmatpush1.msra.mxu0 0.0
      %812 = vmatprep.subr.mxu0 0.0
      %813 = vmatpush1.msra.mxu0 0.0
      %814 = vmatprep.subr.mxu0 0.0
      %815 = vmatpush1.msra.mxu0 0.0
      %816 = vmatprep.subr.mxu0 0.0
      %817 = vmatpush1.msra.mxu0 0.0
      %818 = vmatprep.subr.mxu0 0.0
      %819 = vmatpush1.msra.mxu0 0.0
      %820 = vmatprep.subr.mxu0 0.0
      %821 = vmatpush1.msra.mxu0 0.0
      %822 = vmatprep.subr.mxu0 0.0
      %823 = vmatpush1.msra.mxu0 0.0
      %824 = vmatprep.subr.mxu0 0.0
      %825 = vmatpush1.msra.mxu0 0.0
      %826 = vmatprep.subr.mxu0 0.0
      %827 = vmatpush1.msra.mxu0 0.0
      %828 = vmatprep.subr.mxu0 0.0
      %829 = vmatpush1.msra.mxu0 0.0
      %830 = vmatprep.subr.mxu0 0.0
      %831 = vmatpush1.msra.mxu0 0.0
      %832 = vmatprep.subr.mxu0 0.0
      %833 = vmatpush1.msra.mxu0 0.0
      %834 = vmatprep.subr.mxu0 0.0
      %835 = vmatpush1.msra.mxu0 0.0
      %836 = vmatprep.subr.mxu0 0.0
      %837 = vmatpush1.msra.mxu0 0.0
      %838 = vmatprep.subr.mxu0 0.0
      %839 = vmatpush1.msra.mxu0 0.0
      %840 = vmatprep.subr.mxu0 0.0
      %841 = vmatpush1.msra.mxu0 0.0
      %842 = vmatprep.subr.mxu0 0.0
      %843 = vmatpush1.msra.mxu0 0.0
      %844 = vmatprep.subr.mxu0 0.0
      %845 = vmatpush1.msra.mxu0 0.0
      %846 = vmatprep.subr.mxu0 0.0
      %847 = vmatpush1.msra.mxu0 0.0
      %848 = vmatprep.subr.mxu0 0.0
      %849 = vmatpush1.msra.mxu0 0.0
      %850 = vmatprep.subr.mxu0 0.0
      %851 = vmatpush1.msra.mxu0 0.0
      %852 = vmatprep.mubr.f32.mxu0 0.0
      %853 = vmatmul.mubr.f32.gmra.mrb[0].mxu0 %v777
      %v854 = vpop.f32.mrb[0].mxu0
      %v855 = vadd.f32 %v758, %v854
      %v856 = vpop.f32.mrb[0].mxu0
      %v857 = vadd.f32 %v758, %v856
      %858 = vmatprep.mubr.f32.mxu0 0.0
      %859 = vmatmul.mubr.f32.gmra.mrb[0].mxu0 %v780
      %v860 = vpop.f32.mrb[0].mxu0
      %v861 = vadd.f32 %v763, %v860
      %v862 = vpop.f32.mrb[0].mxu0
      %v863 = vadd.f32 %v763, %v862
      %864 = vmatprep.mubr.f32.mxu0 0.0
      %865 = vmatmul.mubr.f32.gmra.mrb[0].mxu0 %v783
      %v866 = vpop.f32.mrb[0].mxu0
      %v867 = vadd.f32 %v768, %v866
      %v868 = vpop.f32.mrb[0].mxu0
      %v869 = vadd.f32 %v768, %v868
      %870 = vmatprep.mubr.f32.mxu0 0.0
      %871 = vmatmul.mubr.f32.gmra.mrb[0].mxu0 %v786
      %v872 = vpop.f32.mrb[0].mxu0
      %v873 = vadd.f32 %v773, %v872
      %v874 = vpop.f32.mrb[0].mxu0
      %v875 = vadd.f32 %v773, %v874
      %876 = vdwg.mxu0
      %v877 = vmul.f32 %v855, 0.5
      %v878 = vmul.f32 %v857, 0.5
      %v879 = vmul.f32 %v861, 0.5
      %v880 = vmul.f32 %v863, 0.5
      %v881 = vmul.f32 %v867, 0.5
      %v882 = vmul.f32 %v869, 0.5
      %v883 = vmul.f32 %v873, 0.5
      %v884 = vmul.f32 %v875, 0.5
      %v885 = vmul.f32 %v855, 0.70710677
      %v886 = vmul.f32 %v857, 0.70710677
      %v887 = vmul.f32 %v861, 0.70710677
      %v888 = vmul.f32 %v863, 0.70710677
      %v889 = vmul.f32 %v867, 0.70710677
      %v890 = vmul.f32 %v869, 0.70710677
      %v891 = vmul.f32 %v873, 0.70710677
      %v892 = vmul.f32 %v875, 0.70710677
      %v893 = vand.u32 2147483647, %v885
      %v894 = vand.u32 2147483647, %v886
      %v895 = vand.u32 2147483647, %v887
      %v896 = vand.u32 2147483647, %v888
      %v897 = vand.u32 2147483647, %v889
      %v898 = vand.u32 2147483647, %v890
      %v899 = vand.u32 2147483647, %v891
      %v900 = vand.u32 2147483647, %v892
      %v901 = vmul.f32 %v893, 0.3275911
      %v902 = vmul.f32 %v894, 0.3275911
      %v903 = vmul.f32 %v895, 0.3275911
      %v904 = vmul.f32 %v896, 0.3275911
      %v905 = vmul.f32 %v897, 0.3275911
      %v906 = vmul.f32 %v898, 0.3275911
      %v907 = vmul.f32 %v899, 0.3275911
      %v908 = vmul.f32 %v900, 0.3275911
      %v909 = vadd.f32 %v901, 1.0
      %v910 = vadd.f32 %v902, 1.0
      %v911 = vadd.f32 %v903, 1.0
      %v912 = vadd.f32 %v904, 1.0
      %v913 = vadd.f32 %v905, 1.0
      %v914 = vadd.f32 %v906, 1.0
      %v915 = vadd.f32 %v907, 1.0
      %v916 = vadd.f32 %v908, 1.0
      %v917 = vrcp.pop %v909
      %v918 = vmul.f32 1.0, %v917
      %v919 = vrcp.pop %v910
      %v920 = vmul.f32 1.0, %v919
      %v921 = vrcp.pop %v911
      %v922 = vmul.f32 1.0, %v921
      %v923 = vrcp.pop %v912
      %v924 = vmul.f32 1.0, %v923
      %v925 = vrcp.pop %v913
      %v926 = vmul.f32 1.0, %v925
      %v927 = vrcp.pop %v914
      %v928 = vmul.f32 1.0, %v927
      %v929 = vrcp.pop %v915
      %v930 = vmul.f32 1.0, %v929
      %v931 = vrcp.pop %v916
      %v932 = vmul.f32 1.0, %v931
      %v933 = vmul.f32 %v918, 1.0614054
      %v934 = vmul.f32 %v920, 1.0614054
      %v935 = vmul.f32 %v922, 1.0614054
      %v936 = vmul.f32 %v924, 1.0614054
      %v937 = vmul.f32 %v926, 1.0614054
      %v938 = vmul.f32 %v928, 1.0614054
      %v939 = vmul.f32 %v930, 1.0614054
      %v940 = vmul.f32 %v932, 1.0614054
      %v941 = vadd.f32 %v933, -1.4531521
      %v942 = vadd.f32 %v934, -1.4531521
      %v943 = vadd.f32 %v935, -1.4531521
      %v944 = vadd.f32 %v936, -1.4531521
      %v945 = vadd.f32 %v937, -1.4531521
      %v946 = vadd.f32 %v938, -1.4531521
      %v947 = vadd.f32 %v939, -1.4531521
      %v948 = vadd.f32 %v940, -1.4531521
      %v949 = vmul.f32 %v941, %v918
      %v950 = vmul.f32 %v942, %v920
      %v951 = vmul.f32 %v943, %v922
      %v952 = vmul.f32 %v944, %v924
      %v953 = vmul.f32 %v945, %v926
      %v954 = vmul.f32 %v946, %v928
      %v955 = vmul.f32 %v947, %v930
      %v956 = vmul.f32 %v948, %v932
      %v957 = vadd.f32 %v949, 1.4214138
      %v958 = vadd.f32 %v950, 1.4214138
      %v959 = vadd.f32 %v951, 1.4214138
      %v960 = vadd.f32 %v952, 1.4214138
      %v961 = vadd.f32 %v953, 1.4214138
      %v962 = vadd.f32 %v954, 1.4214138
      %v963 = vadd.f32 %v955, 1.4214138
      %v964 = vadd.f32 %v956, 1.4214138
      %v965 = vmul.f32 %v957, %v918
      %v966 = vmul.f32 %v958, %v920
      %v967 = vmul.f32 %v959, %v922
      %v968 = vmul.f32 %v960, %v924
      %v969 = vmul.f32 %v961, %v926
      %v970 = vmul.f32 %v962, %v928
      %v971 = vmul.f32 %v963, %v930
      %v972 = vmul.f32 %v964, %v932
      %v973 = vadd.f32 %v965, -0.28449672
      %v974 = vadd.f32 %v966, -0.28449672
      %v975 = vadd.f32 %v967, -0.28449672
      %v976 = vadd.f32 %v968, -0.28449672
      %v977 = vadd.f32 %v969, -0.28449672
      %v978 = vadd.f32 %v970, -0.28449672
      %v979 = vadd.f32 %v971, -0.28449672
      %v980 = vadd.f32 %v972, -0.28449672
      %v981 = vmul.f32 %v973, %v918
      %v982 = vmul.f32 %v974, %v920
      %v983 = vmul.f32 %v975, %v922
      %v984 = vmul.f32 %v976, %v924
      %v985 = vmul.f32 %v977, %v926
      %v986 = vmul.f32 %v978, %v928
      %v987 = vmul.f32 %v979, %v930
      %v988 = vmul.f32 %v980, %v932
      %v989 = vadd.f32 %v981, 0.2548296
      %v990 = vadd.f32 %v982, 0.2548296
      %v991 = vadd.f32 %v983, 0.2548296
      %v992 = vadd.f32 %v984, 0.2548296
      %v993 = vadd.f32 %v985, 0.2548296
      %v994 = vadd.f32 %v986, 0.2548296
      %v995 = vadd.f32 %v987, 0.2548296
      %v996 = vadd.f32 %v988, 0.2548296
      %v997 = vmul.f32 %v989, %v918
      %v998 = vmul.f32 %v990, %v920
      %v999 = vmul.f32 %v991, %v922
      %v1000 = vmul.f32 %v992, %v924
      %v1001 = vmul.f32 %v993, %v926
      %v1002 = vmul.f32 %v994, %v928
      %v1003 = vmul.f32 %v995, %v930
      %v1004 = vmul.f32 %v996, %v932
      %v1005 = vsub.f32 0.0, %v893
      %v1006 = vsub.f32 0.0, %v894
      %v1007 = vsub.f32 0.0, %v895
      %v1008 = vsub.f32 0.0, %v896
      %v1009 = vsub.f32 0.0, %v897
      %v1010 = vsub.f32 0.0, %v898
      %v1011 = vsub.f32 0.0, %v899
      %v1012 = vsub.f32 0.0, %v900
      %v1013 = vmul.f32 %v1005, %v893
      %v1014 = vmul.f32 %v1006, %v894
      %v1015 = vmul.f32 %v1007, %v895
      %v1016 = vmul.f32 %v1008, %v896
      %v1017 = vmul.f32 %v1009, %v897
      %v1018 = vmul.f32 %v1010, %v898
      %v1019 = vmul.f32 %v1011, %v899
      %v1020 = vmul.f32 %v1012, %v900
      %v1021 = vmul.f32 %v1013, 1.442695
      %v1022 = vpow.pop %v1021
      %v1023 = vmul.f32 %v1014, 1.442695
      %v1024 = vpow.pop %v1023
      %v1025 = vmul.f32 %v1015, 1.442695
      %v1026 = vpow.pop %v1025
      %v1027 = vmul.f32 %v1016, 1.442695
      %v1028 = vpow.pop %v1027
      %v1029 = vmul.f32 %v1017, 1.442695
      %v1030 = vpow.pop %v1029
      %v1031 = vmul.f32 %v1018, 1.442695
      %v1032 = vpow.pop %v1031
      %v1033 = vmul.f32 %v1019, 1.442695
      %v1034 = vpow.pop %v1033
      %v1035 = vmul.f32 %v1020, 1.442695
      %v1036 = vpow.pop %v1035
      %v1037 = vmul.f32 %v997, %v1022
      %v1038 = vmul.f32 %v998, %v1024
      %v1039 = vmul.f32 %v999, %v1026
      %v1040 = vmul.f32 %v1000, %v1028
      %v1041 = vmul.f32 %v1001, %v1030
      %v1042 = vmul.f32 %v1002, %v1032
      %v1043 = vmul.f32 %v1003, %v1034
      %v1044 = vmul.f32 %v1004, %v1036
      %v1045 = vsub.f32 1.0, %v1037
      %v1046 = vsub.f32 1.0, %v1038
      %v1047 = vsub.f32 1.0, %v1039
      %v1048 = vsub.f32 1.0, %v1040
      %v1049 = vsub.f32 1.0, %v1041
      %v1050 = vsub.f32 1.0, %v1042
      %v1051 = vsub.f32 1.0, %v1043
      %v1052 = vsub.f32 1.0, %v1044
      %vm1053 = vcmp.lt.f32.partialorder %v885, 0.0
      %vm1054 = vcmp.lt.f32.partialorder %v886, 0.0
      %vm1055 = vcmp.lt.f32.partialorder %v887, 0.0
      %vm1056 = vcmp.lt.f32.partialorder %v888, 0.0
      %vm1057 = vcmp.lt.f32.partialorder %v889, 0.0
      %vm1058 = vcmp.lt.f32.partialorder %v890, 0.0
      %vm1059 = vcmp.lt.f32.partialorder %v891, 0.0
      %vm1060 = vcmp.lt.f32.partialorder %v892, 0.0
      %v1061 = vsub.f32 0.0, %v1045
      %v1062 = vsub.f32 0.0, %v1046
      %v1063 = vsub.f32 0.0, %v1047
      %v1064 = vsub.f32 0.0, %v1048
      %v1065 = vsub.f32 0.0, %v1049
      %v1066 = vsub.f32 0.0, %v1050
      %v1067 = vsub.f32 0.0, %v1051
      %v1068 = vsub.f32 0.0, %v1052
      %v1069 = vsel %vm1053, %v1061, %v1045
      %v1070 = vsel %vm1054, %v1062, %v1046
      %v1071 = vsel %vm1055, %v1063, %v1047
      %v1072 = vsel %vm1056, %v1064, %v1048
      %v1073 = vsel %vm1057, %v1065, %v1049
      %v1074 = vsel %vm1058, %v1066, %v1050
      %v1075 = vsel %vm1059, %v1067, %v1051
      %v1076 = vsel %vm1060, %v1068, %v1052
      %v1077 = vadd.f32 %v1069, 1.0
      %v1078 = vadd.f32 %v1070, 1.0
      %v1079 = vadd.f32 %v1071, 1.0
      %v1080 = vadd.f32 %v1072, 1.0
      %v1081 = vadd.f32 %v1073, 1.0
      %v1082 = vadd.f32 %v1074, 1.0
      %v1083 = vadd.f32 %v1075, 1.0
      %v1084 = vadd.f32 %v1076, 1.0
      %v1085 = vmul.f32 %v877, %v1077
      %v1086 = vmul.f32 %v878, %v1078
      %v1087 = vmul.f32 %v879, %v1079
      %v1088 = vmul.f32 %v880, %v1080
      %v1089 = vmul.f32 %v881, %v1081
      %v1090 = vmul.f32 %v882, %v1082
      %v1091 = vmul.f32 %v883, %v1083
      %v1092 = vmul.f32 %v884, %v1084
      %v1093 = vld [vmem:[%s7] sm:$0xff]
      %v1094 = vld [vmem:[%s7 + $0x8] sm:$0xff]
      %v1095 = vld [vmem:[%s8] sm:$0xff]
      %v1096 = vld [vmem:[%s8 + $0x8] sm:$0xff]
      %1098 = vset.pattern.permute.xlu0 0
      %1099 = vperm.xlu0 %1098, %v1095
      %v1100 = vpop.permute.xlu0 %1099
      %1103 = vset.pattern.permute.xlu0 0
      %1104 = vperm.xlu0 %1103, %v1096
      %v1105 = vpop.permute.xlu0 %1104
      %vm1107 = vcmask 261120
      %v1109 = vsel %vm1107, %v1093, 0
      %v1112 = vsel %vm1107, %v1094, 0
      %1114 = vmatprep.subr.mxu0 %v1086
      %1115 = vmatpush1.msra.mxu0 %v1085
      %1116 = vmatprep.subr.mxu0 %v1088
      %1117 = vmatpush1.msra.mxu0 %v1087
      %1118 = vmatprep.subr.mxu0 %v1090
      %1119 = vmatpush1.msra.mxu0 %v1089
      %1120 = vmatprep.subr.mxu0 %v1092
      %1121 = vmatpush1.msra.mxu0 %v1091
      %1122 = vmatprep.subr.mxu0 0.0
      %1123 = vmatpush1.msra.mxu0 0.0
      %1124 = vmatprep.subr.mxu0 0.0
      %1125 = vmatpush1.msra.mxu0 0.0
      %1126 = vmatprep.subr.mxu0 0.0
      %1127 = vmatpush1.msra.mxu0 0.0
      %1128 = vmatprep.subr.mxu0 0.0
      %1129 = vmatpush1.msra.mxu0 0.0
      %1130 = vmatprep.subr.mxu0 0.0
      %1131 = vmatpush1.msra.mxu0 0.0
      %1132 = vmatprep.subr.mxu0 0.0
      %1133 = vmatpush1.msra.mxu0 0.0
      %1134 = vmatprep.subr.mxu0 0.0
      %1135 = vmatpush1.msra.mxu0 0.0
      %1136 = vmatprep.subr.mxu0 0.0
      %1137 = vmatpush1.msra.mxu0 0.0
      %1138 = vmatprep.subr.mxu0 0.0
      %1139 = vmatpush1.msra.mxu0 0.0
      %1140 = vmatprep.subr.mxu0 0.0
      %1141 = vmatpush1.msra.mxu0 0.0
      %1142 = vmatprep.subr.mxu0 0.0
      %1143 = vmatpush1.msra.mxu0 0.0
      %1144 = vmatprep.subr.mxu0 0.0
      %1145 = vmatpush1.msra.mxu0 0.0
      %1146 = vmatprep.subr.mxu0 0.0
      %1147 = vmatpush1.msra.mxu0 0.0
      %1148 = vmatprep.subr.mxu0 0.0
      %1149 = vmatpush1.msra.mxu0 0.0
      %1150 = vmatprep.subr.mxu0 0.0
      %1151 = vmatpush1.msra.mxu0 0.0
      %1152 = vmatprep.subr.mxu0 0.0
      %1153 = vmatpush1.msra.mxu0 0.0
      %1154 = vmatprep.subr.mxu0 0.0
      %1155 = vmatpush1.msra.mxu0 0.0
      %1156 = vmatprep.subr.mxu0 0.0
      %1157 = vmatpush1.msra.mxu0 0.0
      %1158 = vmatprep.subr.mxu0 0.0
      %1159 = vmatpush1.msra.mxu0 0.0
      %1160 = vmatprep.subr.mxu0 0.0
      %1161 = vmatpush1.msra.mxu0 0.0
      %1162 = vmatprep.subr.mxu0 0.0
      %1163 = vmatpush1.msra.mxu0 0.0
      %1164 = vmatprep.subr.mxu0 0.0
      %1165 = vmatpush1.msra.mxu0 0.0
      %1166 = vmatprep.subr.mxu0 0.0
      %1167 = vmatpush1.msra.mxu0 0.0
      %1168 = vmatprep.subr.mxu0 0.0
      %1169 = vmatpush1.msra.mxu0 0.0
      %1170 = vmatprep.subr.mxu0 0.0
      %1171 = vmatpush1.msra.mxu0 0.0
      %1172 = vmatprep.subr.mxu0 0.0
      %1173 = vmatpush1.msra.mxu0 0.0
      %1174 = vmatprep.subr.mxu0 0.0
      %1175 = vmatpush1.msra.mxu0 0.0
      %1176 = vmatprep.subr.mxu0 0.0
      %1177 = vmatpush1.msra.mxu0 0.0
      %1178 = vmatprep.mubr.f32.mxu0 0.0
      %1179 = vmatmul.mubr.f32.gmra.mrb[0].mxu0 %v1109
      %v1180 = vpop.f32.mrb[0].mxu0
      %v1181 = vadd.f32 %v1100, %v1180
      %v1182 = vpop.f32.mrb[0].mxu0
      %v1183 = vadd.f32 %v1100, %v1182
      %1184 = vmatprep.mubr.f32.mxu0 0.0
      %1185 = vmatmul.mubr.f32.gmra.mrb[0].mxu0 %v1112
      %v1186 = vpop.f32.mrb[0].mxu0
      %v1187 = vadd.f32 %v1105, %v1186
      %v1188 = vpop.f32.mrb[0].mxu0
      %v1189 = vadd.f32 %v1105, %v1188
      %1190 = vdwg.mxu0
      %v1191 = vld [vmem:[%s9] sm:$0xff]
      %v1192 = vld [vmem:[%s9 + $0x8] sm:$0xff]
      %1194 = vset.pattern.permute.xlu0 0
      %1195 = vperm.xlu0 %1194, %v1191
      %v1196 = vpop.permute.xlu0 %1195
      %1199 = vset.pattern.permute.xlu0 0
      %1200 = vperm.xlu0 %1199, %v1192
      %v1201 = vpop.permute.xlu0 %1200
      %v1203 = vmul.f32 %v1196, %v1181
      %v1204 = vmul.f32 %v1196, %v1183
      %v1205 = vmul.f32 %v1201, %v1187
      %v1206 = vmul.f32 %v1201, %v1189
      %v1207 = vld [vmem:[%s369] sm:$0xff]
      %v1208 = vld [vmem:[%s369 + $0x8] sm:$0xff]
      %v1209 = vld [vmem:[%s369 + $0x10] sm:$0xff]
      %v1210 = vld [vmem:[%s369 + $0x18] sm:$0xff]
      %v1211 = vadd.f32 %v1203, %v1207
      %v1212 = vadd.f32 %v1204, %v1208
      %v1213 = vadd.f32 %v1205, %v1209
      %v1214 = vadd.f32 %v1206, %v1210
      %1215 = vst [vmem:[%s379] sm:$0xff] %v1211
      %1216 = vst [vmem:[%s379 + $0x8] sm:$0xff] %v1212
      %1217 = vst [vmem:[%s379 + $0x10] sm:$0xff] %v1213
      %1218 = vst [vmem:[%s379 + $0x18] sm:$0xff] %v1214
      %p1219 = scmp.lt.s32.totalorder %s21, 1
      %s1220 = scalar_select %p1219, %s21, 1
      %s1221 = smul.addr %s1220, 4
      %s1222 = smul.addr %s1221, 8
      %s1223 = scalar_lea.vmem %s10, %s1222
      // Predicated region
      $region61: #{convnext_encoder.12} parent=59 // pred_check
        %p1224 = pneg %p259
      $region62: #{convnext_encoder.12} parent=59 // pred_check_branch
        %1226 = sbr.rel (%p1224) target = $region64
      $region63: #{convnext_encoder.12} parent=59 // pred_region
        _
      $region64: #{convnext_encoder.12} parent=59 // pred_fallthru
        _
    $region60: #{convnext_encoder.12} parent=5 // pred_fallthru
      _
    %p1227 = scmp.le.s32.totalorder 2, %s16
    // Predicated region
    $region65: #{convnext_encoder.12} parent=5 // pred_check
      %p1228 = pneg %p1227
    $region66: #{convnext_encoder.12} parent=5 // pred_check_branch
      %1230 = sbr.rel (%p1228) target = $region68
    $region67: #{convnext_encoder.12} parent=5 // pred_region
      %s1231 = ssub.s32 %s16, 2
      // Predicated region
      $region69: #{convnext_encoder.12} parent=67 // pred_check
        %p1232 = pneg %p265
      $region70: #{convnext_encoder.12} parent=67 // pred_check_branch
        %1234 = sbr.rel (%p1232) target = $region72
      $region71: #{convnext_encoder.12} parent=67 // pred_region
        %p1235 = scmp.lt.s32.totalorder %s22, 1
        %s1236 = scalar_select %p1235, %s22, 1
        %s1237 = smul.addr %s1236, 4
        %s1238 = smul.addr %s1237, 8
        %s1239 = scalar_lea.vmem %s10, %s1238
      $region72: #{convnext_encoder.12} parent=67 // pred_fallthru
        _
    $region68: #{convnext_encoder.12} parent=5 // pred_fallthru
      _
  $region6: #{convnext_encoder.12} parent=0 // loop_footer
    %s20 = sadd.s32 1, %s16
  $region7: #{convnext_encoder.12} parent=0 // loop_footer_branch
    %15 = sbr.rel target = $region3
  $region8: #{convnext_encoder.12} parent=0 // loop_exit
    _

// kernel: convnext_encoder.14
$region0: #{convnext_encoder.14}
  #allocation0 [shape = 'u32[]', space=smem, size = 0x4, offset = 0x4, fixed_abs, tag = 'smem constant byte address 0x4 - core index']
  #allocation1 [shape = 'u32[144,128]{1,0:T(1,128)}', space=vmem, size = 0x12000, scoped, tag = 'internal scratch']
  %s0 = inlined_call_operand.vmem [shape: f32[2,32,128], index: 0, kind: input, shape index: {}]
  %s1 = inlined_call_operand.vmem [shape: f32[32,32], index: 1, kind: input, shape index: {}]
  %s2 = inlined_call_operand.vmem [shape: f32[32,1], index: 2, kind: input, shape index: {}]
  %s3 = inlined_call_operand.vmem [shape: f32[2,32,128], index: 3, kind: output, shape index: {}]
  %s4 = sld [smem:[#allocation0]]
  $region45: #{convnext_encoder.14} parent=0
    _
  %s6 = ssub.s32 1, %s4
  %s7 = scalar_select 0, %s6, %s4
  loop: start=0, step=1, limit=4
  $region2: #{convnext_encoder.14} parent=0 // loop_pre_header
    _
  $region3: #{convnext_encoder.14} parent=0 // loop_header
    %s9 = sphi 0, %s13
    %p10 = scmp.ge.s32.totalorder %s9, 4
    %s19 = sphi 0, %s21
    %s22 = sphi 0, %s19
    %s23 = sphi 0, %s22
    %s39 = sphi 0, %s23
    %s43 = sphi 0, %s43
    %s45 = sphi 0, %s43
    %s46 = sphi 0, %s45
    %s60 = sphi 0, %s46
    %s64 = sphi 0, %s64
    %s66 = sphi 0, %s64
    %s67 = sphi 0, %s66
    %s81 = sphi 0, %s67
    %s87 = sphi 0, %s89
    %s90 = sphi 0, %s87
    %s91 = sphi 0, %s90
    %s107 = sphi 0, %s91
  $region4: #{convnext_encoder.14} parent=0 // loop_header_branch
    %12 = sbr.rel (%p10) target = $region8
  $region5: #{convnext_encoder.14} parent=0 // loop_body
    %s14 = ssub.s32 %s9, 1
    %s15 = ssub.s32 %s9, 2
    %s16 = sadd.s32 %s9, 1
    %s17 = ssub.s32 %s9, %s16
    %p18 = scmp.eq.s32.totalorder %s17, 0
    %s20 = sadd.s32 %s19, 1
    %s21 = scalar_select %p18, %s19, %s20
    %p24 = pneg %p18
    %p25 = scmp.eq.s32.totalorder %s9, 1
    %p26 = por %p24, %p25
    %p27 = scmp.ne.s32.totalorder %s19, %s22
    %p28 = scmp.eq.s32.totalorder %s9, 0
    %p29 = por %p27, %p28
    %p30 = scmp.ne.s32.totalorder %s19, %s22
    %p31 = scmp.eq.s32.totalorder %s14, 1
    %p32 = por %p30, %p31
    %p33 = scmp.ne.s32.totalorder %s22, %s23
    %p34 = scmp.eq.s32.totalorder %s14, 0
    %p35 = por %p33, %p34
    %p36 = scmp.ne.s32.totalorder %s22, %s23
    %p37 = scmp.eq.s32.totalorder %s15, 1
    %p38 = por %p36, %p37
    %p40 = scmp.ne.s32.totalorder %s23, %s39
    %p41 = scmp.eq.s32.totalorder %s15, 0
    %p42 = por %p40, %p41
    %s44 = sadd.s32 %s43, 1
    %p47 = scmp.eq.s32.totalorder %s9, 1
    %p48 = scmp.ne.s32.totalorder %s43, %s45
    %p49 = scmp.eq.s32.totalorder %s9, 0
    %p50 = por %p48, %p49
    %p51 = scmp.ne.s32.totalorder %s43, %s45
    %p52 = scmp.eq.s32.totalorder %s14, 1
    %p53 = por %p51, %p52
    %p54 = scmp.ne.s32.totalorder %s45, %s46
    %p55 = scmp.eq.s32.totalorder %s14, 0
    %p56 = por %p54, %p55
    %p57 = scmp.ne.s32.totalorder %s45, %s46
    %p58 = scmp.eq.s32.totalorder %s15, 1
    %p59 = por %p57, %p58
    %p61 = scmp.ne.s32.totalorder %s46, %s60
    %p62 = scmp.eq.s32.totalorder %s15, 0
    %p63 = por %p61, %p62
    %s65 = sadd.s32 %s64, 1
    %p68 = scmp.eq.s32.totalorder %s9, 1
    %p69 = scmp.ne.s32.totalorder %s64, %s66
    %p70 = scmp.eq.s32.totalorder %s9, 0
    %p71 = por %p69, %p70
    %p72 = scmp.ne.s32.totalorder %s64, %s66
    %p73 = scmp.eq.s32.totalorder %s14, 1
    %p74 = por %p72, %p73
    %p75 = scmp.ne.s32.totalorder %s66, %s67
    %p76 = scmp.eq.s32.totalorder %s14, 0
    %p77 = por %p75, %p76
    %p78 = scmp.ne.s32.totalorder %s66, %s67
    %p79 = scmp.eq.s32.totalorder %s15, 1
    %p80 = por %p78, %p79
    %p82 = scmp.ne.s32.totalorder %s67, %s81
    %p83 = scmp.eq.s32.totalorder %s15, 0
    %p84 = por %p82, %p83
    %s85 = ssub.s32 %s9, %s16
    %p86 = scmp.eq.s32.totalorder %s85, 0
    %s88 = sadd.s32 %s87, 1
    %s89 = scalar_select %p86, %s87, %s88
    %p92 = pneg %p86
    %p93 = scmp.eq.s32.totalorder %s9, 1
    %p94 = por %p92, %p93
    %p95 = scmp.ne.s32.totalorder %s87, %s90
    %p96 = scmp.eq.s32.totalorder %s9, 0
    %p97 = por %p95, %p96
    %p98 = scmp.ne.s32.totalorder %s87, %s90
    %p99 = scmp.eq.s32.totalorder %s14, 1
    %p100 = por %p98, %p99
    %p101 = scmp.ne.s32.totalorder %s90, %s91
    %p102 = scmp.eq.s32.totalorder %s14, 0
    %p103 = por %p101, %p102
    %p104 = scmp.ne.s32.totalorder %s90, %s91
    %p105 = scmp.eq.s32.totalorder %s15, 1
    %p106 = por %p104, %p105
    %p108 = scmp.ne.s32.totalorder %s91, %s107
    %p109 = scmp.eq.s32.totalorder %s15, 0
    %p110 = por %p108, %p109
    %p111 = scmp.le.s32.totalorder 1, %s9
    %p112 = scmp.lt.s32.totalorder %s9, 3
    %p113 = pnand %p111, %p112
    %p114 = pneg %p113
    // Predicated region
    $region9: #{convnext_encoder.14} parent=5 // pred_check
      _
    $region10: #{convnext_encoder.14} parent=5 // pred_check_branch
      %116 = sbr.rel (%p113) target = $region12
    $region11: #{convnext_encoder.14} parent=5 // pred_region
      %s117 = ssub.s32 %s9, 1
      // Predicated region
      $region13: #{convnext_encoder.14} parent=11 // pred_check
        %p118 = pneg %p56
      $region14: #{convnext_encoder.14} parent=11 // pred_check_branch
        %120 = sbr.rel (%p118) target = $region16
      $region15: #{convnext_encoder.14} parent=11 // pred_region
        _
      $region16: #{convnext_encoder.14} parent=11 // pred_fallthru
        _
      // Predicated region
      $region17: #{convnext_encoder.14} parent=11 // pred_check
        %p121 = pneg %p77
      $region18: #{convnext_encoder.14} parent=11 // pred_check_branch
        %123 = sbr.rel (%p121) target = $region20
      $region19: #{convnext_encoder.14} parent=11 // pred_region
        _
      $region20: #{convnext_encoder.14} parent=11 // pred_fallthru
        _
    $region12: #{convnext_encoder.14} parent=5 // pred_fallthru
      _
    %p124 = scmp.lt.s32.totalorder %s9, 2
    // Predicated region
    $region21: #{convnext_encoder.14} parent=5 // pred_check
      %p125 = pneg %p124
    $region22: #{convnext_encoder.14} parent=5 // pred_check_branch
      %127 = sbr.rel (%p125) target = $region24
    $region23: #{convnext_encoder.14} parent=5 // pred_region
      // Predicated region
      $region25: #{convnext_encoder.14} parent=23 // pred_check
        %p128 = pneg %p29
      $region26: #{convnext_encoder.14} parent=23 // pred_check_branch
        %130 = sbr.rel (%p128) target = $region28
      $region27: #{convnext_encoder.14} parent=23 // pred_region
        %p131 = scmp.lt.s32.totalorder %s9, 1
        %s132 = scalar_select %p131, %s9, 1
        %s133 = smul.addr %s132, 4
        %s134 = smul.addr %s133, 8
        %s135 = scalar_lea.vmem %s0, %s134
      $region28: #{convnext_encoder.14} parent=23 // pred_fallthru
        _
    $region24: #{convnext_encoder.14} parent=5 // pred_fallthru
      _
    %p136 = scmp.le.s32.totalorder 1, %s9
    %p137 = scmp.lt.s32.totalorder %s9, 3
    %p138 = pnand %p136, %p137
    %p139 = pneg %p138
    // Predicated region
    $region29: #{convnext_encoder.14} parent=5 // pred_check
      _
    $region30: #{convnext_encoder.14} parent=5 // pred_check_branch
      %141 = sbr.rel (%p138) target = $region32
    $region31: #{convnext_encoder.14} parent=5 // pred_region
      %s142 = ssub.s32 %s9, 1
      %p143 = scmp.lt.s32.totalorder %s14, 1
      %s144 = scalar_select %p143, %s14, 1
      %s145 = smul.addr %s144, 4
      %s146 = smul.addr %s145, 8
      %s147 = scalar_lea.vmem %s0, %s146
      %p148 = pneg %p35
      %p149 = pneg %p32
      %p150 = pneg %p56
      %p151 = pneg %p53
      %p152 = pneg %p77
      %p153 = pneg %p74
      %p154 = pneg %p103
      %p155 = pneg %p100
      %p156 = scmp.lt.s32.totalorder %s14, 1
      %s157 = scalar_select %p156, %s14, 1
      %s158 = smul.addr %s157, 4
      %s159 = smul.addr %s158, 8
      %s160 = scalar_lea.vmem %s3, %s159
      %p161 = scmp.lt.s32.totalorder %s14, 1
      %s162 = scalar_select %p161, %s14, 1
      %s163 = smul.addr %s162, 4
      %s164 = smul.addr %s163, 8
      %s165 = scalar_lea.vmem %s0, %s164
      %p166 = scmp.lt.s32.totalorder %s14, 1
      %s167 = scalar_select %p166, %s14, 1
      %s168 = smul.addr %s167, 4
      %s169 = smul.addr %s168, 8
      %s170 = scalar_lea.vmem %s3, %s169
      %v171 = vld [vmem:[%s1] sm:$0xff]
      %v172 = vld [vmem:[%s1 + $0x8] sm:$0xff]
      %v173 = vld [vmem:[%s1 + $0x10] sm:$0xff]
      %v174 = vld [vmem:[%s1 + $0x18] sm:$0xff]
      %v175 = vld [vmem:[%s165] sm:$0xff]
      %v176 = vld [vmem:[%s165 + $0x8] sm:$0xff]
      %v177 = vld [vmem:[%s165 + $0x10] sm:$0xff]
      %v178 = vld [vmem:[%s165 + $0x18] sm:$0xff]
      %v179 = vld [vmem:[%s2] sm:$0xff]
      %v180 = vld [vmem:[%s2 + $0x8] sm:$0xff]
      %v181 = vld [vmem:[%s2 + $0x10] sm:$0xff]
      %v182 = vld [vmem:[%s2 + $0x18] sm:$0xff]
      %184 = vset.pattern.permute.xlu0 0
      %185 = vperm.xlu0 %184, %v179
      %v186 = vpop.permute.xlu0 %185
      %189 = vset.pattern.permute.xlu0 0
      %190 = vperm.xlu0 %189, %v180
      %v191 = vpop.permute.xlu0 %190
      %194 = vset.pattern.permute.xlu0 0
      %195 = vperm.xlu0 %194, %v181
      %v196 = vpop.permute.xlu0 %195
      %199 = vset.pattern.permute.xlu0 0
      %200 = vperm.xlu0 %199, %v182
      %v201 = vpop.permute.xlu0 %200
      %vm203 = vcmask 261120
      %v205 = vsel %vm203, %v171, 0
      %v208 = vsel %vm203, %v172, 0
      %v211 = vsel %vm203, %v173, 0
      %v214 = vsel %vm203, %v174, 0
      %216 = vmatprep.subr.mxu0 0.0
      %217 = vmatpush1.msra.mxu0 %v175
      %218 = vmatprep.subr.mxu0 0.0
      %219 = vmatpush1.msra.mxu0 %v176
      %220 = vmatprep.subr.mxu0 0.0
      %221 = vmatpush1.msra.mxu0 %v177
      %222 = vmatprep.subr.mxu0 0.0
      %223 = vmatpush1.msra.mxu0 %v178
      %224 = vmatprep.subr.mxu0 0.0
      %225 = vmatpush1.msra.mxu0 0.0
      %226 = vmatprep.subr.mxu0 0.0
      %227 = vmatpush1.msra.mxu0 0.0
      %228 = vmatprep.subr.mxu0 0.0
      %229 = vmatpush1.msra.mxu0 0.0
      %230 = vmatprep.subr.mxu0 0.0
      %231 = vmatpush1.msra.mxu0 0.0
      %232 = vmatprep.subr.mxu0 0.0
      %233 = vmatpush1.msra.mxu0 0.0
      %234 = vmatprep.subr.mxu0 0.0
      %235 = vmatpush1.msra.mxu0 0.0
      %236 = vmatprep.subr.mxu0 0.0
      %237 = vmatpush1.msra.mxu0 0.0
      %238 = vmatprep.subr.mxu0 0.0
      %239 = vmatpush1.msra.mxu0 0.0
      %240 = vmatprep.subr.mxu0 0.0
      %241 = vmatpush1.msra.mxu0 0.0
      %242 = vmatprep.subr.mxu0 0.0
      %243 = vmatpush1.msra.mxu0 0.0
      %244 = vmatprep.subr.mxu0 0.0
      %245 = vmatpush1.msra.mxu0 0.0
      %246 = vmatprep.subr.mxu0 0.0
      %247 = vmatpush1.msra.mxu0 0.0
      %248 = vmatprep.subr.mxu0 0.0
      %249 = vmatpush1.msra.mxu0 0.0
      %250 = vmatprep.subr.mxu0 0.0
      %251 = vmatpush1.msra.mxu0 0.0
      %252 = vmatprep.subr.mxu0 0.0
      %253 = vmatpush1.msra.mxu0 0.0
      %254 = vmatprep.subr.mxu0 0.0
      %255 = vmatpush1.msra.mxu0 0.0
      %256 = vmatprep.subr.mxu0 0.0
      %257 = vmatpush1.msra.mxu0 0.0
      %258 = vmatprep.subr.mxu0 0.0
      %259 = vmatpush1.msra.mxu0 0.0
      %260 = vmatprep.subr.mxu0 0.0
      %261 = vmatpush1.msra.mxu0 0.0
      %262 = vmatprep.subr.mxu0 0.0
      %263 = vmatpush1.msra.mxu0 0.0
      %264 = vmatprep.subr.mxu0 0.0
      %265 = vmatpush1.msra.mxu0 0.0
      %266 = vmatprep.subr.mxu0 0.0
      %267 = vmatpush1.msra.mxu0 0.0
      %268 = vmatprep.subr.mxu0 0.0
      %269 = vmatpush1.msra.mxu0 0.0
      %270 = vmatprep.subr.mxu0 0.0
      %271 = vmatpush1.msra.mxu0 0.0
      %272 = vmatprep.subr.mxu0 0.0
      %273 = vmatpush1.msra.mxu0 0.0
      %274 = vmatprep.subr.mxu0 0.0
      %275 = vmatpush1.msra.mxu0 0.0
      %276 = vmatprep.subr.mxu0 0.0
      %277 = vmatpush1.msra.mxu0 0.0
      %278 = vmatprep.subr.mxu0 0.0
      %279 = vmatpush1.msra.mxu0 0.0
      %280 = vmatprep.mubr.f32.mxu0 0.0
      %281 = vmatmul.mubr.f32.gmra.mrb[0].mxu0 %v205
      %v282 = vpop.f32.mrb[0].mxu0
      %v283 = vadd.f32 %v186, %v282
      %v284 = vpop.f32.mrb[0].mxu0
      %285 = vmatprep.mubr.f32.mxu0 0.0
      %286 = vmatmul.mubr.f32.gmra.mrb[0].mxu0 %v208
      %v287 = vpop.f32.mrb[0].mxu0
      %v288 = vadd.f32 %v191, %v287
      %v289 = vpop.f32.mrb[0].mxu0
      %290 = vmatprep.mubr.f32.mxu0 0.0
      %291 = vmatmul.mubr.f32.gmra.mrb[0].mxu0 %v211
      %v292 = vpop.f32.mrb[0].mxu0
      %v293 = vadd.f32 %v196, %v292
      %v294 = vpop.f32.mrb[0].mxu0
      %295 = vmatprep.mubr.f32.mxu0 0.0
      %296 = vmatmul.mubr.f32.gmra.mrb[0].mxu0 %v214
      %v297 = vpop.f32.mrb[0].mxu0
      %v298 = vadd.f32 %v201, %v297
      %v299 = vpop.f32.mrb[0].mxu0
      %300 = vdwg.mxu0
      %301 = vst [vmem:[%s170] sm:$0xff] %v283
      %302 = vst [vmem:[%s170 + $0x8] sm:$0xff] %v288
      %303 = vst [vmem:[%s170 + $0x10] sm:$0xff] %v293
      %304 = vst [vmem:[%s170 + $0x18] sm:$0xff] %v298
      %p305 = scmp.lt.s32.totalorder %s14, 1
      %s306 = scalar_select %p305, %s14, 1
      %s307 = smul.addr %s306, 4
      %s308 = smul.addr %s307, 8
      %s309 = scalar_lea.vmem %s3, %s308
      // Predicated region
      $region33: #{convnext_encoder.14} parent=31 // pred_check
        %p310 = pneg %p100
      $region34: #{convnext_encoder.14} parent=31 // pred_check_branch
        %312 = sbr.rel (%p310) target = $region36
      $region35: #{convnext_encoder.14} parent=31 // pred_region
        _
      $region36: #{convnext_encoder.14} parent=31 // pred_fallthru
        _
    $region32: #{convnext_encoder.14} parent=5 // pred_fallthru
      _
    %p313 = scmp.le.s32.totalorder 2, %s9
    // Predicated region
    $region37: #{convnext_encoder.14} parent=5 // pred_check
      %p314 = pneg %p313
    $region38: #{convnext_encoder.14} parent=5 // pred_check_branch
      %316 = sbr.rel (%p314) target = $region40
    $region39: #{convnext_encoder.14} parent=5 // pred_region
      %s317 = ssub.s32 %s9, 2
      // Predicated region
      $region41: #{convnext_encoder.14} parent=39 // pred_check
        %p318 = pneg %p106
      $region42: #{convnext_encoder.14} parent=39 // pred_check_branch
        %320 = sbr.rel (%p318) target = $region44
      $region43: #{convnext_encoder.14} parent=39 // pred_region
        %p321 = scmp.lt.s32.totalorder %s15, 1
        %s322 = scalar_select %p321, %s15, 1
        %s323 = smul.addr %s322, 4
        %s324 = smul.addr %s323, 8
        %s325 = scalar_lea.vmem %s3, %s324
      $region44: #{convnext_encoder.14} parent=39 // pred_fallthru
        _
    $region40: #{convnext_encoder.14} parent=5 // pred_fallthru
      _
  $region6: #{convnext_encoder.14} parent=0 // loop_footer
    %s13 = sadd.s32 1, %s9
  $region7: #{convnext_encoder.14} parent=0 // loop_footer_branch
    %8 = sbr.rel target = $region3
  $region8: #{convnext_encoder.14} parent=0 // loop_exit
    _

// kernel: convnext_encoder.15
$region0: #{convnext_encoder.15}
  #allocation0 [shape = 'u32[]', space=smem, size = 0x4, offset = 0x4, fixed_abs, tag = 'smem constant byte address 0x4 - core index']
  #allocation1 [shape = 'u32[144,128]{1,0:T(1,128)}', space=vmem, size = 0x12000, scoped, tag = 'internal scratch']
  %s0 = inlined_call_operand.vmem [shape: f32[2,32,128], index: 0, kind: input, shape index: {}]
  %s1 = inlined_call_operand.vmem [shape: f32[2,32,134], index: 1, kind: input, shape index: {}]
  %s2 = inlined_call_operand.vmem [shape: f32[32,7], index: 2, kind: input, shape index: {}]
  %s3 = inlined_call_operand.vmem [shape: f32[32,1], index: 3, kind: input, shape index: {}]
  %s4 = inlined_call_operand.vmem [shape: f32[32,1], index: 4, kind: input, shape index: {}]
  %s5 = inlined_call_operand.vmem [shape: f32[64,32], index: 5, kind: input, shape index: {}]
  %s6 = inlined_call_operand.vmem [shape: f32[64,1], index: 6, kind: input, shape index: {}]
  %s7 = inlined_call_operand.vmem [shape: f32[32,64], index: 7, kind: input, shape index: {}]
  %s8 = inlined_call_operand.vmem [shape: f32[32,1], index: 8, kind: input, shape index: {}]
  %s9 = inlined_call_operand.vmem [shape: f32[32,1], index: 9, kind: input, shape index: {}]
  %s10 = inlined_call_operand.hbm [shape: f32[2,32,128], index: 10, kind: output, shape index: {}]
  %s11 = sld [smem:[#allocation0]]
  $region73: #{convnext_encoder.15} parent=0
    _
  %s13 = ssub.s32 1, %s11
  %s14 = scalar_select 0, %s13, %s11
  $region1: #{convnext_encoder.15} parent=0
    #allocation2 [shape = 'u8[32768]{0}', space=vmem, size = 0x8000, scoped, tag = 'output window, operand 0']
    #allocation3 [shape = 's32[2]{0}', space=sflag, size = 0x8, scoped, tag = 'scoped memory for convnext_encoder.15']
    %15 = vsyncpa [#allocation3], 0
    %s16 = scalar_lea.sflag [#allocation3], 1
    %17 = vsyncpa %s16, 0
    loop: start=0, step=1, limit=4
    $region2: #{convnext_encoder.15} parent=1 // loop_pre_header
      _
    $region3: #{convnext_encoder.15} parent=1 // loop_header
      %s19 = sphi 0, %s23
      %p20 = scmp.ge.s32.totalorder %s19, 4
      %s29 = sphi 0, %s31
      %s32 = sphi 0, %s29
      %s33 = sphi 0, %s32
      %s49 = sphi 0, %s33
      %s55 = sphi 0, %s57
      %s58 = sphi 0, %s55
      %s59 = sphi 0, %s58
      %s75 = sphi 0, %s59
      %s79 = sphi 0, %s79
      %s81 = sphi 0, %s79
      %s82 = sphi 0, %s81
      %s96 = sphi 0, %s82
      %s100 = sphi 0, %s100
      %s102 = sphi 0, %s100
      %s103 = sphi 0, %s102
      %s117 = sphi 0, %s103
      %s121 = sphi 0, %s121
      %s123 = sphi 0, %s121
      %s124 = sphi 0, %s123
      %s138 = sphi 0, %s124
      %s142 = sphi 0, %s142
      %s144 = sphi 0, %s142
      %s145 = sphi 0, %s144
      %s159 = sphi 0, %s145
      %s163 = sphi 0, %s163
      %s165 = sphi 0, %s163
      %s166 = sphi 0, %s165
      %s180 = sphi 0, %s166
      %s184 = sphi 0, %s184
      %s186 = sphi 0, %s184
      %s187 = sphi 0, %s186
      %s201 = sphi 0, %s187
      %s205 = sphi 0, %s205
      %s207 = sphi 0, %s205
      %s208 = sphi 0, %s207
      %s222 = sphi 0, %s208
      %s226 = sphi 0, %s226
      %s228 = sphi 0, %s226
      %s229 = sphi 0, %s228
      %s243 = sphi 0, %s229
      %s249 = sphi 0, %s251
      %s252 = sphi 0, %s249
      %s253 = sphi 0, %s252
      %s269 = sphi 0, %s253
    $region4: #{convnext_encoder.15} parent=1 // loop_header_branch
      %22 = sbr.rel (%p20) target = $region8
    $region5: #{convnext_encoder.15} parent=1 // loop_body
      %s24 = ssub.s32 %s19, 1
      %s25 = ssub.s32 %s19, 2
      %s26 = sadd.s32 %s19, 1
      %s27 = ssub.s32 %s19, %s26
      %p28 = scmp.eq.s32.totalorder %s27, 0
      %s30 = sadd.s32 %s29, 1
      %s31 = scalar_select %p28, %s29, %s30
      %p34 = pneg %p28
      %p35 = scmp.eq.s32.totalorder %s19, 1
      %p36 = por %p34, %p35
      %p37 = scmp.ne.s32.totalorder %s29, %s32
      %p38 = scmp.eq.s32.totalorder %s19, 0
      %p39 = por %p37, %p38
      %p40 = scmp.ne.s32.totalorder %s29, %s32
      %p41 = scmp.eq.s32.totalorder %s24, 1
      %p42 = por %p40, %p41
      %p43 = scmp.ne.s32.totalorder %s32, %s33
      %p44 = scmp.eq.s32.totalorder %s24, 0
      %p45 = por %p43, %p44
      %p46 = scmp.ne.s32.totalorder %s32, %s33
      %p47 = scmp.eq.s32.totalorder %s25, 1
      %p48 = por %p46, %p47
      %p50 = scmp.ne.s32.totalorder %s33, %s49
      %p51 = scmp.eq.s32.totalorder %s25, 0
      %p52 = por %p50, %p51
      %s53 = ssub.s32 %s19, %s26
      %p54 = scmp.eq.s32.totalorder %s53, 0
      %s56 = sadd.s32 %s55, 1
      %s57 = scalar_select %p54, %s55, %s56
      %p60 = pneg %p54
      %p61 = scmp.eq.s32.totalorder %s19, 1
      %p62 = por %p60, %p61
      %p63 = scmp.ne.s32.totalorder %s55, %s58
      %p64 = scmp.eq.s32.totalorder %s19, 0
      %p65 = por %p63, %p64
      %p66 = scmp.ne.s32.totalorder %s55, %s58
      %p67 = scmp.eq.s32.totalorder %s24, 1
      %p68 = por %p66, %p67
      %p69 = scmp.ne.s32.totalorder %s58, %s59
      %p70 = scmp.eq.s32.totalorder %s24, 0
      %p71 = por %p69, %p70
      %p72 = scmp.ne.s32.totalorder %s58, %s59
      %p73 = scmp.eq.s32.totalorder %s25, 1
      %p74 = por %p72, %p73
      %p76 = scmp.ne.s32.totalorder %s59, %s75
      %p77 = scmp.eq.s32.totalorder %s25, 0
      %p78 = por %p76, %p77
      %s80 = sadd.s32 %s79, 1
      %p83 = scmp.eq.s32.totalorder %s19, 1
      %p84 = scmp.ne.s32.totalorder %s79, %s81
      %p85 = scmp.eq.s32.totalorder %s19, 0
      %p86 = por %p84, %p85
      %p87 = scmp.ne.s32.totalorder %s79, %s81
      %p88 = scmp.eq.s32.totalorder %s24, 1
      %p89 = por %p87, %p88
      %p90 = scmp.ne.s32.totalorder %s81, %s82
      %p91 = scmp.eq.s32.totalorder %s24, 0
      %p92 = por %p90, %p91
      %p93 = scmp.ne.s32.totalorder %s81, %s82
      %p94 = scmp.eq.s32.totalorder %s25, 1
      %p95 = por %p93, %p94
      %p97 = scmp.ne.s32.totalorder %s82, %s96
      %p98 = scmp.eq.s32.totalorder %s25, 0
      %p99 = por %p97, %p98
      %s101 = sadd.s32 %s100, 1
      %p104 = scmp.eq.s32.totalorder %s19, 1
      %p105 = scmp.ne.s32.totalorder %s100, %s102
      %p106 = scmp.eq.s32.totalorder %s19, 0
      %p107 = por %p105, %p106
      %p108 = scmp.ne.s32.totalorder %s100, %s102
      %p109 = scmp.eq.s32.totalorder %s24, 1
      %p110 = por %p108, %p109
      %p111 = scmp.ne.s32.totalorder %s102, %s103
      %p112 = scmp.eq.s32.totalorder %s24, 0
      %p113 = por %p111, %p112
      %p114 = scmp.ne.s32.totalorder %s102, %s103
      %p115 = scmp.eq.s32.totalorder %s25, 1
      %p116 = por %p114, %p115
      %p118 = scmp.ne.s32.totalorder %s103, %s117
      %p119 = scmp.eq.s32.totalorder %s25, 0
      %p120 = por %p118, %p119
      %s122 = sadd.s32 %s121, 1
      %p125 = scmp.eq.s32.totalorder %s19, 1
      %p126 = scmp.ne.s32.totalorder %s121, %s123
      %p127 = scmp.eq.s32.totalorder %s19, 0
      %p128 = por %p126, %p127
      %p129 = scmp.ne.s32.totalorder %s121, %s123
      %p130 = scmp.eq.s32.totalorder %s24, 1
      %p131 = por %p129, %p130
      %p132 = scmp.ne.s32.totalorder %s123, %s124
      %p133 = scmp.eq.s32.totalorder %s24, 0
      %p134 = por %p132, %p133
      %p135 = scmp.ne.s32.totalorder %s123, %s124
      %p136 = scmp.eq.s32.totalorder %s25, 1
      %p137 = por %p135, %p136
      %p139 = scmp.ne.s32.totalorder %s124, %s138
      %p140 = scmp.eq.s32.totalorder %s25, 0
      %p141 = por %p139, %p140
      %s143 = sadd.s32 %s142, 1
      %p146 = scmp.eq.s32.totalorder %s19, 1
      %p147 = scmp.ne.s32.totalorder %s142, %s144
      %p148 = scmp.eq.s32.totalorder %s19, 0
      %p149 = por %p147, %p148
      %p150 = scmp.ne.s32.totalorder %s142, %s144
      %p151 = scmp.eq.s32.totalorder %s24, 1
      %p152 = por %p150, %p151
      %p153 = scmp.ne.s32.totalorder %s144, %s145
      %p154 = scmp.eq.s32.totalorder %s24, 0
      %p155 = por %p153, %p154
      %p156 = scmp.ne.s32.totalorder %s144, %s145
      %p157 = scmp.eq.s32.totalorder %s25, 1
      %p158 = por %p156, %p157
      %p160 = scmp.ne.s32.totalorder %s145, %s159
      %p161 = scmp.eq.s32.totalorder %s25, 0
      %p162 = por %p160, %p161
      %s164 = sadd.s32 %s163, 1
      %p167 = scmp.eq.s32.totalorder %s19, 1
      %p168 = scmp.ne.s32.totalorder %s163, %s165
      %p169 = scmp.eq.s32.totalorder %s19, 0
      %p170 = por %p168, %p169
      %p171 = scmp.ne.s32.totalorder %s163, %s165
      %p172 = scmp.eq.s32.totalorder %s24, 1
      %p173 = por %p171, %p172
      %p174 = scmp.ne.s32.totalorder %s165, %s166
      %p175 = scmp.eq.s32.totalorder %s24, 0
      %p176 = por %p174, %p175
      %p177 = scmp.ne.s32.totalorder %s165, %s166
      %p178 = scmp.eq.s32.totalorder %s25, 1
      %p179 = por %p177, %p178
      %p181 = scmp.ne.s32.totalorder %s166, %s180
      %p182 = scmp.eq.s32.totalorder %s25, 0
      %p183 = por %p181, %p182
      %s185 = sadd.s32 %s184, 1
      %p188 = scmp.eq.s32.totalorder %s19, 1
      %p189 = scmp.ne.s32.totalorder %s184, %s186
      %p190 = scmp.eq.s32.totalorder %s19, 0
      %p191 = por %p189, %p190
      %p192 = scmp.ne.s32.totalorder %s184, %s186
      %p193 = scmp.eq.s32.totalorder %s24, 1
      %p194 = por %p192, %p193
      %p195 = scmp.ne.s32.totalorder %s186, %s187
      %p196 = scmp.eq.s32.totalorder %s24, 0
      %p197 = por %p195, %p196
      %p198 = scmp.ne.s32.totalorder %s186, %s187
      %p199 = scmp.eq.s32.totalorder %s25, 1
      %p200 = por %p198, %p199
      %p202 = scmp.ne.s32.totalorder %s187, %s201
      %p203 = scmp.eq.s32.totalorder %s25, 0
      %p204 = por %p202, %p203
      %s206 = sadd.s32 %s205, 1
      %p209 = scmp.eq.s32.totalorder %s19, 1
      %p210 = scmp.ne.s32.totalorder %s205, %s207
      %p211 = scmp.eq.s32.totalorder %s19, 0
      %p212 = por %p210, %p211
      %p213 = scmp.ne.s32.totalorder %s205, %s207
      %p214 = scmp.eq.s32.totalorder %s24, 1
      %p215 = por %p213, %p214
      %p216 = scmp.ne.s32.totalorder %s207, %s208
      %p217 = scmp.eq.s32.totalorder %s24, 0
      %p218 = por %p216, %p217
      %p219 = scmp.ne.s32.totalorder %s207, %s208
      %p220 = scmp.eq.s32.totalorder %s25, 1
      %p221 = por %p219, %p220
      %p223 = scmp.ne.s32.totalorder %s208, %s222
      %p224 = scmp.eq.s32.totalorder %s25, 0
      %p225 = por %p223, %p224
      %s227 = sadd.s32 %s226, 1
      %p230 = scmp.eq.s32.totalorder %s19, 1
      %p231 = scmp.ne.s32.totalorder %s226, %s228
      %p232 = scmp.eq.s32.totalorder %s19, 0
      %p233 = por %p231, %p232
      %p234 = scmp.ne.s32.totalorder %s226, %s228
      %p235 = scmp.eq.s32.totalorder %s24, 1
      %p236 = por %p234, %p235
      %p237 = scmp.ne.s32.totalorder %s228, %s229
      %p238 = scmp.eq.s32.totalorder %s24, 0
      %p239 = por %p237, %p238
      %p240 = scmp.ne.s32.totalorder %s228, %s229
      %p241 = scmp.eq.s32.totalorder %s25, 1
      %p242 = por %p240, %p241
      %p244 = scmp.ne.s32.totalorder %s229, %s243
      %p245 = scmp.eq.s32.totalorder %s25, 0
      %p246 = por %p244, %p245
      %s247 = ssub.s32 %s19, %s26
      %p248 = scmp.eq.s32.totalorder %s247, 0
      %s250 = sadd.s32 %s249, 1
      %s251 = scalar_select %p248, %s249, %s250
      %p254 = pneg %p248
      %p255 = scmp.eq.s32.totalorder %s19, 1
      %p256 = por %p254, %p255
      %p257 = scmp.ne.s32.totalorder %s249, %s252
      %p258 = scmp.eq.s32.totalorder %s19, 0
      %p259 = por %p257, %p258
      %p260 = scmp.ne.s32.totalorder %s249, %s252
      %p261 = scmp.eq.s32.totalorder %s24, 1
      %p262 = por %p260, %p261
      %p263 = scmp.ne.s32.totalorder %s252, %s253
      %p264 = scmp.eq.s32.totalorder %s24, 0
      %p265 = por %p263, %p264
      %p266 = scmp.ne.s32.totalorder %s252, %s253
      %p267 = scmp.eq.s32.totalorder %s25, 1
      %p268 = por %p266, %p267
      %p270 = scmp.ne.s32.totalorder %s253, %s269
      %p271 = scmp.eq.s32.totalorder %s25, 0
      %p272 = por %p270, %p271
      %p273 = scmp.le.s32.totalorder 1, %s19
      %p274 = scmp.lt.s32.totalorder %s19, 3
      %p275 = pnand %p273, %p274
      %p276 = pneg %p275
      // Predicated region
      $region9: #{convnext_encoder.15} parent=5 // pred_check
        _
      $region10: #{convnext_encoder.15} parent=5 // pred_check_branch
        %278 = sbr.rel (%p275) target = $region12
      $region11: #{convnext_encoder.15} parent=5 // pred_region
        %s279 = ssub.s32 %s19, 1
        // Predicated region
        $region13: #{convnext_encoder.15} parent=11 // pred_check
          %p280 = pneg %p92
        $region14: #{convnext_encoder.15} parent=11 // pred_check_branch
          %282 = sbr.rel (%p280) target = $region16
        $region15: #{convnext_encoder.15} parent=11 // pred_region
          _
        $region16: #{convnext_encoder.15} parent=11 // pred_fallthru
          _
        // Predicated region
        $region17: #{convnext_encoder.15} parent=11 // pred_check
          %p283 = pneg %p113
        $region18: #{convnext_encoder.15} parent=11 // pred_check_branch
          %285 = sbr.rel (%p283) target = $region20
        $region19: #{convnext_encoder.15} parent=11 // pred_region
          _
        $region20: #{convnext_encoder.15} parent=11 // pred_fallthru
          _
        // Predicated region
        $region21: #{convnext_encoder.15} parent=11 // pred_check
          %p286 = pneg %p134
        $region22: #{convnext_encoder.15} parent=11 // pred_check_branch
          %288 = sbr.rel (%p286) target = $region24
        $region23: #{convnext_encoder.15} parent=11 // pred_region
          _
        $region24: #{convnext_encoder.15} parent=11 // pred_fallthru
          _
        // Predicated region
        $region25: #{convnext_encoder.15} parent=11 // pred_check
          %p289 = pneg %p155
        $region26: #{convnext_encoder.15} parent=11 // pred_check_branch
          %291 = sbr.rel (%p289) target = $region28
        $region27: #{convnext_encoder.15} parent=11 // pred_region
          _
        $region28: #{convnext_encoder.15} parent=11 // pred_fallthru
          _
        // Predicated region
        $region29: #{convnext_encoder.15} parent=11 // pred_check
          %p292 = pneg %p176
        $region30: #{convnext_encoder.15} parent=11 // pred_check_branch
          %294 = sbr.rel (%p292) target = $region32
        $region31: #{convnext_encoder.15} parent=11 // pred_region
          _
        $region32: #{convnext_encoder.15} parent=11 // pred_fallthru
          _
        // Predicated region
        $region33: #{convnext_encoder.15} parent=11 // pred_check
          %p295 = pneg %p197
        $region34: #{convnext_encoder.15} parent=11 // pred_check_branch
          %297 = sbr.rel (%p295) target = $region36
        $region35: #{convnext_encoder.15} parent=11 // pred_region
          _
        $region36: #{convnext_encoder.15} parent=11 // pred_fallthru
          _
        // Predicated region
        $region37: #{convnext_encoder.15} parent=11 // pred_check
          %p298 = pneg %p218
        $region38: #{convnext_encoder.15} parent=11 // pred_check_branch
          %300 = sbr.rel (%p298) target = $region40
        $region39: #{convnext_encoder.15} parent=11 // pred_region
          _
        $region40: #{convnext_encoder.15} parent=11 // pred_fallthru
          _
        // Predicated region
        $region41: #{convnext_encoder.15} parent=11 // pred_check
          %p301 = pneg %p239
        $region42: #{convnext_encoder.15} parent=11 // pred_check_branch
          %303 = sbr.rel (%p301) target = $region44
        $region43: #{convnext_encoder.15} parent=11 // pred_region
          _
        $region44: #{convnext_encoder.15} parent=11 // pred_fallthru
          _
      $region12: #{convnext_encoder.15} parent=5 // pred_fallthru
        _
      %p304 = scmp.lt.s32.totalorder %s19, 2
      // Predicated region
      $region45: #{convnext_encoder.15} parent=5 // pred_check
        %p305 = pneg %p304
      $region46: #{convnext_encoder.15} parent=5 // pred_check_branch
        %307 = sbr.rel (%p305) target = $region48
      $region47: #{convnext_encoder.15} parent=5 // pred_region
        // Predicated region
        $region49: #{convnext_encoder.15} parent=47 // pred_check
          %p308 = pneg %p39
        $region50: #{convnext_encoder.15} parent=47 // pred_check_branch
          %310 = sbr.rel (%p308) target = $region52
        $region51: #{convnext_encoder.15} parent=47 // pred_region
          %p311 = scmp.lt.s32.totalorder %s19, 1
          %s312 = scalar_select %p311, %s19, 1
          %s313 = smul.addr %s312, 4
          %s314 = smul.addr %s313, 8
          %s315 = scalar_lea.vmem %s0, %s314
        $region52: #{convnext_encoder.15} parent=47 // pred_fallthru
          _
        // Predicated region
        $region53: #{convnext_encoder.15} parent=47 // pred_check
          %p316 = pneg %p65
        $region54: #{convnext_encoder.15} parent=47 // pred_check_branch
          %318 = sbr.rel (%p316) target = $region56
        $region55: #{convnext_encoder.15} parent=47 // pred_region
          %p319 = scmp.lt.s32.totalorder %s19, 1
          %s320 = scalar_select %p319, %s19, 1
          %s321 = smul.addr %s320, 8
          %s322 = smul.addr %s321, 8
          %s323 = scalar_lea.vmem %s1, %s322
        $region56: #{convnext_encoder.15} parent=47 // pred_fallthru
          _
      $region48: #{convnext_encoder.15} parent=5 // pred_fallthru
        _
      %p324 = scmp.le.s32.totalorder 1, %s19
      %p325 = scmp.lt.s32.totalorder %s19, 3
      %p326 = pnand %p324, %p325
      %p327 = pneg %p326
      // Predicated region
      $region57: #{convnext_encoder.15} parent=5 // pred_check
        _
      $region58: #{convnext_encoder.15} parent=5 // pred_check_branch
        %329 = sbr.rel (%p326) target = $region60
      $region59: #{convnext_encoder.15} parent=5 // pred_region
        %s330 = ssub.s32 %s19, 1
        %p331 = scmp.lt.s32.totalorder %s24, 1
        %s332 = scalar_select %p331, %s24, 1
        %s333 = smul.addr %s332, 4
        %s334 = smul.addr %s333, 8
        %s335 = scalar_lea.vmem %s0, %s334
        %p336 = pneg %p45
        %p337 = pneg %p42
        %p338 = scmp.lt.s32.totalorder %s24, 1
        %s339 = scalar_select %p338, %s24, 1
        %s340 = smul.addr %s339, 8
        %s341 = smul.addr %s340, 8
        %s342 = scalar_lea.vmem %s1, %s341
        %p343 = pneg %p71
        %p344 = pneg %p68
        %p345 = pneg %p92
        %p346 = pneg %p89
        %p347 = pneg %p113
        %p348 = pneg %p110
        %p349 = pneg %p134
        %p350 = pneg %p131
        %p351 = pneg %p155
        %p352 = pneg %p152
        %p353 = pneg %p176
        %p354 = pneg %p173
        %p355 = pneg %p197
        %p356 = pneg %p194
        %p357 = pneg %p218
        %p358 = pneg %p215
        %p359 = pneg %p239
        %p360 = pneg %p236
        %p361 = pneg %p265
        %p362 = pneg %p262
        %s363 = sand.u32 %s252, 1
        %s364 = scalar_lea.sflag [#allocation3], %s363
        %s365 = sand.u32 %s252, 1
        %s366 = smul.addr %s365, 32
        %s367 = scalar_lea.vmem [#allocation2], %s366
        %p368 = scmp.lt.s32.totalorder %s24, 1
        %s369 = scalar_select %p368, %s24, 1
        %s370 = smul.addr %s369, 4
        %s371 = smul.addr %s370, 8
        %s372 = scalar_lea.vmem %s0, %s371
        %p373 = scmp.lt.s32.totalorder %s24, 1
        %s374 = scalar_select %p373, %s24, 1
        %s375 = smul.addr %s374, 8
        %s376 = smul.addr %s375, 8
        %s377 = scalar_lea.vmem %s1, %s376
        %v378 = vld [vmem:[%s377] sm:$0xff]
        %v379 = vld [vmem:[%s377 + $0x8] sm:$0xff]
        %v380 = vld [vmem:[%s377 + $0x10] sm:$0xff]
        %v381 = vld [vmem:[%s377 + $0x18] sm:$0xff]
        %v382 = vld [vmem:[%s377 + $0x20] sm:$0xff]
        %v383 = vld [vmem:[%s377 + $0x28] sm:$0xff]
        %v384 = vld [vmem:[%s377 + $0x30] sm:$0xff]
        %v385 = vld [vmem:[%s377 + $0x38] sm:$0xff]
        %v386 = vld [vmem:[%s2] sm:$0xff]
        %v387 = vld [vmem:[%s2 + $0x8] sm:$0xff]
        %v388 = vld [vmem:[%s2 + $0x10] sm:$0xff]
        %v389 = vld [vmem:[%s2 + $0x18] sm:$0xff]
        %391 = vset.pattern.permute.xlu0 0
        %392 = vperm.xlu0 %391, %v386
        %v393 = vpop.permute.xlu0 %392
        %396 = vset.pattern.permute.xlu0 0
        %397 = vperm.xlu0 %396, %v387
        %v398 = vpop.permute.xlu0 %397
        %401 = vset.pattern.permute.xlu0 0
        %402 = vperm.xlu0 %401, %v388
        %v403 = vpop.permute.xlu0 %402
        %406 = vset.pattern.permute.xlu0 0
        %407 = vperm.xlu0 %406, %v389
        %v408 = vpop.permute.xlu0 %407
        %v410 = vmul.f32 %v393, %v378
        %v411 = vmul.f32 %v398, %v380
        %v412 = vmul.f32 %v403, %v382
        %v413 = vmul.f32 %v408, %v384
        %414 = vset.pattern.permute.xlu0 1
        %415 = vperm.xlu0 %414, %v386
        %v416 = vpop.permute.xlu0 %415
        %418 = vset.pattern.permute.xlu0 1
        %419 = vperm.xlu0 %418, %v387
        %v420 = vpop.permute.xlu0 %419
        %422 = vset.pattern.permute.xlu0 1
        %423 = vperm.xlu0 %422, %v388
        %v424 = vpop.permute.xlu0 %423
        %426 = vset.pattern.permute.xlu0 1
        %427 = vperm.xlu0 %426, %v389
        %v428 = vpop.permute.xlu0 %427
        %v430 = vmul.f32 %v416, %v378
        %v431 = vmul.f32 %v416, %v379
        %v432 = vmul.f32 %v420, %v380
        %v433 = vmul.f32 %v420, %v381
        %v434 = vmul.f32 %v424, %v382
        %v435 = vmul.f32 %v424, %v383
        %v436 = vmul.f32 %v428, %v384
        %v437 = vmul.f32 %v428, %v385
        %446 = vrot.lane.b32.xlu0 %v430, 127
        %v447 = vpop.permute.xlu0 %446
        %448 = vrot.lane.b32.xlu0 %v431, 127
        %v449 = vpop.permute.xlu0 %448
        %450 = vrot.lane.b32.xlu0 %v432, 127
        %v451 = vpop.permute.xlu0 %450
        %452 = vrot.lane.b32.xlu0 %v433, 127
        %v453 = vpop.permute.xlu0 %452
        %454 = vrot.lane.b32.xlu0 %v434, 127
        %v455 = vpop.permute.xlu0 %454
        %456 = vrot.lane.b32.xlu0 %v435, 127
        %v457 = vpop.permute.xlu0 %456
        %458 = vrot.lane.b32.xlu0 %v436, 127
        %v459 = vpop.permute.xlu0 %458
        %460 = vrot.lane.b32.xlu0 %v437, 127
        %v461 = vpop.permute.xlu0 %460
        %vm462 = vcmask 1039360
        %v463 = vsel %vm462, %v447, %v449
        %v464 = vsel %vm462, %v451, %v453
        %v465 = vsel %vm462, %v455, %v457
        %v466 = vsel %vm462, %v459, %v461
        %v471 = vadd.f32 %v410, %v463
        %v472 = vadd.f32 %v411, %v464
        %v473 = vadd.f32 %v412, %v465
        %v474 = vadd.f32 %v413, %v466
        %475 = vset.pattern.permute.xlu0 2
        %476 = vperm.xlu0 %475, %v386
        %v477 = vpop.permute.xlu0 %476
        %479 = vset.pattern.permute.xlu0 2
        %480 = vperm.xlu0 %479, %v387
        %v481 = vpop.permute.xlu0 %480
        %483 = vset.pattern.permute.xlu0 2
        %484 = vperm.xlu0 %483, %v388
        %v485 = vpop.permute.xlu0 %484
        %487 = vset.pattern.permute.xlu0 2
        %488 = vperm.xlu0 %487, %v389
        %v489 = vpop.permute.xlu0 %488
        %v491 = vmul.f32 %v477, %v378
        %v492 = vmul.f32 %v477, %v379
        %v493 = vmul.f32 %v481, %v380
        %v494 = vmul.f32 %v481, %v381
        %v495 = vmul.f32 %v485, %v382
        %v496 = vmul.f32 %v485, %v383
        %v497 = vmul.f32 %v489, %v384
        %v498 = vmul.f32 %v489, %v385
        %507 = vrot.lane.b32.xlu0 %v491, 126
        %v508 = vpop.permute.xlu0 %507
        %509 = vrot.lane.b32.xlu0 %v492, 126
        %v510 = vpop.permute.xlu0 %509
        %511 = vrot.lane.b32.xlu0 %v493, 126
        %v512 = vpop.permute.xlu0 %511
        %513 = vrot.lane.b32.xlu0 %v494, 126
        %v514 = vpop.permute.xlu0 %513
        %515 = vrot.lane.b32.xlu0 %v495, 126
        %v516 = vpop.permute.xlu0 %515
        %517 = vrot.lane.b32.xlu0 %v496, 126
        %v518 = vpop.permute.xlu0 %517
        %519 = vrot.lane.b32.xlu0 %v497, 126
        %v520 = vpop.permute.xlu0 %519
        %521 = vrot.lane.b32.xlu0 %v498, 126
        %v522 = vpop.permute.xlu0 %521
        %vm523 = vcmask 1031168
        %v524 = vsel %vm523, %v508, %v510
        %v525 = vsel %vm523, %v512, %v514
        %v526 = vsel %vm523, %v516, %v518
        %v527 = vsel %vm523, %v520, %v522
        %v532 = vadd.f32 %v471, %v524
        %v533 = vadd.f32 %v472, %v525
        %v534 = vadd.f32 %v473, %v526
        %v535 = vadd.f32 %v474, %v527
        %536 = vset.pattern.permute.xlu0 3
        %537 = vperm.xlu0 %536, %v386
        %v538 = vpop.permute.xlu0 %537
        %540 = vset.pattern.permute.xlu0 3
        %541 = vperm.xlu0 %540, %v387
        %v542 = vpop.permute.xlu0 %541
        %544 = vset.pattern.permute.xlu0 3
        %545 = vperm.xlu0 %544, %v388
        %v546 = vpop.permute.xlu0 %545
        %548 = vset.pattern.permute.xlu0 3
        %549 = vperm.xlu0 %548, %v389
        %v550 = vpop.permute.xlu0 %549
        %v552 = vmul.f32 %v538, %v378
        %v553 = vmul.f32 %v538, %v379
        %v554 = vmul.f32 %v542, %v380
        %v555 = vmul.f32 %v542, %v381
        %v556 = vmul.f32 %v546, %v382
        %v557 = vmul.f32 %v546, %v383
        %v558 = vmul.f32 %v550, %v384
        %v559 = vmul.f32 %v550, %v385
        %568 = vrot.lane.b32.xlu0 %v552, 125
        %v569 = vpop.permute.xlu0 %568
        %570 = vrot.lane.b32.xlu0 %v553, 125
        %v571 = vpop.permute.xlu0 %570
        %572 = vrot.lane.b32.xlu0 %v554, 125
        %v573 = vpop.permute.xlu0 %572
        %574 = vrot.lane.b32.xlu0 %v555, 125
        %v575 = vpop.permute.xlu0 %574
        %576 = vrot.lane.b32.xlu0 %v556, 125
        %v577 = vpop.permute.xlu0 %576
        %578 = vrot.lane.b32.xlu0 %v557, 125
        %v579 = vpop.permute.xlu0 %578
        %580 = vrot.lane.b32.xlu0 %v558, 125
        %v581 = vpop.permute.xlu0 %580
        %582 = vrot.lane.b32.xlu0 %v559, 125
        %v583 = vpop.permute.xlu0 %582
        %vm584 = vcmask 1022976
        %v585 = vsel %vm584, %v569, %v571
        %v586 = vsel %vm584, %v573, %v575
        %v587 = vsel %vm584, %v577, %v579
        %v588 = vsel %vm584, %v581, %v583
        %v593 = vadd.f32 %v532, %v585
        %v594 = vadd.f32 %v533, %v586
        %v595 = vadd.f32 %v534, %v587
        %v596 = vadd.f32 %v535, %v588
        %597 = vset.pattern.permute.xlu0 4
        %598 = vperm.xlu0 %597, %v386
        %v599 = vpop.permute.xlu0 %598
        %601 = vset.pattern.permute.xlu0 4
        %602 = vperm.xlu0 %601, %v387
        %v603 = vpop.permute.xlu0 %602
        %605 = vset.pattern.permute.xlu0 4
        %606 = vperm.xlu0 %605, %v388
        %v607 = vpop.permute.xlu0 %606
        %609 = vset.pattern.permute.xlu0 4
        %610 = vperm.xlu0 %609, %v389
        %v611 = vpop.permute.xlu0 %610
        %v613 = vmul.f32 %v599, %v378
        %v614 = vmul.f32 %v599, %v379
        %v615 = vmul.f32 %v603, %v380
        %v616 = vmul.f32 %v603, %v381
        %v617 = vmul.f32 %v607, %v382
        %v618 = vmul.f32 %v607, %v383
        %v619 = vmul.f32 %v611, %v384
        %v620 = vmul.f32 %v611, %v385
        %629 = vrot.lane.b32.xlu0 %v613, 124
        %v630 = vpop.permute.xlu0 %629
        %631 = vrot.lane.b32.xlu0 %v614, 124
        %v632 = vpop.permute.xlu0 %631
        %633 = vrot.lane.b32.xlu0 %v615, 124
        %v634 = vpop.permute.xlu0 %633
        %635 = vrot.lane.b32.xlu0 %v616, 124
        %v636 = vpop.permute.xlu0 %635
        %637 = vrot.lane.b32.xlu0 %v617, 124
        %v638 = vpop.permute.xlu0 %637
        %639 = vrot.lane.b32.xlu0 %v618, 124
        %v640 = vpop.permute.xlu0 %639
        %641 = vrot.lane.b32.xlu0 %v619, 124
        %v642 = vpop.permute.xlu0 %641
        %643 = vrot.lane.b32.xlu0 %v620, 124
        %v644 = vpop.permute.xlu0 %643
        %vm645 = vcmask 1014784
        %v646 = vsel %vm645, %v630, %v632
        %v647 = vsel %vm645, %v634, %v636
        %v648 = vsel %vm645, %v638, %v640
        %v649 = vsel %vm645, %v642, %v644
        %v654 = vadd.f32 %v593, %v646
        %v655 = vadd.f32 %v594, %v647
        %v656 = vadd.f32 %v595, %v648
        %v657 = vadd.f32 %v596, %v649
        %658 = vset.pattern.permute.xlu0 5
        %659 = vperm.xlu0 %658, %v386
        %v660 = vpop.permute.xlu0 %659
        %662 = vset.pattern.permute.xlu0 5
        %663 = vperm.xlu0 %662, %v387
        %v664 = vpop.permute.xlu0 %663
        %666 = vset.pattern.permute.xlu0 5
        %667 = vperm.xlu0 %666, %v388
        %v668 = vpop.permute.xlu0 %667
        %670 = vset.pattern.permute.xlu0 5
        %671 = vperm.xlu0 %670, %v389
        %v672 = vpop.permute.xlu0 %671
        %v674 = vmul.f32 %v660, %v378
        %v675 = vmul.f32 %v660, %v379
        %v676 = vmul.f32 %v664, %v380
        %v677 = vmul.f32 %v664, %v381
        %v678 = vmul.f32 %v668, %v382
        %v679 = vmul.f32 %v668, %v383
        %v680 = vmul.f32 %v672, %v384
        %v681 = vmul.f32 %v672, %v385
        %690 = vrot.lane.b32.xlu0 %v674, 123
        %v691 = vpop.permute.xlu0 %690
        %692 = vrot.lane.b32.xlu0 %v675, 123
        %v693 = vpop.permute.xlu0 %692
        %694 = vrot.lane.b32.xlu0 %v676, 123
        %v695 = vpop.permute.xlu0 %694
        %696 = vrot.lane.b32.xlu0 %v677, 123
        %v697 = vpop.permute.xlu0 %696
        %698 = vrot.lane.b32.xlu0 %v678, 123
        %v699 = vpop.permute.xlu0 %698
        %700 = vrot.lane.b32.xlu0 %v679, 123
        %v701 = vpop.permute.xlu0 %700
        %702 = vrot.lane.b32.xlu0 %v680, 123
        %v703 = vpop.permute.xlu0 %702
        %704 = vrot.lane.b32.xlu0 %v681, 123
        %v705 = vpop.permute.xlu0 %704
        %vm706 = vcmask 1006592
        %v707 = vsel %vm706, %v691, %v693
        %v708 = vsel %vm706, %v695, %v697
        %v709 = vsel %vm706, %v699, %v701
        %v710 = vsel %vm706, %v703, %v705
        %v715 = vadd.f32 %v654, %v707
        %v716 = vadd.f32 %v655, %v708
        %v717 = vadd.f32 %v656, %v709
        %v718 = vadd.f32 %v657, %v710
        %719 = vset.pattern.permute.xlu0 6
        %720 = vperm.xlu0 %719, %v386
        %v721 = vpop.permute.xlu0 %720
        %723 = vset.pattern.permute.xlu0 6
        %724 = vperm.xlu0 %723, %v387
        %v725 = vpop.permute.xlu0 %724
        %727 = vset.pattern.permute.xlu0 6
        %728 = vperm.xlu0 %727, %v388
        %v729 = vpop.permute.xlu0 %728
        %731 = vset.pattern.permute.xlu0 6
        %732 = vperm.xlu0 %731, %v389
        %v733 = vpop.permute.xlu0 %732
        %v735 = vmul.f32 %v721, %v378
        %v736 = vmul.f32 %v721, %v379
        %v737 = vmul.f32 %v725, %v380
        %v738 = vmul.f32 %v725, %v381
        %v739 = vmul.f32 %v729, %v382
        %v740 = vmul.f32 %v729, %v383
        %v741 = vmul.f32 %v733, %v384
        %v742 = vmul.f32 %v733, %v385
        %751 = vrot.lane.b32.xlu0 %v735, 122
        %v752 = vpop.permute.xlu0 %751
        %753 = vrot.lane.b32.xlu0 %v736, 122
        %v754 = vpop.permute.xlu0 %753
        %755 = vrot.lane.b32.xlu0 %v737, 122
        %v756 = vpop.permute.xlu0 %755
        %757 = vrot.lane.b32.xlu0 %v738, 122
        %v758 = vpop.permute.xlu0 %757
        %759 = vrot.lane.b32.xlu0 %v739, 122
        %v760 = vpop.permute.xlu0 %759
        %761 = vrot.lane.b32.xlu0 %v740, 122
        %v762 = vpop.permute.xlu0 %761
        %763 = vrot.lane.b32.xlu0 %v741, 122
        %v764 = vpop.permute.xlu0 %763
        %765 = vrot.lane.b32.xlu0 %v742, 122
        %v766 = vpop.permute.xlu0 %765
        %vm767 = vcmask 998400
        %v768 = vsel %vm767, %v752, %v754
        %v769 = vsel %vm767, %v756, %v758
        %v770 = vsel %vm767, %v760, %v762
        %v771 = vsel %vm767, %v764, %v766
        %v776 = vadd.f32 %v715, %v768
        %v777 = vadd.f32 %v716, %v769
        %v778 = vadd.f32 %v717, %v770
        %v779 = vadd.f32 %v718, %v771
        %v780 = vld [vmem:[%s3] sm:$0xff]
        %v781 = vld [vmem:[%s3 + $0x8] sm:$0xff]
        %v782 = vld [vmem:[%s3 + $0x10] sm:$0xff]
        %v783 = vld [vmem:[%s3 + $0x18] sm:$0xff]
        %v784 = vld [vmem:[%s4] sm:$0xff]
        %v785 = vld [vmem:[%s4 + $0x8] sm:$0xff]
        %v786 = vld [vmem:[%s4 + $0x10] sm:$0xff]
        %v787 = vld [vmem:[%s4 + $0x18] sm:$0xff]
        %v788 = vadd.f32 %v776, %v777
        %v789 = vadd.f32 %v788, %v778
        %v790 = vadd.f32 %v789, %v779
        %791 = vadd.xlane.f32.xlu0 %v790
        %v792 = vpop.xlane.xlu0 %791
        %v793 = vrot.slane %v792, 4
        %v794 = vadd.f32 %v792, %v793
        %v795 = vrot.slane %v794, 2
        %v796 = vadd.f32 %v794, %v795
        %v797 = vrot.slane %v796, 1
        %v798 = vadd.f32 %v796, %v797
        %s799 = vtos %v798
        %v800 = vstv %s799
        %v801 = vrcp.pop 4096.0
        %v802 = vmul.f32 %v800, %v801
        %v803 = vsub.f32 %v776, %v802
        %v804 = vsub.f32 %v777, %v802
        %v805 = vsub.f32 %v778, %v802
        %v806 = vsub.f32 %v779, %v802
        %v807 = vmul.f32 %v803, %v803
        %v808 = vmul.f32 %v804, %v804
        %v809 = vmul.f32 %v805, %v805
        %v810 = vmul.f32 %v806, %v806
        %v811 = vadd.f32 %v807, %v808
        %v812 = vadd.f32 %v811, %v809
        %v813 = vadd.f32 %v812, %v810
        %814 = vadd.xlane.f32.xlu0 %v813
        %v815 = vpop.xlane.xlu0 %814
        %v816 = vrot.slane %v815, 4
        %v817 = vadd.f32 %v815, %v816
        %v818 = vrot.slane %v817, 2
        %v819 = vadd.f32 %v817, %v818
        %v820 = vrot.slane %v819, 1
        %v821 = vadd.f32 %v819, %v820
        %s822 = vtos %v821
        %v823 = vstv %s822
        %v824 = vmul.f32 %v823, %v801
        %v825 = vadd.f32 %v824, 1e-05
        %v826 = vrsqrt.pop %v825
        %v827 = vmul.f32 %v803, %v826
        %v828 = vmul.f32 %v804, %v826
        %v829 = vmul.f32 %v805, %v826
        %v830 = vmul.f32 %v806, %v826
        %832 = vset.pattern.permute.xlu0 0
        %833 = vperm.xlu0 %832, %v780
        %v834 = vpop.permute.xlu0 %833
        %837 = vset.pattern.permute.xlu0 0
        %838 = vperm.xlu0 %837, %v781
        %v839 = vpop.permute.xlu0 %838
        %842 = vset.pattern.permute.xlu0 0
        %843 = vperm.xlu0 %842, %v782
        %v844 = vpop.permute.xlu0 %843
        %847 = vset.pattern.permute.xlu0 0
        %848 = vperm.xlu0 %847, %v783
        %v849 = vpop.permute.xlu0 %848
        %v851 = vmul.f32 %v827, %v834
        %v852 = vmul.f32 %v828, %v839
        %v853 = vmul.f32 %v829, %v844
        %v854 = vmul.f32 %v830, %v849
        %856 = vset.pattern.permute.xlu0 0
        %857 = vperm.xlu0 %856, %v784
        %v858 = vpop.permute.xlu0 %857
        %861 = vset.pattern.permute.xlu0 0
        %862 = vperm.xlu0 %861, %v785
        %v863 = vpop.permute.xlu0 %862
        %866 = vset.pattern.permute.xlu0 0
        %867 = vperm.xlu0 %866, %v786
        %v868 = vpop.permute.xlu0 %867
        %871 = vset.pattern.permute.xlu0 0
        %872 = vperm.xlu0 %871, %v787
        %v873 = vpop.permute.xlu0 %872
        %v875 = vadd.f32 %v851, %v858
        %v876 = vadd.f32 %v852, %v863
        %v877 = vadd.f32 %v853, %v868
        %v878 = vadd.f32 %v854, %v873
        %v879 = vld [vmem:[%s5] sm:$0xff]
        %v880 = vld [vmem:[%s5 + $0x8] sm:$0xff]
        %v881 = vld [vmem:[%s5 + $0x10] sm:$0xff]
        %v882 = vld [vmem:[%s5 + $0x18] sm:$0xff]
        %v883 = vld [vmem:[%s5 + $0x20] sm:$0xff]
        %v884 = vld [vmem:[%s5 + $0x28] sm:$0xff]
        %v885 = vld [vmem:[%s5 + $0x30] sm:$0xff]
        %v886 = vld [vmem:[%s5 + $0x38] sm:$0xff]
        %v887 = vld [vmem:[%s6] sm:$0xff]
        %v888 = vld [vmem:[%s6 + $0x8] sm:$0xff]
        %v889 = vld [vmem:[%s6 + $0x10] sm:$0xff]
        %v890 = vld [vmem:[%s6 + $0x18] sm:$0xff]
        %v891 = vld [vmem:[%s6 + $0x20] sm:$0xff]
        %v892 = vld [vmem:[%s6 + $0x28] sm:$0xff]
        %v893 = vld [vmem:[%s6 + $0x30] sm:$0xff]
        %v894 = vld [vmem:[%s6 + $0x38] sm:$0xff]
        %896 = vset.pattern.permute.xlu0 0
        %897 = vperm.xlu0 %896, %v887
        %v898 = vpop.permute.xlu0 %897
        %901 = vset.pattern.permute.xlu0 0
        %902 = vperm.xlu0 %901, %v888
        %v903 = vpop.permute.xlu0 %902
        %906 = vset.pattern.permute.xlu0 0
        %907 = vperm.xlu0 %906, %v889
        %v908 = vpop.permute.xlu0 %907
        %911 = vset.pattern.permute.xlu0 0
        %912 = vperm.xlu0 %911, %v890
        %v913 = vpop.permute.xlu0 %912
        %916 = vset.pattern.permute.xlu0 0
        %917 = vperm.xlu0 %916, %v891
        %v918 = vpop.permute.xlu0 %917
        %921 = vset.pattern.permute.xlu0 0
        %922 = vperm.xlu0 %921, %v892
        %v923 = vpop.permute.xlu0 %922
        %926 = vset.pattern.permute.xlu0 0
        %927 = vperm.xlu0 %926, %v893
        %v928 = vpop.permute.xlu0 %927
        %931 = vset.pattern.permute.xlu0 0
        %932 = vperm.xlu0 %931, %v894
        %v933 = vpop.permute.xlu0 %932
        %vm935 = vcmask 261120
        %v937 = vsel %vm935, %v879, 0
        %v940 = vsel %vm935, %v880, 0
        %v943 = vsel %vm935, %v881, 0
        %v946 = vsel %vm935, %v882, 0
        %v949 = vsel %vm935, %v883, 0
        %v952 = vsel %vm935, %v884, 0
        %v955 = vsel %vm935, %v885, 0
        %v958 = vsel %vm935, %v886, 0
        %960 = vmatprep.subr.mxu0 0.0
        %961 = vmatpush1.msra.mxu0 %v875
        %962 = vmatprep.subr.mxu0 0.0
        %963 = vmatpush1.msra.mxu0 %v876
        %964 = vmatprep.subr.mxu0 0.0
        %965 = vmatpush1.msra.mxu0 %v877
        %966 = vmatprep.subr.mxu0 0.0
        %967 = vmatpush1.msra.mxu0 %v878
        %968 = vmatprep.subr.mxu0 0.0
        %969 = vmatpush1.msra.mxu0 0.0
        %970 = vmatprep.subr.mxu0 0.0
        %971 = vmatpush1.msra.mxu0 0.0
        %972 = vmatprep.subr.mxu0 0.0
        %973 = vmatpush1.msra.mxu0 0.0
        %974 = vmatprep.subr.mxu0 0.0
        %975 = vmatpush1.msra.mxu0 0.0
        %976 = vmatprep.subr.mxu0 0.0
        %977 = vmatpush1.msra.mxu0 0.0
        %978 = vmatprep.subr.mxu0 0.0
        %979 = vmatpush1.msra.mxu0 0.0
        %980 = vmatprep.subr.mxu0 0.0
        %981 = vmatpush1.msra.mxu0 0.0
        %982 = vmatprep.subr.mxu0 0.0
        %983 = vmatpush1.msra.mxu0 0.0
        %984 = vmatprep.subr.mxu0 0.0
        %985 = vmatpush1.msra.mxu0 0.0
        %986 = vmatprep.subr.mxu0 0.0
        %987 = vmatpush1.msra.mxu0 0.0
        %988 = vmatprep.subr.mxu0 0.0
        %989 = vmatpush1.msra.mxu0 0.0
        %990 = vmatprep.subr.mxu0 0.0
        %991 = vmatpush1.msra.mxu0 0.0
        %992 = vmatprep.subr.mxu0 0.0
        %993 = vmatpush1.msra.mxu0 0.0
        %994 = vmatprep.subr.mxu0 0.0
        %995 = vmatpush1.msra.mxu0 0.0
        %996 = vmatprep.subr.mxu0 0.0
        %997 = vmatpush1.msra.mxu0 0.0
        %998 = vmatprep.subr.mxu0 0.0
        %999 = vmatpush1.msra.mxu0 0.0
        %1000 = vmatprep.subr.mxu0 0.0
        %1001 = vmatpush1.msra.mxu0 0.0
        %1002 = vmatprep.subr.mxu0 0.0
        %1003 = vmatpush1.msra.mxu0 0.0
        %1004 = vmatprep.subr.mxu0 0.0
        %1005 = vmatpush1.msra.mxu0 0.0
        %1006 = vmatprep.subr.mxu0 0.0
        %1007 = vmatpush1.msra.mxu0 0.0
        %1008 = vmatprep.subr.mxu0 0.0
        %1009 = vmatpush1.msra.mxu0 0.0
        %1010 = vmatprep.subr.mxu0 0.0
        %1011 = vmatpush1.msra.mxu0 0.0
        %1012 = vmatprep.subr.mxu0 0.0
        %1013 = vmatpush1.msra.mxu0 0.0
        %1014 = vmatprep.subr.mxu0 0.0
        %1015 = vmatpush1.msra.mxu0 0.0
        %1016 = vmatprep.subr.mxu0 0.0
        %1017 = vmatpush1.msra.mxu0 0.0
        %1018 = vmatprep.subr.mxu0 0.0
        %1019 = vmatpush1.msra.mxu0 0.0
        %1020 = vmatprep.subr.mxu0 0.0
        %1021 = vmatpush1.msra.mxu0 0.0
        %1022 = vmatprep.subr.mxu0 0.0
        %1023 = vmatpush1.msra.mxu0 0.0
        %1024 = vmatprep.mubr.f32.mxu0 0.0
        %1025 = vmatmul.mubr.f32.gmra.mrb[0].mxu0 %v937
        %v1026 = vpop.f32.mrb[0].mxu0
        %v1027 = vadd.f32 %v898, %v1026
        %v1028 = vpop.f32.mrb[0].mxu0
        %1029 = vmatprep.mubr.f32.mxu0 0.0
        %1030 = vmatmul.mubr.f32.gmra.mrb[0].mxu0 %v940
        %v1031 = vpop.f32.mrb[0].mxu0
        %v1032 = vadd.f32 %v903, %v1031
        %v1033 = vpop.f32.mrb[0].mxu0
        %1034 = vmatprep.mubr.f32.mxu0 0.0
        %1035 = vmatmul.mubr.f32.gmra.mrb[0].mxu0 %v943
        %v1036 = vpop.f32.mrb[0].mxu0
        %v1037 = vadd.f32 %v908, %v1036
        %v1038 = vpop.f32.mrb[0].mxu0
        %1039 = vmatprep.mubr.f32.mxu0 0.0
        %1040 = vmatmul.mubr.f32.gmra.mrb[0].mxu0 %v946
        %v1041 = vpop.f32.mrb[0].mxu0
        %v1042 = vadd.f32 %v913, %v1041
        %v1043 = vpop.f32.mrb[0].mxu0
        %1044 = vmatprep.mubr.f32.mxu0 0.0
        %1045 = vmatmul.mubr.f32.gmra.mrb[0].mxu0 %v949
        %v1046 = vpop.f32.mrb[0].mxu0
        %v1047 = vadd.f32 %v918, %v1046
        %v1048 = vpop.f32.mrb[0].mxu0
        %1049 = vmatprep.mubr.f32.mxu0 0.0
        %1050 = vmatmul.mubr.f32.gmra.mrb[0].mxu0 %v952
        %v1051 = vpop.f32.mrb[0].mxu0
        %v1052 = vadd.f32 %v923, %v1051
        %v1053 = vpop.f32.mrb[0].mxu0
        %1054 = vmatprep.mubr.f32.mxu0 0.0
        %1055 = vmatmul.mubr.f32.gmra.mrb[0].mxu0 %v955
        %v1056 = vpop.f32.mrb[0].mxu0
        %v1057 = vadd.f32 %v928, %v1056
        %v1058 = vpop.f32.mrb[0].mxu0
        %1059 = vmatprep.mubr.f32.mxu0 0.0
        %1060 = vmatmul.mubr.f32.gmra.mrb[0].mxu0 %v958
        %v1061 = vpop.f32.mrb[0].mxu0
        %v1062 = vadd.f32 %v933, %v1061
        %v1063 = vpop.f32.mrb[0].mxu0
        %1064 = vdwg.mxu0
        %v1065 = vmul.f32 %v1027, 0.5
        %v1066 = vmul.f32 %v1032, 0.5
        %v1067 = vmul.f32 %v1037, 0.5
        %v1068 = vmul.f32 %v1042, 0.5
        %v1069 = vmul.f32 %v1047, 0.5
        %v1070 = vmul.f32 %v1052, 0.5
        %v1071 = vmul.f32 %v1057, 0.5
        %v1072 = vmul.f32 %v1062, 0.5
        %v1073 = vmul.f32 %v1027, 0.70710677
        %v1074 = vmul.f32 %v1032, 0.70710677
        %v1075 = vmul.f32 %v1037, 0.70710677
        %v1076 = vmul.f32 %v1042, 0.70710677
        %v1077 = vmul.f32 %v1047, 0.70710677
        %v1078 = vmul.f32 %v1052, 0.70710677
        %v1079 = vmul.f32 %v1057, 0.70710677
        %v1080 = vmul.f32 %v1062, 0.70710677
        %v1081 = vand.u32 2147483647, %v1073
        %v1082 = vand.u32 2147483647, %v1074
        %v1083 = vand.u32 2147483647, %v1075
        %v1084 = vand.u32 2147483647, %v1076
        %v1085 = vand.u32 2147483647, %v1077
        %v1086 = vand.u32 2147483647, %v1078
        %v1087 = vand.u32 2147483647, %v1079
        %v1088 = vand.u32 2147483647, %v1080
        %v1089 = vmul.f32 %v1081, 0.3275911
        %v1090 = vmul.f32 %v1082, 0.3275911
        %v1091 = vmul.f32 %v1083, 0.3275911
        %v1092 = vmul.f32 %v1084, 0.3275911
        %v1093 = vmul.f32 %v1085, 0.3275911
        %v1094 = vmul.f32 %v1086, 0.3275911
        %v1095 = vmul.f32 %v1087, 0.3275911
        %v1096 = vmul.f32 %v1088, 0.3275911
        %v1097 = vadd.f32 %v1089, 1.0
        %v1098 = vadd.f32 %v1090, 1.0
        %v1099 = vadd.f32 %v1091, 1.0
        %v1100 = vadd.f32 %v1092, 1.0
        %v1101 = vadd.f32 %v1093, 1.0
        %v1102 = vadd.f32 %v1094, 1.0
        %v1103 = vadd.f32 %v1095, 1.0
        %v1104 = vadd.f32 %v1096, 1.0
        %v1105 = vrcp.pop %v1097
        %v1106 = vmul.f32 1.0, %v1105
        %v1107 = vrcp.pop %v1098
        %v1108 = vmul.f32 1.0, %v1107
        %v1109 = vrcp.pop %v1099
        %v1110 = vmul.f32 1.0, %v1109
        %v1111 = vrcp.pop %v1100
        %v1112 = vmul.f32 1.0, %v1111
        %v1113 = vrcp.pop %v1101
        %v1114 = vmul.f32 1.0, %v1113
        %v1115 = vrcp.pop %v1102
        %v1116 = vmul.f32 1.0, %v1115
        %v1117 = vrcp.pop %v1103
        %v1118 = vmul.f32 1.0, %v1117
        %v1119 = vrcp.pop %v1104
        %v1120 = vmul.f32 1.0, %v1119
        %v1121 = vmul.f32 %v1106, 1.0614054
        %v1122 = vmul.f32 %v1108, 1.0614054
        %v1123 = vmul.f32 %v1110, 1.0614054
        %v1124 = vmul.f32 %v1112, 1.0614054
        %v1125 = vmul.f32 %v1114, 1.0614054
        %v1126 = vmul.f32 %v1116, 1.0614054
        %v1127 = vmul.f32 %v1118, 1.0614054
        %v1128 = vmul.f32 %v1120, 1.0614054
        %v1129 = vadd.f32 %v1121, -1.4531521
        %v1130 = vadd.f32 %v1122, -1.4531521
        %v1131 = vadd.f32 %v1123, -1.4531521
        %v1132 = vadd.f32 %v1124, -1.4531521
        %v1133 = vadd.f32 %v1125, -1.4531521
        %v1134 = vadd.f32 %v1126, -1.4531521
        %v1135 = vadd.f32 %v1127, -1.4531521
        %v1136 = vadd.f32 %v1128, -1.4531521
        %v1137 = vmul.f32 %v1129, %v1106
        %v1138 = vmul.f32 %v1130, %v1108
        %v1139 = vmul.f32 %v1131, %v1110
        %v1140 = vmul.f32 %v1132, %v1112
        %v1141 = vmul.f32 %v1133, %v1114
        %v1142 = vmul.f32 %v1134, %v1116
        %v1143 = vmul.f32 %v1135, %v1118
        %v1144 = vmul.f32 %v1136, %v1120
        %v1145 = vadd.f32 %v1137, 1.4214138
        %v1146 = vadd.f32 %v1138, 1.4214138
        %v1147 = vadd.f32 %v1139, 1.4214138
        %v1148 = vadd.f32 %v1140, 1.4214138
        %v1149 = vadd.f32 %v1141, 1.4214138
        %v1150 = vadd.f32 %v1142, 1.4214138
        %v1151 = vadd.f32 %v1143, 1.4214138
        %v1152 = vadd.f32 %v1144, 1.4214138
        %v1153 = vmul.f32 %v1145, %v1106
        %v1154 = vmul.f32 %v1146, %v1108
        %v1155 = vmul.f32 %v1147, %v1110
        %v1156 = vmul.f32 %v1148, %v1112
        %v1157 = vmul.f32 %v1149, %v1114
        %v1158 = vmul.f32 %v1150, %v1116
        %v1159 = vmul.f32 %v1151, %v1118
        %v1160 = vmul.f32 %v1152, %v1120
        %v1161 = vadd.f32 %v1153, -0.28449672
        %v1162 = vadd.f32 %v1154, -0.28449672
        %v1163 = vadd.f32 %v1155, -0.28449672
        %v1164 = vadd.f32 %v1156, -0.28449672
        %v1165 = vadd.f32 %v1157, -0.28449672
        %v1166 = vadd.f32 %v1158, -0.28449672
        %v1167 = vadd.f32 %v1159, -0.28449672
        %v1168 = vadd.f32 %v1160, -0.28449672
        %v1169 = vmul.f32 %v1161, %v1106
        %v1170 = vmul.f32 %v1162, %v1108
        %v1171 = vmul.f32 %v1163, %v1110
        %v1172 = vmul.f32 %v1164, %v1112
        %v1173 = vmul.f32 %v1165, %v1114
        %v1174 = vmul.f32 %v1166, %v1116
        %v1175 = vmul.f32 %v1167, %v1118
        %v1176 = vmul.f32 %v1168, %v1120
        %v1177 = vadd.f32 %v1169, 0.2548296
        %v1178 = vadd.f32 %v1170, 0.2548296
        %v1179 = vadd.f32 %v1171, 0.2548296
        %v1180 = vadd.f32 %v1172, 0.2548296
        %v1181 = vadd.f32 %v1173, 0.2548296
        %v1182 = vadd.f32 %v1174, 0.2548296
        %v1183 = vadd.f32 %v1175, 0.2548296
        %v1184 = vadd.f32 %v1176, 0.2548296
        %v1185 = vmul.f32 %v1177, %v1106
        %v1186 = vmul.f32 %v1178, %v1108
        %v1187 = vmul.f32 %v1179, %v1110
        %v1188 = vmul.f32 %v1180, %v1112
        %v1189 = vmul.f32 %v1181, %v1114
        %v1190 = vmul.f32 %v1182, %v1116
        %v1191 = vmul.f32 %v1183, %v1118
        %v1192 = vmul.f32 %v1184, %v1120
        %v1193 = vsub.f32 0.0, %v1081
        %v1194 = vsub.f32 0.0, %v1082
        %v1195 = vsub.f32 0.0, %v1083
        %v1196 = vsub.f32 0.0, %v1084
        %v1197 = vsub.f32 0.0, %v1085
        %v1198 = vsub.f32 0.0, %v1086
        %v1199 = vsub.f32 0.0, %v1087
        %v1200 = vsub.f32 0.0, %v1088
        %v1201 = vmul.f32 %v1193, %v1081
        %v1202 = vmul.f32 %v1194, %v1082
        %v1203 = vmul.f32 %v1195, %v1083
        %v1204 = vmul.f32 %v1196, %v1084
        %v1205 = vmul.f32 %v1197, %v1085
        %v1206 = vmul.f32 %v1198, %v1086
        %v1207 = vmul.f32 %v1199, %v1087
        %v1208 = vmul.f32 %v1200, %v1088
        %v1209 = vmul.f32 %v1201, 1.442695
        %v1210 = vpow.pop %v1209
        %v1211 = vmul.f32 %v1202, 1.442695
        %v1212 = vpow.pop %v1211
        %v1213 = vmul.f32 %v1203, 1.442695
        %v1214 = vpow.pop %v1213
        %v1215 = vmul.f32 %v1204, 1.442695
        %v1216 = vpow.pop %v1215
        %v1217 = vmul.f32 %v1205, 1.442695
        %v1218 = vpow.pop %v1217
        %v1219 = vmul.f32 %v1206, 1.442695
        %v1220 = vpow.pop %v1219
        %v1221 = vmul.f32 %v1207, 1.442695
        %v1222 = vpow.pop %v1221
        %v1223 = vmul.f32 %v1208, 1.442695
        %v1224 = vpow.pop %v1223
        %v1225 = vmul.f32 %v1185, %v1210
        %v1226 = vmul.f32 %v1186, %v1212
        %v1227 = vmul.f32 %v1187, %v1214
        %v1228 = vmul.f32 %v1188, %v1216
        %v1229 = vmul.f32 %v1189, %v1218
        %v1230 = vmul.f32 %v1190, %v1220
        %v1231 = vmul.f32 %v1191, %v1222
        %v1232 = vmul.f32 %v1192, %v1224
        %v1233 = vsub.f32 1.0, %v1225
        %v1234 = vsub.f32 1.0, %v1226
        %v1235 = vsub.f32 1.0, %v1227
        %v1236 = vsub.f32 1.0, %v1228
        %v1237 = vsub.f32 1.0, %v1229
        %v1238 = vsub.f32 1.0, %v1230
        %v1239 = vsub.f32 1.0, %v1231
        %v1240 = vsub.f32 1.0, %v1232
        %vm1241 = vcmp.lt.f32.partialorder %v1073, 0.0
        %vm1242 = vcmp.lt.f32.partialorder %v1074, 0.0
        %vm1243 = vcmp.lt.f32.partialorder %v1075, 0.0
        %vm1244 = vcmp.lt.f32.partialorder %v1076, 0.0
        %vm1245 = vcmp.lt.f32.partialorder %v1077, 0.0
        %vm1246 = vcmp.lt.f32.partialorder %v1078, 0.0
        %vm1247 = vcmp.lt.f32.partialorder %v1079, 0.0
        %vm1248 = vcmp.lt.f32.partialorder %v1080, 0.0
        %v1249 = vsub.f32 0.0, %v1233
        %v1250 = vsub.f32 0.0, %v1234
        %v1251 = vsub.f32 0.0, %v1235
        %v1252 = vsub.f32 0.0, %v1236
        %v1253 = vsub.f32 0.0, %v1237
        %v1254 = vsub.f32 0.0, %v1238
        %v1255 = vsub.f32 0.0, %v1239
        %v1256 = vsub.f32 0.0, %v1240
        %v1257 = vsel %vm1241, %v1249, %v1233
        %v1258 = vsel %vm1242, %v1250, %v1234
        %v1259 = vsel %vm1243, %v1251, %v1235
        %v1260 = vsel %vm1244, %v1252, %v1236
        %v1261 = vsel %vm1245, %v1253, %v1237
        %v1262 = vsel %vm1246, %v1254, %v1238
        %v1263 = vsel %vm1247, %v1255, %v1239
        %v1264 = vsel %vm1248, %v1256, %v1240
        %v1265 = vadd.f32 %v1257, 1.0
        %v1266 = vadd.f32 %v1258, 1.0
        %v1267 = vadd.f32 %v1259, 1.0
        %v1268 = vadd.f32 %v1260, 1.0
        %v1269 = vadd.f32 %v1261, 1.0
        %v1270 = vadd.f32 %v1262, 1.0
        %v1271 = vadd.f32 %v1263, 1.0
        %v1272 = vadd.f32 %v1264, 1.0
        %v1273 = vmul.f32 %v1065, %v1265
        %v1274 = vmul.f32 %v1066, %v1266
        %v1275 = vmul.f32 %v1067, %v1267
        %v1276 = vmul.f32 %v1068, %v1268
        %v1277 = vmul.f32 %v1069, %v1269
        %v1278 = vmul.f32 %v1070, %v1270
        %v1279 = vmul.f32 %v1071, %v1271
        %v1280 = vmul.f32 %v1072, %v1272
        %v1281 = vld [vmem:[%s7] sm:$0xff]
        %v1282 = vld [vmem:[%s7 + $0x8] sm:$0xff]
        %v1283 = vld [vmem:[%s7 + $0x10] sm:$0xff]
        %v1284 = vld [vmem:[%s7 + $0x18] sm:$0xff]
        %v1285 = vld [vmem:[%s8] sm:$0xff]
        %v1286 = vld [vmem:[%s8 + $0x8] sm:$0xff]
        %v1287 = vld [vmem:[%s8 + $0x10] sm:$0xff]
        %v1288 = vld [vmem:[%s8 + $0x18] sm:$0xff]
        %1290 = vset.pattern.permute.xlu0 0
        %1291 = vperm.xlu0 %1290, %v1285
        %v1292 = vpop.permute.xlu0 %1291
        %1295 = vset.pattern.permute.xlu0 0
        %1296 = vperm.xlu0 %1295, %v1286
        %v1297 = vpop.permute.xlu0 %1296
        %1300 = vset.pattern.permute.xlu0 0
        %1301 = vperm.xlu0 %1300, %v1287
        %v1302 = vpop.permute.xlu0 %1301
        %1305 = vset.pattern.permute.xlu0 0
        %1306 = vperm.xlu0 %1305, %v1288
        %v1307 = vpop.permute.xlu0 %1306
        %vm1309 = vcmask 523264
        %v1311 = vsel %vm1309, %v1281, 0
        %v1314 = vsel %vm1309, %v1282, 0
        %v1317 = vsel %vm1309, %v1283, 0
        %v1320 = vsel %vm1309, %v1284, 0
        %1322 = vmatprep.subr.mxu0 0.0
        %1323 = vmatpush1.msra.mxu0 %v1273
        %1324 = vmatprep.subr.mxu0 0.0
        %1325 = vmatpush1.msra.mxu0 %v1274
        %1326 = vmatprep.subr.mxu0 0.0
        %1327 = vmatpush1.msra.mxu0 %v1275
        %1328 = vmatprep.subr.mxu0 0.0
        %1329 = vmatpush1.msra.mxu0 %v1276
        %1330 = vmatprep.subr.mxu0 0.0
        %1331 = vmatpush1.msra.mxu0 %v1277
        %1332 = vmatprep.subr.mxu0 0.0
        %1333 = vmatpush1.msra.mxu0 %v1278
        %1334 = vmatprep.subr.mxu0 0.0
        %1335 = vmatpush1.msra.mxu0 %v1279
        %1336 = vmatprep.subr.mxu0 0.0
        %1337 = vmatpush1.msra.mxu0 %v1280
        %1338 = vmatprep.subr.mxu0 0.0
        %1339 = vmatpush1.msra.mxu0 0.0
        %1340 = vmatprep.subr.mxu0 0.0
        %1341 = vmatpush1.msra.mxu0 0.0
        %1342 = vmatprep.subr.mxu0 0.0
        %1343 = vmatpush1.msra.mxu0 0.0
        %1344 = vmatprep.subr.mxu0 0.0
        %1345 = vmatpush1.msra.mxu0 0.0
        %1346 = vmatprep.subr.mxu0 0.0
        %1347 = vmatpush1.msra.mxu0 0.0
        %1348 = vmatprep.subr.mxu0 0.0
        %1349 = vmatpush1.msra.mxu0 0.0
        %1350 = vmatprep.subr.mxu0 0.0
        %1351 = vmatpush1.msra.mxu0 0.0
        %1352 = vmatprep.subr.mxu0 0.0
        %1353 = vmatpush1.msra.mxu0 0.0
        %1354 = vmatprep.subr.mxu0 0.0
        %1355 = vmatpush1.msra.mxu0 0.0
        %1356 = vmatprep.subr.mxu0 0.0
        %1357 = vmatpush1.msra.mxu0 0.0
        %1358 = vmatprep.subr.mxu0 0.0
        %1359 = vmatpush1.msra.mxu0 0.0
        %1360 = vmatprep.subr.mxu0 0.0
        %1361 = vmatpush1.msra.mxu0 0.0
        %1362 = vmatprep.subr.mxu0 0.0
        %1363 = vmatpush1.msra.mxu0 0.0
        %1364 = vmatprep.subr.mxu0 0.0
        %1365 = vmatpush1.msra.mxu0 0.0
        %1366 = vmatprep.subr.mxu0 0.0
        %1367 = vmatpush1.msra.mxu0 0.0
        %1368 = vmatprep.subr.mxu0 0.0
        %1369 = vmatpush1.msra.mxu0 0.0
        %1370 = vmatprep.subr.mxu0 0.0
        %1371 = vmatpush1.msra.mxu0 0.0
        %1372 = vmatprep.subr.mxu0 0.0
        %1373 = vmatpush1.msra.mxu0 0.0
        %1374 = vmatprep.subr.mxu0 0.0
        %1375 = vmatpush1.msra.mxu0 0.0
        %1376 = vmatprep.subr.mxu0 0.0
        %1377 = vmatpush1.msra.mxu0 0.0
        %1378 = vmatprep.subr.mxu0 0.0
        %1379 = vmatpush1.msra.mxu0 0.0
        %1380 = vmatprep.subr.mxu0 0.0
        %1381 = vmatpush1.msra.mxu0 0.0
        %1382 = vmatprep.subr.mxu0 0.0
        %1383 = vmatpush1.msra.mxu0 0.0
        %1384 = vmatprep.subr.mxu0 0.0
        %1385 = vmatpush1.msra.mxu0 0.0
        %1386 = vmatprep.mubr.f32.mxu0 0.0
        %1387 = vmatmul.mubr.f32.gmra.mrb[0].mxu0 %v1311
        %v1388 = vpop.f32.mrb[0].mxu0
        %v1389 = vadd.f32 %v1292, %v1388
        %v1390 = vpop.f32.mrb[0].mxu0
        %1391 = vmatprep.mubr.f32.mxu0 0.0
        %1392 = vmatmul.mubr.f32.gmra.mrb[0].mxu0 %v1314
        %v1393 = vpop.f32.mrb[0].mxu0
        %v1394 = vadd.f32 %v1297, %v1393
        %v1395 = vpop.f32.mrb[0].mxu0
        %1396 = vmatprep.mubr.f32.mxu0 0.0
        %1397 = vmatmul.mubr.f32.gmra.mrb[0].mxu0 %v1317
        %v1398 = vpop.f32.mrb[0].mxu0
        %v1399 = vadd.f32 %v1302, %v1398
        %v1400 = vpop.f32.mrb[0].mxu0
        %1401 = vmatprep.mubr.f32.mxu0 0.0
        %1402 = vmatmul.mubr.f32.gmra.mrb[0].mxu0 %v1320
        %v1403 = vpop.f32.mrb[0].mxu0
        %v1404 = vadd.f32 %v1307, %v1403
        %v1405 = vpop.f32.mrb[0].mxu0
        %1406 = vdwg.mxu0
        %v1407 = vld [vmem:[%s9] sm:$0xff]
        %v1408 = vld [vmem:[%s9 + $0x8] sm:$0xff]
        %v1409 = vld [vmem:[%s9 + $0x10] sm:$0xff]
        %v1410 = vld [vmem:[%s9 + $0x18] sm:$0xff]
        %1412 = vset.pattern.permute.xlu0 0
        %1413 = vperm.xlu0 %1412, %v1407
        %v1414 = vpop.permute.xlu0 %1413
        %1417 = vset.pattern.permute.xlu0 0
        %1418 = vperm.xlu0 %1417, %v1408
        %v1419 = vpop.permute.xlu0 %1418
        %1422 = vset.pattern.permute.xlu0 0
        %1423 = vperm.xlu0 %1422, %v1409
        %v1424 = vpop.permute.xlu0 %1423
        %1427 = vset.pattern.permute.xlu0 0
        %1428 = vperm.xlu0 %1427, %v1410
        %v1429 = vpop.permute.xlu0 %1428
        %v1431 = vmul.f32 %v1414, %v1389
        %v1432 = vmul.f32 %v1419, %v1394
        %v1433 = vmul.f32 %v1424, %v1399
        %v1434 = vmul.f32 %v1429, %v1404
        %v1435 = vld [vmem:[%s372] sm:$0xff]
        %v1436 = vld [vmem:[%s372 + $0x8] sm:$0xff]
        %v1437 = vld [vmem:[%s372 + $0x10] sm:$0xff]
        %v1438 = vld [vmem:[%s372 + $0x18] sm:$0xff]
        %v1439 = vadd.f32 %v1431, %v1435
        %v1440 = vadd.f32 %v1432, %v1436
        %v1441 = vadd.f32 %v1433, %v1437
        %v1442 = vadd.f32 %v1434, %v1438
        %1443 = vst [vmem:[%s367] sm:$0xff] %v1439
        %1444 = vst [vmem:[%s367 + $0x8] sm:$0xff] %v1440
        %1445 = vst [vmem:[%s367 + $0x10] sm:$0xff] %v1441
        %1446 = vst [vmem:[%s367 + $0x18] sm:$0xff] %v1442
        %s1447 = sand.u32 %s252, 1
        %s1448 = scalar_lea.sflag [#allocation3], %s1447
        %s1449 = sand.u32 %s252, 1
        %s1450 = smul.addr %s1449, 32
        %s1451 = scalar_lea.vmem [#allocation2], %s1450
        // Predicated region
        $region61: #{convnext_encoder.15} parent=59 // pred_check
          %p1452 = pneg %p262
        $region62: #{convnext_encoder.15} parent=59 // pred_check_branch
          %1454 = sbr.rel (%p1452) target = $region64
        $region63: #{convnext_encoder.15} parent=59 // pred_region
          %s1456 = ssub.s32 512, 512
          %1457 = vsyncadd %s1448, %s1456
          %s1458 = smul.addr %s24, 4
          %s1459 = smul.addr %s1458, 128
          %s1460 = scalar_lea.hbm %s10, %s1459
          %s1461 = sshll.u32 %s1451, 4
          %s1462 = int_to_ptr.vmem [resolvable:$true] %s1461
          %1467 = dma.vmem_to_hbm [thread:$0]  %s1462, 512, %s1460, %s1448, 128, 128, 8
        $region64: #{convnext_encoder.15} parent=59 // pred_fallthru
          _
      $region60: #{convnext_encoder.15} parent=5 // pred_fallthru
        _
      %p1468 = scmp.le.s32.totalorder 2, %s19
      // Predicated region
      $region65: #{convnext_encoder.15} parent=5 // pred_check
        %p1469 = pneg %p1468
      $region66: #{convnext_encoder.15} parent=5 // pred_check_branch
        %1471 = sbr.rel (%p1469) target = $region68
      $region67: #{convnext_encoder.15} parent=5 // pred_region
        %s1472 = ssub.s32 %s19, 2
        // Predicated region
        $region69: #{convnext_encoder.15} parent=67 // pred_check
          %p1473 = pneg %p268
        $region70: #{convnext_encoder.15} parent=67 // pred_check_branch
          %1475 = sbr.rel (%p1473) target = $region72
        $region71: #{convnext_encoder.15} parent=67 // pred_region
          %s1476 = sand.u32 %s253, 1
          %s1477 = scalar_lea.sflag [#allocation3], %s1476
          %s1478 = sand.u32 %s253, 1
          %s1479 = smul.addr %s1478, 32
          %s1480 = scalar_lea.vmem [#allocation2], %s1479
          %1481 = dma.done %s1477, 512
        $region72: #{convnext_encoder.15} parent=67 // pred_fallthru
          _
      $region68: #{convnext_encoder.15} parent=5 // pred_fallthru
        _
    $region6: #{convnext_encoder.15} parent=1 // loop_footer
      %s23 = sadd.s32 1, %s19
    $region7: #{convnext_encoder.15} parent=1 // loop_footer_branch
      %18 = sbr.rel target = $region3
    $region8: #{convnext_encoder.15} parent=1 // loop_exit
      _
    %1482 = vsyncpa [#allocation3], 1
    %s1483 = scalar_lea.sflag [#allocation3], 1
    %1484 = vsyncpa %s1483, 1

</llo_original>
